<compile_context>
chip_gen: v5e
topology: v5e:2x2
jax: 0.10.0
libtpu: 0.0.40
codegen_flags: <defaults>
</compile_context>

<pallas_src>
import numpy as np
import jax
import jax.numpy as jnp
from jax.experimental import pallas as pl
from jax.experimental.pallas import tpu as pltpu

# ---- small config consistent with the tutorial Transformer ----
D_MODEL = 32
D_K = 8
D_V = 8
N_HEADS = 4
D_FF = 64
N_LAYERS = 2
SRC_LEN = 8
TGT_LEN = 8
SRC_DICT_SIZE = 16
TGT_DICT_SIZE = 16
PAD_ID = 0          # src_dict['P'] / tgt_dict['P']
EPS = 1e-5          # nn.LayerNorm default

HDK = N_HEADS * D_K          # 32 (== d_model)
HDV = N_HEADS * D_V          # 32

VMEM_SPEC = pl.BlockSpec(memory_space=pltpu.MemorySpace.VMEM)
_SCALE = float(1.0 / np.sqrt(D_K))

# Fixed ordering of the stacked weight refs passed to the fused kernel.
PARAM_ORDER = [
    # encoder layers (all stacked over N_LAYERS)
    'e_wqkv', 'e_bqkv', 'e_wo', 'e_bo', 'e_ag', 'e_ab',
    'e_w1', 'e_b1', 'e_w2', 'e_b2', 'e_fg', 'e_fb',
    # decoder self-attention
    'ds_wqkv', 'ds_bqkv', 'ds_wo', 'ds_bo', 'ds_g', 'ds_b',
    # decoder cross-attention
    'dc_wq', 'dc_bq', 'dc_wkv', 'dc_bkv', 'dc_wo', 'dc_bo', 'dc_g', 'dc_b',
    # decoder FFN
    'df_w1', 'df_b1', 'df_w2', 'df_b2', 'df_g', 'df_b',
    # final projection (bias=False)
    'proj_w',
]


# ------------------------- in-kernel helpers -------------------------

def _layernorm(x, gamma, beta):
    mean = jnp.mean(x, axis=-1, keepdims=True)
    var = jnp.mean((x - mean) ** 2, axis=-1, keepdims=True)
    return (x - mean) * jax.lax.rsqrt(var + EPS) * gamma + beta


def _mha_core(Qp, Kp, Vp, mask, wo, bo, gamma, beta, residual):
    """Multi-head attention with Wo folded into the head loop (no ctx concat).

    Qp: (Lq, H*Dk)  Kp/Vp: (Lk, H*Dk/H*Dv)  mask: (Lq, Lk) float (1.0 == masked)
    Returns (layernorm(out + residual), attn_slab (Lq, H*Lk)).
    """
    acc = residual + bo                      # start accumulation with bias + residual
    attn_heads = []
    for h in range(N_HEADS):                 # static unroll over heads
        qh = Qp[:, h * D_K:(h + 1) * D_K]
        kh = Kp[:, h * D_K:(h + 1) * D_K]
        vh = Vp[:, h * D_V:(h + 1) * D_V]
        # scores = qh @ kh.T without an explicit transpose (contraction dims)
        scores = jax.lax.dot_general(qh, kh, (((1,), (1,)), ((), ())),
                                     preferred_element_type=jnp.float32) * _SCALE
        scores = jnp.where(mask > 0.5, -1e9, scores)       # masked_fill_(mask, -1e9)
        scores = scores - jnp.max(scores, axis=-1, keepdims=True)
        e = jnp.exp(scores)
        attn = e * pl.reciprocal(jnp.sum(e, axis=-1, keepdims=True), approx=True)
        attn_heads.append(attn)
        ctx_h = jnp.dot(attn, vh, preferred_element_type=jnp.float32)
        acc = acc + jnp.dot(ctx_h, wo[h * D_V:(h + 1) * D_V, :],
                            preferred_element_type=jnp.float32)
    out = _layernorm(acc, gamma, beta)
    attn_slab = jnp.concatenate(attn_heads, axis=-1)        # (Lq, H*Lk) lane-dense
    return out, attn_slab


def _ffn(x, w1, b1, w2, b2, gamma, beta):
    h = jnp.maximum(jnp.dot(x, w1, preferred_element_type=jnp.float32) + b1, 0.0)
    y = jnp.dot(h, w2, preferred_element_type=jnp.float32) + b2
    return _layernorm(y + x, gamma, beta)


# ------------------------- the fused kernel -------------------------

def transformer_kernel(enc_x_ref, dec_x_ref, enc_pad_ref, dec_pad_ref, *refs):
    w = dict(zip(PARAM_ORDER, refs[:len(PARAM_ORDER)]))
    logits_ref, enc_attn_ref, dec_attn_ref, dec_enc_attn_ref = refs[len(PARAM_ORDER):]

    Ls, Lt = SRC_LEN, TGT_LEN

    # ---- masks built in-kernel (float, 1.0 == masked) ----
    enc_pad = enc_pad_ref[...]                              # (1, Ls) key-is-PAD flags
    dec_pad = dec_pad_ref[...]                              # (1, Lt)
    enc_self_mask = jnp.broadcast_to(enc_pad, (Ls, Ls))
    row = jax.lax.broadcasted_iota(jnp.int32, (Lt, Lt), 0)
    col = jax.lax.broadcasted_iota(jnp.int32, (Lt, Lt), 1)
    causal = (col > row).astype(jnp.float32)
    dec_self_mask = jnp.maximum(jnp.broadcast_to(dec_pad, (Lt, Lt)), causal)
    dec_cross_mask = jnp.broadcast_to(enc_pad, (Lt, Ls))

    # ---- Encoder ----
    enc_x = enc_x_ref[...]                                  # (Ls, D_MODEL)
    for l in range(N_LAYERS):
        qkv = jnp.dot(enc_x, w['e_wqkv'][l],
                      preferred_element_type=jnp.float32) + w['e_bqkv'][l]
        Qp, Kp, Vp = qkv[:, :HDK], qkv[:, HDK:2 * HDK], qkv[:, 2 * HDK:]
        enc_x, attn = _mha_core(Qp, Kp, Vp, enc_self_mask,
                                w['e_wo'][l], w['e_bo'][l], w['e_ag'][l], w['e_ab'][l],
                                residual=enc_x)
        enc_attn_ref[l] = attn
        enc_x = _ffn(enc_x, w['e_w1'][l], w['e_b1'][l], w['e_w2'][l], w['e_b2'][l],
                     w['e_fg'][l], w['e_fb'][l])

    # ---- Decoder ----
    dec_x = dec_x_ref[...]                                  # (Lt, D_MODEL)
    for l in range(N_LAYERS):
        # masked self-attention (fused QKV matmul)
        qkv = jnp.dot(dec_x, w['ds_wqkv'][l],
                      preferred_element_type=jnp.float32) + w['ds_bqkv'][l]
        Qp, Kp, Vp = qkv[:, :HDK], qkv[:, HDK:2 * HDK], qkv[:, 2 * HDK:]
        dec_x, a1 = _mha_core(Qp, Kp, Vp, dec_self_mask,
                              w['ds_wo'][l], w['ds_bo'][l], w['ds_g'][l], w['ds_b'][l],
                              residual=dec_x)
        dec_attn_ref[l] = a1

        # cross-attention over the final encoder output (fused KV matmul)
        Qp = jnp.dot(dec_x, w['dc_wq'][l],
                     preferred_element_type=jnp.float32) + w['dc_bq'][l]
        kv = jnp.dot(enc_x, w['dc_wkv'][l],
                     preferred_element_type=jnp.float32) + w['dc_bkv'][l]
        Kp, Vp = kv[:, :HDK], kv[:, HDK:]
        dec_x, a2 = _mha_core(Qp, Kp, Vp, dec_cross_mask,
                              w['dc_wo'][l], w['dc_bo'][l], w['dc_g'][l], w['dc_b'][l],
                              residual=dec_x)
        dec_enc_attn_ref[l] = a2

        # position-wise FFN
        dec_x = _ffn(dec_x, w['df_w1'][l], w['df_b1'][l], w['df_w2'][l], w['df_b2'][l],
                     w['df_g'][l], w['df_b'][l])

    # ---- final projection (bias=False) ----
    logits_ref[...] = jnp.dot(dec_x, w['proj_w'][...],
                              preferred_element_type=jnp.float32)


# ------------------------- parameters (deterministic) -------------------------

def sinusoid_table(n_pos, d_model):
    pos = np.arange(n_pos)[:, None].astype(np.float64)
    i = np.arange(d_model)[None, :].astype(np.float64)
    angle = pos / np.power(10000.0, 2.0 * (i // 2) / d_model)
    table = np.zeros((n_pos, d_model), dtype=np.float32)
    table[:, 0::2] = np.sin(angle[:, 0::2])
    table[:, 1::2] = np.cos(angle[:, 1::2])
    return jnp.asarray(table)


def init_params(key):
    ks = iter(jax.random.split(key, 40))

    def dense(shape, scale=0.1):
        return jax.random.normal(next(ks), shape, jnp.float32) * scale

    ones = lambda: jnp.ones((N_LAYERS, 1, D_MODEL), jnp.float32)
    zeros = lambda: jnp.zeros((N_LAYERS, 1, D_MODEL), jnp.float32)

    # TODO(synk): bf16 weight storage (f32 accumulate) would halve DMA bytes on
    # v6e/v7x; kept f32 here for v5e portability since everything is VMEM-resident.
    return dict(
        src_emb=dense((SRC_DICT_SIZE, D_MODEL), 1.0),
        tgt_emb=dense((TGT_DICT_SIZE, D_MODEL), 1.0),
        pos_enc=sinusoid_table(max(SRC_DICT_SIZE, TGT_DICT_SIZE), D_MODEL),
        # encoder layers (stacked over N_LAYERS); QKV weights fused along lanes
        e_wqkv=dense((N_LAYERS, D_MODEL, 3 * HDK)), e_bqkv=dense((N_LAYERS, 1, 3 * HDK)),
        e_wo=dense((N_LAYERS, HDV, D_MODEL)), e_bo=dense((N_LAYERS, 1, D_MODEL)),
        e_ag=ones(), e_ab=zeros(),
        e_w1=dense((N_LAYERS, D_MODEL, D_FF)), e_b1=dense((N_LAYERS, 1, D_FF)),
        e_w2=dense((N_LAYERS, D_FF, D_MODEL)), e_b2=dense((N_LAYERS, 1, D_MODEL)),
        e_fg=ones(), e_fb=zeros(),
        # decoder self-attention
        ds_wqkv=dense((N_LAYERS, D_MODEL, 3 * HDK)), ds_bqkv=dense((N_LAYERS, 1, 3 * HDK)),
        ds_wo=dense((N_LAYERS, HDV, D_MODEL)), ds_bo=dense((N_LAYERS, 1, D_MODEL)),
        ds_g=ones(), ds_b=zeros(),
        # decoder cross-attention (Q separate, K/V fused)
        dc_wq=dense((N_LAYERS, D_MODEL, HDK)), dc_bq=dense((N_LAYERS, 1, HDK)),
        dc_wkv=dense((N_LAYERS, D_MODEL, 2 * HDK)), dc_bkv=dense((N_LAYERS, 1, 2 * HDK)),
        dc_wo=dense((N_LAYERS, HDV, D_MODEL)), dc_bo=dense((N_LAYERS, 1, D_MODEL)),
        dc_g=ones(), dc_b=zeros(),
        # decoder FFN
        df_w1=dense((N_LAYERS, D_MODEL, D_FF)), df_b1=dense((N_LAYERS, 1, D_FF)),
        df_w2=dense((N_LAYERS, D_FF, D_MODEL)), df_b2=dense((N_LAYERS, 1, D_MODEL)),
        df_g=ones(), df_b=zeros(),
        # output projection (bias=False)
        proj_w=dense((D_MODEL, TGT_DICT_SIZE)),
    )


# ------------------------- forward (jitted glue + single fused kernel) -------------------------

@jax.jit
def transformer_forward(params, dec_inputs, enc_inputs):
    enc_ids = enc_inputs[0]
    dec_ids = dec_inputs[0]
    pos_enc = params['pos_enc']

    # Embedding + positional encoding (the reference indexes pos-enc by token id).
    enc_x = params['src_emb'][enc_ids] + pos_enc[enc_ids]
    dec_x = params['tgt_emb'][dec_ids] + pos_enc[dec_ids]

    # Compact key-is-PAD flags; full (Lq, Lk) masks are built inside the kernel.
    enc_pad = (enc_ids == PAD_ID).astype(jnp.float32)[None, :]   # (1, SRC_LEN)
    dec_pad = (dec_ids == PAD_ID).astype(jnp.float32)[None, :]   # (1, TGT_LEN)

    flat_w = [params[k] for k in PARAM_ORDER]
    n_in = 4 + len(PARAM_ORDER)

    logits, enc_attn, dec_attn, dec_enc_attn = pl.pallas_call(
        transformer_kernel,
        in_specs=[VMEM_SPEC] * n_in,
        out_specs=(VMEM_SPEC, VMEM_SPEC, VMEM_SPEC, VMEM_SPEC),
        out_shape=(
            jax.ShapeDtypeStruct((TGT_LEN, TGT_DICT_SIZE), jnp.float32),
            jax.ShapeDtypeStruct((N_LAYERS, SRC_LEN, N_HEADS * SRC_LEN), jnp.float32),
            jax.ShapeDtypeStruct((N_LAYERS, TGT_LEN, N_HEADS * TGT_LEN), jnp.float32),
            jax.ShapeDtypeStruct((N_LAYERS, TGT_LEN, N_HEADS * SRC_LEN), jnp.float32),
        ),
    )(enc_x, dec_x, enc_pad, dec_pad, *flat_w)

    # Lane-dense (L, heads*Lk) slabs -> (layers, 1, heads, Lq, Lk), mirroring the
    # reference's per-layer lists of (batch=1, heads, Lq, Lk) attention maps.
    def unslab(a, lq, lk):
        return a.reshape(N_LAYERS, lq, N_HEADS, lk).transpose(0, 2, 1, 3)[:, None]

    enc_attns = unslab(enc_attn, SRC_LEN, SRC_LEN)
    dec_attns = unslab(dec_attn, TGT_LEN, TGT_LEN)
    dec_enc_attns = unslab(dec_enc_attn, TGT_LEN, SRC_LEN)
    return logits, enc_attns, dec_attns, dec_enc_attns


if __name__ == "__main__":
    key = jax.random.PRNGKey(0)
    params = init_params(key)

    # Deterministic example token ids (0 == 'P' pad) with batch = 1.
    enc_inputs = jnp.array([[1, 5, 7, 3, 9, 2, 0, 0]], dtype=jnp.int32)   # (1, SRC_LEN)
    dec_inputs = jnp.array([[4, 6, 2, 8, 10, 1, 3, 0]], dtype=jnp.int32)  # (1, TGT_LEN)

    logits, enc_attns, dec_attns, dec_enc_attns = transformer_forward(
        params, dec_inputs, enc_inputs)
    jax.block_until_ready(logits)
    jax.block_until_ready(enc_attns)
    jax.block_until_ready(dec_attns)
    jax.block_until_ready(dec_enc_attns)

    assert logits.shape == (TGT_LEN, TGT_DICT_SIZE)
    assert enc_attns.shape == (N_LAYERS, 1, N_HEADS, SRC_LEN, SRC_LEN)
    assert dec_attns.shape == (N_LAYERS, 1, N_HEADS, TGT_LEN, TGT_LEN)
    assert dec_enc_attns.shape == (N_LAYERS, 1, N_HEADS, TGT_LEN, SRC_LEN)
    assert bool(jnp.all(jnp.isfinite(logits)))
    print("KERNEL_OK")
</pallas_src>

<mosaic_0001>
module attributes {stable_mosaic.version = 11 : i64} {
  func.func @transformer_kernel(%arg0: memref<8x32xf32, #tpu.memory_space<vmem>>, %arg1: memref<8x32xf32, #tpu.memory_space<vmem>>, %arg2: memref<1x8xf32, #tpu.memory_space<vmem>>, %arg3: memref<1x8xf32, #tpu.memory_space<vmem>>, %arg4: memref<2x32x96xf32, #tpu.memory_space<vmem>>, %arg5: memref<2x1x96xf32, #tpu.memory_space<vmem>>, %arg6: memref<2x32x32xf32, #tpu.memory_space<vmem>>, %arg7: memref<2x1x32xf32, #tpu.memory_space<vmem>>, %arg8: memref<2x1x32xf32, #tpu.memory_space<vmem>>, %arg9: memref<2x1x32xf32, #tpu.memory_space<vmem>>, %arg10: memref<2x32x64xf32, #tpu.memory_space<vmem>>, %arg11: memref<2x1x64xf32, #tpu.memory_space<vmem>>, %arg12: memref<2x64x32xf32, #tpu.memory_space<vmem>>, %arg13: memref<2x1x32xf32, #tpu.memory_space<vmem>>, %arg14: memref<2x1x32xf32, #tpu.memory_space<vmem>>, %arg15: memref<2x1x32xf32, #tpu.memory_space<vmem>>, %arg16: memref<2x32x96xf32, #tpu.memory_space<vmem>>, %arg17: memref<2x1x96xf32, #tpu.memory_space<vmem>>, %arg18: memref<2x32x32xf32, #tpu.memory_space<vmem>>, %arg19: memref<2x1x32xf32, #tpu.memory_space<vmem>>, %arg20: memref<2x1x32xf32, #tpu.memory_space<vmem>>, %arg21: memref<2x1x32xf32, #tpu.memory_space<vmem>>, %arg22: memref<2x32x32xf32, #tpu.memory_space<vmem>>, %arg23: memref<2x1x32xf32, #tpu.memory_space<vmem>>, %arg24: memref<2x32x64xf32, #tpu.memory_space<vmem>>, %arg25: memref<2x1x64xf32, #tpu.memory_space<vmem>>, %arg26: memref<2x32x32xf32, #tpu.memory_space<vmem>>, %arg27: memref<2x1x32xf32, #tpu.memory_space<vmem>>, %arg28: memref<2x1x32xf32, #tpu.memory_space<vmem>>, %arg29: memref<2x1x32xf32, #tpu.memory_space<vmem>>, %arg30: memref<2x32x64xf32, #tpu.memory_space<vmem>>, %arg31: memref<2x1x64xf32, #tpu.memory_space<vmem>>, %arg32: memref<2x64x32xf32, #tpu.memory_space<vmem>>, %arg33: memref<2x1x32xf32, #tpu.memory_space<vmem>>, %arg34: memref<2x1x32xf32, #tpu.memory_space<vmem>>, %arg35: memref<2x1x32xf32, #tpu.memory_space<vmem>>, %arg36: memref<32x16xf32, #tpu.memory_space<vmem>>, %arg37: memref<8x16xf32, #tpu.memory_space<vmem>>, %arg38: memref<2x8x32xf32, #tpu.memory_space<vmem>>, %arg39: memref<2x8x32xf32, #tpu.memory_space<vmem>>, %arg40: memref<2x8x32xf32, #tpu.memory_space<vmem>>) attributes {dimension_semantics = [], scalar_prefetch = 0 : i64, scratch_operands = 0 : i64, tpu.core_type = #tpu.core_type<tc>} {
    %c0 = arith.constant 0 : index
    %c0_0 = arith.constant 0 : index
    %0 = vector.load %arg2[%c0, %c0_0] : memref<1x8xf32, #tpu.memory_space<vmem>>, vector<1x8xf32>
    %c0_1 = arith.constant 0 : index
    %c0_2 = arith.constant 0 : index
    %1 = vector.load %arg3[%c0_1, %c0_2] : memref<1x8xf32, #tpu.memory_space<vmem>>, vector<1x8xf32>
    %2 = vector.shape_cast %0 : vector<1x8xf32> to vector<1x8xf32>
    %3 = vector.broadcast %2 : vector<1x8xf32> to vector<8x8xf32>
    %4 = tpu.iota {dimensions = array<i32: 0>} : vector<8x8xi32>
    %5 = tpu.iota {dimensions = array<i32: 1>} : vector<8x8xi32>
    %6 = arith.cmpi sgt, %5, %4 : vector<8x8xi32>
    %7 = arith.extui %6 : vector<8x8xi1> to vector<8x8xi32>
    %8 = arith.sitofp %7 : vector<8x8xi32> to vector<8x8xf32>
    %9 = vector.shape_cast %1 : vector<1x8xf32> to vector<1x8xf32>
    %10 = vector.broadcast %9 : vector<1x8xf32> to vector<8x8xf32>
    %11 = arith.maximumf %10, %8 : vector<8x8xf32>
    %12 = vector.shape_cast %0 : vector<1x8xf32> to vector<1x8xf32>
    %13 = vector.broadcast %12 : vector<1x8xf32> to vector<8x8xf32>
    %c0_3 = arith.constant 0 : index
    %c0_4 = arith.constant 0 : index
    %14 = vector.load %arg0[%c0_3, %c0_4] : memref<8x32xf32, #tpu.memory_space<vmem>>, vector<8x32xf32>
    %c0_5 = arith.constant 0 : index
    %c0_6 = arith.constant 0 : index
    %c0_7 = arith.constant 0 : index
    %15 = vector.load %arg4[%c0_5, %c0_6, %c0_7] : memref<2x32x96xf32, #tpu.memory_space<vmem>>, vector<1x32x96xf32>
    %16 = vector.shape_cast %15 : vector<1x32x96xf32> to vector<32x96xf32>
    %cst = arith.constant dense<0.000000e+00> : vector<8x96xf32>
    %17 = tpu.matmul %14, %16, %cst {dimension_numbers = #tpu.dot_dimension_numbers<[1], [0], [0], [1], [0, 0, 1, 1], [], []>} : vector<8x32xf32>, vector<32x96xf32>, vector<8x96xf32> -> vector<8x96xf32>
    %c0_8 = arith.constant 0 : index
    %c0_9 = arith.constant 0 : index
    %c0_10 = arith.constant 0 : index
    %18 = vector.load %arg5[%c0_8, %c0_9, %c0_10] : memref<2x1x96xf32, #tpu.memory_space<vmem>>, vector<1x1x96xf32>
    %19 = vector.shape_cast %18 : vector<1x1x96xf32> to vector<1x96xf32>
    %20 = vector.broadcast %19 : vector<1x96xf32> to vector<8x96xf32>
    %21 = arith.addf %17, %20 : vector<8x96xf32>
    %22 = vector.extract_strided_slice %21 {offsets = [0, 0], sizes = [8, 32], strides = [1, 1]} : vector<8x96xf32> to vector<8x32xf32>
    %23 = vector.extract_strided_slice %21 {offsets = [0, 32], sizes = [8, 32], strides = [1, 1]} : vector<8x96xf32> to vector<8x32xf32>
    %24 = vector.extract_strided_slice %21 {offsets = [0, 64], sizes = [8, 32], strides = [1, 1]} : vector<8x96xf32> to vector<8x32xf32>
    %c0_11 = arith.constant 0 : index
    %c0_12 = arith.constant 0 : index
    %c0_13 = arith.constant 0 : index
    %25 = vector.load %arg6[%c0_11, %c0_12, %c0_13] : memref<2x32x32xf32, #tpu.memory_space<vmem>>, vector<1x32x32xf32>
    %26 = vector.shape_cast %25 : vector<1x32x32xf32> to vector<32x32xf32>
    %c0_14 = arith.constant 0 : index
    %c0_15 = arith.constant 0 : index
    %c0_16 = arith.constant 0 : index
    %27 = vector.load %arg7[%c0_14, %c0_15, %c0_16] : memref<2x1x32xf32, #tpu.memory_space<vmem>>, vector<1x1x32xf32>
    %28 = vector.shape_cast %27 : vector<1x1x32xf32> to vector<1x32xf32>
    %c0_17 = arith.constant 0 : index
    %c0_18 = arith.constant 0 : index
    %c0_19 = arith.constant 0 : index
    %29 = vector.load %arg8[%c0_17, %c0_18, %c0_19] : memref<2x1x32xf32, #tpu.memory_space<vmem>>, vector<1x1x32xf32>
    %30 = vector.shape_cast %29 : vector<1x1x32xf32> to vector<1x32xf32>
    %c0_20 = arith.constant 0 : index
    %c0_21 = arith.constant 0 : index
    %c0_22 = arith.constant 0 : index
    %31 = vector.load %arg9[%c0_20, %c0_21, %c0_22] : memref<2x1x32xf32, #tpu.memory_space<vmem>>, vector<1x1x32xf32>
    %32 = vector.shape_cast %31 : vector<1x1x32xf32> to vector<1x32xf32>
    %33 = vector.broadcast %28 : vector<1x32xf32> to vector<8x32xf32>
    %34 = arith.addf %14, %33 : vector<8x32xf32>
    %35 = vector.extract_strided_slice %22 {offsets = [0, 0], sizes = [8, 8], strides = [1, 1]} : vector<8x32xf32> to vector<8x8xf32>
    %36 = vector.extract_strided_slice %23 {offsets = [0, 0], sizes = [8, 8], strides = [1, 1]} : vector<8x32xf32> to vector<8x8xf32>
    %37 = vector.extract_strided_slice %24 {offsets = [0, 0], sizes = [8, 8], strides = [1, 1]} : vector<8x32xf32> to vector<8x8xf32>
    %cst_23 = arith.constant dense<0.000000e+00> : vector<8x8xf32>
    %38 = tpu.matmul %35, %36, %cst_23 {dimension_numbers = #tpu.dot_dimension_numbers<[1], [1], [0], [0], [0, 0, 1, 0], [], []>} : vector<8x8xf32>, vector<8x8xf32>, vector<8x8xf32> -> vector<8x8xf32>
    %cst_24 = arith.constant 0.353553385 : f32
    %39 = vector.broadcast %cst_24 : f32 to vector<8x8xf32>
    %40 = arith.mulf %38, %39 : vector<8x8xf32>
    %cst_25 = arith.constant 5.000000e-01 : f32
    %41 = vector.broadcast %cst_25 : f32 to vector<8x8xf32>
    %42 = arith.cmpf ogt, %3, %41 : vector<8x8xf32>
    %cst_26 = arith.constant -1.000000e+09 : f32
    %43 = vector.broadcast %cst_26 : f32 to vector<8x8xf32>
    %44 = arith.select %42, %43, %40 : vector<8x8xi1>, vector<8x8xf32>
    %cst_27 = arith.constant dense<0xFF800000> : vector<8xf32>
    %45 = vector.multi_reduction <maximumf>, %44, %cst_27 [1] : vector<8x8xf32> to vector<8xf32>
    %46 = vector.shape_cast %45 : vector<8xf32> to vector<8x1xf32>
    %47 = vector.broadcast %46 : vector<8x1xf32> to vector<8x8xf32>
    %48 = arith.subf %44, %47 : vector<8x8xf32>
    %49 = math.exp %48 : vector<8x8xf32>
    %cst_28 = arith.constant dense<0.000000e+00> : vector<8xf32>
    %50 = vector.multi_reduction <add>, %49, %cst_28 [1] : vector<8x8xf32> to vector<8xf32>
    %51 = vector.shape_cast %50 : vector<8xf32> to vector<8x1xf32>
    %52 = tpu.reciprocal %51 {approx = true} : vector<8x1xf32> -> vector<8x1xf32>
    %53 = vector.broadcast %52 : vector<8x1xf32> to vector<8x8xf32>
    %54 = arith.mulf %49, %53 : vector<8x8xf32>
    %cst_29 = arith.constant dense<0.000000e+00> : vector<8x8xf32>
    %55 = tpu.matmul %54, %37, %cst_29 {dimension_numbers = #tpu.dot_dimension_numbers<[1], [0], [0], [1], [0, 0, 1, 1], [], []>} : vector<8x8xf32>, vector<8x8xf32>, vector<8x8xf32> -> vector<8x8xf32>
    %56 = vector.extract_strided_slice %26 {offsets = [0, 0], sizes = [8, 32], strides = [1, 1]} : vector<32x32xf32> to vector<8x32xf32>
    %cst_30 = arith.constant dense<0.000000e+00> : vector<8x32xf32>
    %57 = tpu.matmul %55, %56, %cst_30 {dimension_numbers = #tpu.dot_dimension_numbers<[1], [0], [0], [1], [0, 0, 1, 1], [], []>} : vector<8x8xf32>, vector<8x32xf32>, vector<8x32xf32> -> vector<8x32xf32>
    %58 = arith.addf %34, %57 : vector<8x32xf32>
    %59 = vector.extract_strided_slice %22 {offsets = [0, 8], sizes = [8, 8], strides = [1, 1]} : vector<8x32xf32> to vector<8x8xf32>
    %60 = vector.extract_strided_slice %23 {offsets = [0, 8], sizes = [8, 8], strides = [1, 1]} : vector<8x32xf32> to vector<8x8xf32>
    %61 = vector.extract_strided_slice %24 {offsets = [0, 8], sizes = [8, 8], strides = [1, 1]} : vector<8x32xf32> to vector<8x8xf32>
    %cst_31 = arith.constant dense<0.000000e+00> : vector<8x8xf32>
    %62 = tpu.matmul %59, %60, %cst_31 {dimension_numbers = #tpu.dot_dimension_numbers<[1], [1], [0], [0], [0, 0, 1, 0], [], []>} : vector<8x8xf32>, vector<8x8xf32>, vector<8x8xf32> -> vector<8x8xf32>
    %cst_32 = arith.constant 0.353553385 : f32
    %63 = vector.broadcast %cst_32 : f32 to vector<8x8xf32>
    %64 = arith.mulf %62, %63 : vector<8x8xf32>
    %cst_33 = arith.constant 5.000000e-01 : f32
    %65 = vector.broadcast %cst_33 : f32 to vector<8x8xf32>
    %66 = arith.cmpf ogt, %3, %65 : vector<8x8xf32>
    %cst_34 = arith.constant -1.000000e+09 : f32
    %67 = vector.broadcast %cst_34 : f32 to vector<8x8xf32>
    %68 = arith.select %66, %67, %64 : vector<8x8xi1>, vector<8x8xf32>
    %cst_35 = arith.constant dense<0xFF800000> : vector<8xf32>
    %69 = vector.multi_reduction <maximumf>, %68, %cst_35 [1] : vector<8x8xf32> to vector<8xf32>
    %70 = vector.shape_cast %69 : vector<8xf32> to vector<8x1xf32>
    %71 = vector.broadcast %70 : vector<8x1xf32> to vector<8x8xf32>
    %72 = arith.subf %68, %71 : vector<8x8xf32>
    %73 = math.exp %72 : vector<8x8xf32>
    %cst_36 = arith.constant dense<0.000000e+00> : vector<8xf32>
    %74 = vector.multi_reduction <add>, %73, %cst_36 [1] : vector<8x8xf32> to vector<8xf32>
    %75 = vector.shape_cast %74 : vector<8xf32> to vector<8x1xf32>
    %76 = tpu.reciprocal %75 {approx = true} : vector<8x1xf32> -> vector<8x1xf32>
    %77 = vector.broadcast %76 : vector<8x1xf32> to vector<8x8xf32>
    %78 = arith.mulf %73, %77 : vector<8x8xf32>
    %cst_37 = arith.constant dense<0.000000e+00> : vector<8x8xf32>
    %79 = tpu.matmul %78, %61, %cst_37 {dimension_numbers = #tpu.dot_dimension_numbers<[1], [0], [0], [1], [0, 0, 1, 1], [], []>} : vector<8x8xf32>, vector<8x8xf32>, vector<8x8xf32> -> vector<8x8xf32>
    %80 = vector.extract_strided_slice %26 {offsets = [8, 0], sizes = [8, 32], strides = [1, 1]} : vector<32x32xf32> to vector<8x32xf32>
    %cst_38 = arith.constant dense<0.000000e+00> : vector<8x32xf32>
    %81 = tpu.matmul %79, %80, %cst_38 {dimension_numbers = #tpu.dot_dimension_numbers<[1], [0], [0], [1], [0, 0, 1, 1], [], []>} : vector<8x8xf32>, vector<8x32xf32>, vector<8x32xf32> -> vector<8x32xf32>
    %82 = arith.addf %58, %81 : vector<8x32xf32>
    %83 = vector.extract_strided_slice %22 {offsets = [0, 16], sizes = [8, 8], strides = [1, 1]} : vector<8x32xf32> to vector<8x8xf32>
    %84 = vector.extract_strided_slice %23 {offsets = [0, 16], sizes = [8, 8], strides = [1, 1]} : vector<8x32xf32> to vector<8x8xf32>
    %85 = vector.extract_strided_slice %24 {offsets = [0, 16], sizes = [8, 8], strides = [1, 1]} : vector<8x32xf32> to vector<8x8xf32>
    %cst_39 = arith.constant dense<0.000000e+00> : vector<8x8xf32>
    %86 = tpu.matmul %83, %84, %cst_39 {dimension_numbers = #tpu.dot_dimension_numbers<[1], [1], [0], [0], [0, 0, 1, 0], [], []>} : vector<8x8xf32>, vector<8x8xf32>, vector<8x8xf32> -> vector<8x8xf32>
    %cst_40 = arith.constant 0.353553385 : f32
    %87 = vector.broadcast %cst_40 : f32 to vector<8x8xf32>
    %88 = arith.mulf %86, %87 : vector<8x8xf32>
    %cst_41 = arith.constant 5.000000e-01 : f32
    %89 = vector.broadcast %cst_41 : f32 to vector<8x8xf32>
    %90 = arith.cmpf ogt, %3, %89 : vector<8x8xf32>
    %cst_42 = arith.constant -1.000000e+09 : f32
    %91 = vector.broadcast %cst_42 : f32 to vector<8x8xf32>
    %92 = arith.select %90, %91, %88 : vector<8x8xi1>, vector<8x8xf32>
    %cst_43 = arith.constant dense<0xFF800000> : vector<8xf32>
    %93 = vector.multi_reduction <maximumf>, %92, %cst_43 [1] : vector<8x8xf32> to vector<8xf32>
    %94 = vector.shape_cast %93 : vector<8xf32> to vector<8x1xf32>
    %95 = vector.broadcast %94 : vector<8x1xf32> to vector<8x8xf32>
    %96 = arith.subf %92, %95 : vector<8x8xf32>
    %97 = math.exp %96 : vector<8x8xf32>
    %cst_44 = arith.constant dense<0.000000e+00> : vector<8xf32>
    %98 = vector.multi_reduction <add>, %97, %cst_44 [1] : vector<8x8xf32> to vector<8xf32>
    %99 = vector.shape_cast %98 : vector<8xf32> to vector<8x1xf32>
    %100 = tpu.reciprocal %99 {approx = true} : vector<8x1xf32> -> vector<8x1xf32>
    %101 = vector.broadcast %100 : vector<8x1xf32> to vector<8x8xf32>
    %102 = arith.mulf %97, %101 : vector<8x8xf32>
    %cst_45 = arith.constant dense<0.000000e+00> : vector<8x8xf32>
    %103 = tpu.matmul %102, %85, %cst_45 {dimension_numbers = #tpu.dot_dimension_numbers<[1], [0], [0], [1], [0, 0, 1, 1], [], []>} : vector<8x8xf32>, vector<8x8xf32>, vector<8x8xf32> -> vector<8x8xf32>
    %104 = vector.extract_strided_slice %26 {offsets = [16, 0], sizes = [8, 32], strides = [1, 1]} : vector<32x32xf32> to vector<8x32xf32>
    %cst_46 = arith.constant dense<0.000000e+00> : vector<8x32xf32>
    %105 = tpu.matmul %103, %104, %cst_46 {dimension_numbers = #tpu.dot_dimension_numbers<[1], [0], [0], [1], [0, 0, 1, 1], [], []>} : vector<8x8xf32>, vector<8x32xf32>, vector<8x32xf32> -> vector<8x32xf32>
    %106 = arith.addf %82, %105 : vector<8x32xf32>
    %107 = vector.extract_strided_slice %22 {offsets = [0, 24], sizes = [8, 8], strides = [1, 1]} : vector<8x32xf32> to vector<8x8xf32>
    %108 = vector.extract_strided_slice %23 {offsets = [0, 24], sizes = [8, 8], strides = [1, 1]} : vector<8x32xf32> to vector<8x8xf32>
    %109 = vector.extract_strided_slice %24 {offsets = [0, 24], sizes = [8, 8], strides = [1, 1]} : vector<8x32xf32> to vector<8x8xf32>
    %cst_47 = arith.constant dense<0.000000e+00> : vector<8x8xf32>
    %110 = tpu.matmul %107, %108, %cst_47 {dimension_numbers = #tpu.dot_dimension_numbers<[1], [1], [0], [0], [0, 0, 1, 0], [], []>} : vector<8x8xf32>, vector<8x8xf32>, vector<8x8xf32> -> vector<8x8xf32>
    %cst_48 = arith.constant 0.353553385 : f32
    %111 = vector.broadcast %cst_48 : f32 to vector<8x8xf32>
    %112 = arith.mulf %110, %111 : vector<8x8xf32>
    %cst_49 = arith.constant 5.000000e-01 : f32
    %113 = vector.broadcast %cst_49 : f32 to vector<8x8xf32>
    %114 = arith.cmpf ogt, %3, %113 : vector<8x8xf32>
    %cst_50 = arith.constant -1.000000e+09 : f32
    %115 = vector.broadcast %cst_50 : f32 to vector<8x8xf32>
    %116 = arith.select %114, %115, %112 : vector<8x8xi1>, vector<8x8xf32>
    %cst_51 = arith.constant dense<0xFF800000> : vector<8xf32>
    %117 = vector.multi_reduction <maximumf>, %116, %cst_51 [1] : vector<8x8xf32> to vector<8xf32>
    %118 = vector.shape_cast %117 : vector<8xf32> to vector<8x1xf32>
    %119 = vector.broadcast %118 : vector<8x1xf32> to vector<8x8xf32>
    %120 = arith.subf %116, %119 : vector<8x8xf32>
    %121 = math.exp %120 : vector<8x8xf32>
    %cst_52 = arith.constant dense<0.000000e+00> : vector<8xf32>
    %122 = vector.multi_reduction <add>, %121, %cst_52 [1] : vector<8x8xf32> to vector<8xf32>
    %123 = vector.shape_cast %122 : vector<8xf32> to vector<8x1xf32>
    %124 = tpu.reciprocal %123 {approx = true} : vector<8x1xf32> -> vector<8x1xf32>
    %125 = vector.broadcast %124 : vector<8x1xf32> to vector<8x8xf32>
    %126 = arith.mulf %121, %125 : vector<8x8xf32>
    %cst_53 = arith.constant dense<0.000000e+00> : vector<8x8xf32>
    %127 = tpu.matmul %126, %109, %cst_53 {dimension_numbers = #tpu.dot_dimension_numbers<[1], [0], [0], [1], [0, 0, 1, 1], [], []>} : vector<8x8xf32>, vector<8x8xf32>, vector<8x8xf32> -> vector<8x8xf32>
    %128 = vector.extract_strided_slice %26 {offsets = [24, 0], sizes = [8, 32], strides = [1, 1]} : vector<32x32xf32> to vector<8x32xf32>
    %cst_54 = arith.constant dense<0.000000e+00> : vector<8x32xf32>
    %129 = tpu.matmul %127, %128, %cst_54 {dimension_numbers = #tpu.dot_dimension_numbers<[1], [0], [0], [1], [0, 0, 1, 1], [], []>} : vector<8x8xf32>, vector<8x32xf32>, vector<8x32xf32> -> vector<8x32xf32>
    %130 = arith.addf %106, %129 : vector<8x32xf32>
    %cst_55 = arith.constant dense<0.000000e+00> : vector<8xf32>
    %131 = vector.multi_reduction <add>, %130, %cst_55 [1] : vector<8x32xf32> to vector<8xf32>
    %132 = vector.shape_cast %131 : vector<8xf32> to vector<8x1xf32>
    %cst_56 = arith.constant 3.200000e+01 : f32
    %133 = vector.broadcast %cst_56 : f32 to vector<8x1xf32>
    %134 = arith.divf %132, %133 : vector<8x1xf32>
    %135 = vector.broadcast %134 : vector<8x1xf32> to vector<8x32xf32>
    %136 = arith.subf %130, %135 : vector<8x32xf32>
    %137 = arith.mulf %136, %136 : vector<8x32xf32>
    %cst_57 = arith.constant dense<0.000000e+00> : vector<8xf32>
    %138 = vector.multi_reduction <add>, %137, %cst_57 [1] : vector<8x32xf32> to vector<8xf32>
    %139 = vector.shape_cast %138 : vector<8xf32> to vector<8x1xf32>
    %cst_58 = arith.constant 3.200000e+01 : f32
    %140 = vector.broadcast %cst_58 : f32 to vector<8x1xf32>
    %141 = arith.divf %139, %140 : vector<8x1xf32>
    %142 = vector.broadcast %134 : vector<8x1xf32> to vector<8x32xf32>
    %143 = arith.subf %130, %142 : vector<8x32xf32>
    %cst_59 = arith.constant 9.99999974E-6 : f32
    %144 = vector.broadcast %cst_59 : f32 to vector<8x1xf32>
    %145 = arith.addf %141, %144 : vector<8x1xf32>
    %146 = math.rsqrt %145 : vector<8x1xf32>
    %147 = vector.broadcast %146 : vector<8x1xf32> to vector<8x32xf32>
    %148 = arith.mulf %143, %147 : vector<8x32xf32>
    %149 = vector.broadcast %30 : vector<1x32xf32> to vector<8x32xf32>
    %150 = arith.mulf %148, %149 : vector<8x32xf32>
    %151 = vector.broadcast %32 : vector<1x32xf32> to vector<8x32xf32>
    %152 = arith.addf %150, %151 : vector<8x32xf32>
    %153 = tpu.concatenate %54, %78, %102, %126 in 1 : vector<8x8xf32>, vector<8x8xf32>, vector<8x8xf32>, vector<8x8xf32> -> vector<8x32xf32>
    %c0_60 = arith.constant 0 : index
    %c0_61 = arith.constant 0 : index
    %c0_62 = arith.constant 0 : index
    %154 = vector.load %arg38[%c0_60, %c0_61, %c0_62] : memref<2x8x32xf32, #tpu.memory_space<vmem>>, vector<1x8x32xf32>
    %155 = vector.shape_cast %154 : vector<1x8x32xf32> to vector<8x32xf32>
    %156 = vector.shape_cast %153 : vector<8x32xf32> to vector<1x8x32xf32>
    tpu.vector_store %arg38[%c0_60, %c0_61, %c0_62], %156 {strides = array<i32>} : memref<2x8x32xf32, #tpu.memory_space<vmem>>, vector<1x8x32xf32>,
    %c0_63 = arith.constant 0 : index
    %c0_64 = arith.constant 0 : index
    %c0_65 = arith.constant 0 : index
    %157 = vector.load %arg10[%c0_63, %c0_64, %c0_65] : memref<2x32x64xf32, #tpu.memory_space<vmem>>, vector<1x32x64xf32>
    %158 = vector.shape_cast %157 : vector<1x32x64xf32> to vector<32x64xf32>
    %c0_66 = arith.constant 0 : index
    %c0_67 = arith.constant 0 : index
    %c0_68 = arith.constant 0 : index
    %159 = vector.load %arg11[%c0_66, %c0_67, %c0_68] : memref<2x1x64xf32, #tpu.memory_space<vmem>>, vector<1x1x64xf32>
    %160 = vector.shape_cast %159 : vector<1x1x64xf32> to vector<1x64xf32>
    %c0_69 = arith.constant 0 : index
    %c0_70 = arith.constant 0 : index
    %c0_71 = arith.constant 0 : index
    %161 = vector.load %arg12[%c0_69, %c0_70, %c0_71] : memref<2x64x32xf32, #tpu.memory_space<vmem>>, vector<1x64x32xf32>
    %162 = vector.shape_cast %161 : vector<1x64x32xf32> to vector<64x32xf32>
    %c0_72 = arith.constant 0 : index
    %c0_73 = arith.constant 0 : index
    %c0_74 = arith.constant 0 : index
    %163 = vector.load %arg13[%c0_72, %c0_73, %c0_74] : memref<2x1x32xf32, #tpu.memory_space<vmem>>, vector<1x1x32xf32>
    %164 = vector.shape_cast %163 : vector<1x1x32xf32> to vector<1x32xf32>
    %c0_75 = arith.constant 0 : index
    %c0_76 = arith.constant 0 : index
    %c0_77 = arith.constant 0 : index
    %165 = vector.load %arg14[%c0_75, %c0_76, %c0_77] : memref<2x1x32xf32, #tpu.memory_space<vmem>>, vector<1x1x32xf32>
    %166 = vector.shape_cast %165 : vector<1x1x32xf32> to vector<1x32xf32>
    %c0_78 = arith.constant 0 : index
    %c0_79 = arith.constant 0 : index
    %c0_80 = arith.constant 0 : index
    %167 = vector.load %arg15[%c0_78, %c0_79, %c0_80] : memref<2x1x32xf32, #tpu.memory_space<vmem>>, vector<1x1x32xf32>
    %168 = vector.shape_cast %167 : vector<1x1x32xf32> to vector<1x32xf32>
    %cst_81 = arith.constant dense<0.000000e+00> : vector<8x64xf32>
    %169 = tpu.matmul %152, %158, %cst_81 {dimension_numbers = #tpu.dot_dimension_numbers<[1], [0], [0], [1], [0, 0, 1, 1], [], []>} : vector<8x32xf32>, vector<32x64xf32>, vector<8x64xf32> -> vector<8x64xf32>
    %170 = vector.broadcast %160 : vector<1x64xf32> to vector<8x64xf32>
    %171 = arith.addf %169, %170 : vector<8x64xf32>
    %cst_82 = arith.constant 0.000000e+00 : f32
    %172 = vector.broadcast %cst_82 : f32 to vector<8x64xf32>
    %173 = arith.maximumf %171, %172 : vector<8x64xf32>
    %cst_83 = arith.constant dense<0.000000e+00> : vector<8x32xf32>
    %174 = tpu.matmul %173, %162, %cst_83 {dimension_numbers = #tpu.dot_dimension_numbers<[1], [0], [0], [1], [0, 0, 1, 1], [], []>} : vector<8x64xf32>, vector<64x32xf32>, vector<8x32xf32> -> vector<8x32xf32>
    %175 = vector.broadcast %164 : vector<1x32xf32> to vector<8x32xf32>
    %176 = arith.addf %174, %175 : vector<8x32xf32>
    %177 = arith.addf %176, %152 : vector<8x32xf32>
    %cst_84 = arith.constant dense<0.000000e+00> : vector<8xf32>
    %178 = vector.multi_reduction <add>, %177, %cst_84 [1] : vector<8x32xf32> to vector<8xf32>
    %179 = vector.shape_cast %178 : vector<8xf32> to vector<8x1xf32>
    %cst_85 = arith.constant 3.200000e+01 : f32
    %180 = vector.broadcast %cst_85 : f32 to vector<8x1xf32>
    %181 = arith.divf %179, %180 : vector<8x1xf32>
    %182 = vector.broadcast %181 : vector<8x1xf32> to vector<8x32xf32>
    %183 = arith.subf %177, %182 : vector<8x32xf32>
    %184 = arith.mulf %183, %183 : vector<8x32xf32>
    %cst_86 = arith.constant dense<0.000000e+00> : vector<8xf32>
    %185 = vector.multi_reduction <add>, %184, %cst_86 [1] : vector<8x32xf32> to vector<8xf32>
    %186 = vector.shape_cast %185 : vector<8xf32> to vector<8x1xf32>
    %cst_87 = arith.constant 3.200000e+01 : f32
    %187 = vector.broadcast %cst_87 : f32 to vector<8x1xf32>
    %188 = arith.divf %186, %187 : vector<8x1xf32>
    %189 = vector.broadcast %181 : vector<8x1xf32> to vector<8x32xf32>
    %190 = arith.subf %177, %189 : vector<8x32xf32>
    %cst_88 = arith.constant 9.99999974E-6 : f32
    %191 = vector.broadcast %cst_88 : f32 to vector<8x1xf32>
    %192 = arith.addf %188, %191 : vector<8x1xf32>
    %193 = math.rsqrt %192 : vector<8x1xf32>
    %194 = vector.broadcast %193 : vector<8x1xf32> to vector<8x32xf32>
    %195 = arith.mulf %190, %194 : vector<8x32xf32>
    %196 = vector.broadcast %166 : vector<1x32xf32> to vector<8x32xf32>
    %197 = arith.mulf %195, %196 : vector<8x32xf32>
    %198 = vector.broadcast %168 : vector<1x32xf32> to vector<8x32xf32>
    %199 = arith.addf %197, %198 : vector<8x32xf32>
    %c1 = arith.constant 1 : index
    %c0_89 = arith.constant 0 : index
    %c0_90 = arith.constant 0 : index
    %200 = vector.load %arg4[%c1, %c0_89, %c0_90] : memref<2x32x96xf32, #tpu.memory_space<vmem>>, vector<1x32x96xf32>
    %201 = vector.shape_cast %200 : vector<1x32x96xf32> to vector<32x96xf32>
    %cst_91 = arith.constant dense<0.000000e+00> : vector<8x96xf32>
    %202 = tpu.matmul %199, %201, %cst_91 {dimension_numbers = #tpu.dot_dimension_numbers<[1], [0], [0], [1], [0, 0, 1, 1], [], []>} : vector<8x32xf32>, vector<32x96xf32>, vector<8x96xf32> -> vector<8x96xf32>
    %c1_92 = arith.constant 1 : index
    %c0_93 = arith.constant 0 : index
    %c0_94 = arith.constant 0 : index
    %203 = vector.load %arg5[%c1_92, %c0_93, %c0_94] : memref<2x1x96xf32, #tpu.memory_space<vmem>>, vector<1x1x96xf32>
    %204 = vector.shape_cast %203 : vector<1x1x96xf32> to vector<1x96xf32>
    %205 = vector.broadcast %204 : vector<1x96xf32> to vector<8x96xf32>
    %206 = arith.addf %202, %205 : vector<8x96xf32>
    %207 = vector.extract_strided_slice %206 {offsets = [0, 0], sizes = [8, 32], strides = [1, 1]} : vector<8x96xf32> to vector<8x32xf32>
    %208 = vector.extract_strided_slice %206 {offsets = [0, 32], sizes = [8, 32], strides = [1, 1]} : vector<8x96xf32> to vector<8x32xf32>
    %209 = vector.extract_strided_slice %206 {offsets = [0, 64], sizes = [8, 32], strides = [1, 1]} : vector<8x96xf32> to vector<8x32xf32>
    %c1_95 = arith.constant 1 : index
    %c0_96 = arith.constant 0 : index
    %c0_97 = arith.constant 0 : index
    %210 = vector.load %arg6[%c1_95, %c0_96, %c0_97] : memref<2x32x32xf32, #tpu.memory_space<vmem>>, vector<1x32x32xf32>
    %211 = vector.shape_cast %210 : vector<1x32x32xf32> to vector<32x32xf32>
    %c1_98 = arith.constant 1 : index
    %c0_99 = arith.constant 0 : index
    %c0_100 = arith.constant 0 : index
    %212 = vector.load %arg7[%c1_98, %c0_99, %c0_100] : memref<2x1x32xf32, #tpu.memory_space<vmem>>, vector<1x1x32xf32>
    %213 = vector.shape_cast %212 : vector<1x1x32xf32> to vector<1x32xf32>
    %c1_101 = arith.constant 1 : index
    %c0_102 = arith.constant 0 : index
    %c0_103 = arith.constant 0 : index
    %214 = vector.load %arg8[%c1_101, %c0_102, %c0_103] : memref<2x1x32xf32, #tpu.memory_space<vmem>>, vector<1x1x32xf32>
    %215 = vector.shape_cast %214 : vector<1x1x32xf32> to vector<1x32xf32>
    %c1_104 = arith.constant 1 : index
    %c0_105 = arith.constant 0 : index
    %c0_106 = arith.constant 0 : index
    %216 = vector.load %arg9[%c1_104, %c0_105, %c0_106] : memref<2x1x32xf32, #tpu.memory_space<vmem>>, vector<1x1x32xf32>
    %217 = vector.shape_cast %216 : vector<1x1x32xf32> to vector<1x32xf32>
    %218 = vector.broadcast %213 : vector<1x32xf32> to vector<8x32xf32>
    %219 = arith.addf %199, %218 : vector<8x32xf32>
    %220 = vector.extract_strided_slice %207 {offsets = [0, 0], sizes = [8, 8], strides = [1, 1]} : vector<8x32xf32> to vector<8x8xf32>
    %221 = vector.extract_strided_slice %208 {offsets = [0, 0], sizes = [8, 8], strides = [1, 1]} : vector<8x32xf32> to vector<8x8xf32>
    %222 = vector.extract_strided_slice %209 {offsets = [0, 0], sizes = [8, 8], strides = [1, 1]} : vector<8x32xf32> to vector<8x8xf32>
    %cst_107 = arith.constant dense<0.000000e+00> : vector<8x8xf32>
    %223 = tpu.matmul %220, %221, %cst_107 {dimension_numbers = #tpu.dot_dimension_numbers<[1], [1], [0], [0], [0, 0, 1, 0], [], []>} : vector<8x8xf32>, vector<8x8xf32>, vector<8x8xf32> -> vector<8x8xf32>
    %cst_108 = arith.constant 0.353553385 : f32
    %224 = vector.broadcast %cst_108 : f32 to vector<8x8xf32>
    %225 = arith.mulf %223, %224 : vector<8x8xf32>
    %cst_109 = arith.constant 5.000000e-01 : f32
    %226 = vector.broadcast %cst_109 : f32 to vector<8x8xf32>
    %227 = arith.cmpf ogt, %3, %226 : vector<8x8xf32>
    %cst_110 = arith.constant -1.000000e+09 : f32
    %228 = vector.broadcast %cst_110 : f32 to vector<8x8xf32>
    %229 = arith.select %227, %228, %225 : vector<8x8xi1>, vector<8x8xf32>
    %cst_111 = arith.constant dense<0xFF800000> : vector<8xf32>
    %230 = vector.multi_reduction <maximumf>, %229, %cst_111 [1] : vector<8x8xf32> to vector<8xf32>
    %231 = vector.shape_cast %230 : vector<8xf32> to vector<8x1xf32>
    %232 = vector.broadcast %231 : vector<8x1xf32> to vector<8x8xf32>
    %233 = arith.subf %229, %232 : vector<8x8xf32>
    %234 = math.exp %233 : vector<8x8xf32>
    %cst_112 = arith.constant dense<0.000000e+00> : vector<8xf32>
    %235 = vector.multi_reduction <add>, %234, %cst_112 [1] : vector<8x8xf32> to vector<8xf32>
    %236 = vector.shape_cast %235 : vector<8xf32> to vector<8x1xf32>
    %237 = tpu.reciprocal %236 {approx = true} : vector<8x1xf32> -> vector<8x1xf32>
    %238 = vector.broadcast %237 : vector<8x1xf32> to vector<8x8xf32>
    %239 = arith.mulf %234, %238 : vector<8x8xf32>
    %cst_113 = arith.constant dense<0.000000e+00> : vector<8x8xf32>
    %240 = tpu.matmul %239, %222, %cst_113 {dimension_numbers = #tpu.dot_dimension_numbers<[1], [0], [0], [1], [0, 0, 1, 1], [], []>} : vector<8x8xf32>, vector<8x8xf32>, vector<8x8xf32> -> vector<8x8xf32>
    %241 = vector.extract_strided_slice %211 {offsets = [0, 0], sizes = [8, 32], strides = [1, 1]} : vector<32x32xf32> to vector<8x32xf32>
    %cst_114 = arith.constant dense<0.000000e+00> : vector<8x32xf32>
    %242 = tpu.matmul %240, %241, %cst_114 {dimension_numbers = #tpu.dot_dimension_numbers<[1], [0], [0], [1], [0, 0, 1, 1], [], []>} : vector<8x8xf32>, vector<8x32xf32>, vector<8x32xf32> -> vector<8x32xf32>
    %243 = arith.addf %219, %242 : vector<8x32xf32>
    %244 = vector.extract_strided_slice %207 {offsets = [0, 8], sizes = [8, 8], strides = [1, 1]} : vector<8x32xf32> to vector<8x8xf32>
    %245 = vector.extract_strided_slice %208 {offsets = [0, 8], sizes = [8, 8], strides = [1, 1]} : vector<8x32xf32> to vector<8x8xf32>
    %246 = vector.extract_strided_slice %209 {offsets = [0, 8], sizes = [8, 8], strides = [1, 1]} : vector<8x32xf32> to vector<8x8xf32>
    %cst_115 = arith.constant dense<0.000000e+00> : vector<8x8xf32>
    %247 = tpu.matmul %244, %245, %cst_115 {dimension_numbers = #tpu.dot_dimension_numbers<[1], [1], [0], [0], [0, 0, 1, 0], [], []>} : vector<8x8xf32>, vector<8x8xf32>, vector<8x8xf32> -> vector<8x8xf32>
    %cst_116 = arith.constant 0.353553385 : f32
    %248 = vector.broadcast %cst_116 : f32 to vector<8x8xf32>
    %249 = arith.mulf %247, %248 : vector<8x8xf32>
    %cst_117 = arith.constant 5.000000e-01 : f32
    %250 = vector.broadcast %cst_117 : f32 to vector<8x8xf32>
    %251 = arith.cmpf ogt, %3, %250 : vector<8x8xf32>
    %cst_118 = arith.constant -1.000000e+09 : f32
    %252 = vector.broadcast %cst_118 : f32 to vector<8x8xf32>
    %253 = arith.select %251, %252, %249 : vector<8x8xi1>, vector<8x8xf32>
    %cst_119 = arith.constant dense<0xFF800000> : vector<8xf32>
    %254 = vector.multi_reduction <maximumf>, %253, %cst_119 [1] : vector<8x8xf32> to vector<8xf32>
    %255 = vector.shape_cast %254 : vector<8xf32> to vector<8x1xf32>
    %256 = vector.broadcast %255 : vector<8x1xf32> to vector<8x8xf32>
    %257 = arith.subf %253, %256 : vector<8x8xf32>
    %258 = math.exp %257 : vector<8x8xf32>
    %cst_120 = arith.constant dense<0.000000e+00> : vector<8xf32>
    %259 = vector.multi_reduction <add>, %258, %cst_120 [1] : vector<8x8xf32> to vector<8xf32>
    %260 = vector.shape_cast %259 : vector<8xf32> to vector<8x1xf32>
    %261 = tpu.reciprocal %260 {approx = true} : vector<8x1xf32> -> vector<8x1xf32>
    %262 = vector.broadcast %261 : vector<8x1xf32> to vector<8x8xf32>
    %263 = arith.mulf %258, %262 : vector<8x8xf32>
    %cst_121 = arith.constant dense<0.000000e+00> : vector<8x8xf32>
    %264 = tpu.matmul %263, %246, %cst_121 {dimension_numbers = #tpu.dot_dimension_numbers<[1], [0], [0], [1], [0, 0, 1, 1], [], []>} : vector<8x8xf32>, vector<8x8xf32>, vector<8x8xf32> -> vector<8x8xf32>
    %265 = vector.extract_strided_slice %211 {offsets = [8, 0], sizes = [8, 32], strides = [1, 1]} : vector<32x32xf32> to vector<8x32xf32>
    %cst_122 = arith.constant dense<0.000000e+00> : vector<8x32xf32>
    %266 = tpu.matmul %264, %265, %cst_122 {dimension_numbers = #tpu.dot_dimension_numbers<[1], [0], [0], [1], [0, 0, 1, 1], [], []>} : vector<8x8xf32>, vector<8x32xf32>, vector<8x32xf32> -> vector<8x32xf32>
    %267 = arith.addf %243, %266 : vector<8x32xf32>
    %268 = vector.extract_strided_slice %207 {offsets = [0, 16], sizes = [8, 8], strides = [1, 1]} : vector<8x32xf32> to vector<8x8xf32>
    %269 = vector.extract_strided_slice %208 {offsets = [0, 16], sizes = [8, 8], strides = [1, 1]} : vector<8x32xf32> to vector<8x8xf32>
    %270 = vector.extract_strided_slice %209 {offsets = [0, 16], sizes = [8, 8], strides = [1, 1]} : vector<8x32xf32> to vector<8x8xf32>
    %cst_123 = arith.constant dense<0.000000e+00> : vector<8x8xf32>
    %271 = tpu.matmul %268, %269, %cst_123 {dimension_numbers = #tpu.dot_dimension_numbers<[1], [1], [0], [0], [0, 0, 1, 0], [], []>} : vector<8x8xf32>, vector<8x8xf32>, vector<8x8xf32> -> vector<8x8xf32>
    %cst_124 = arith.constant 0.353553385 : f32
    %272 = vector.broadcast %cst_124 : f32 to vector<8x8xf32>
    %273 = arith.mulf %271, %272 : vector<8x8xf32>
    %cst_125 = arith.constant 5.000000e-01 : f32
    %274 = vector.broadcast %cst_125 : f32 to vector<8x8xf32>
    %275 = arith.cmpf ogt, %3, %274 : vector<8x8xf32>
    %cst_126 = arith.constant -1.000000e+09 : f32
    %276 = vector.broadcast %cst_126 : f32 to vector<8x8xf32>
    %277 = arith.select %275, %276, %273 : vector<8x8xi1>, vector<8x8xf32>
    %cst_127 = arith.constant dense<0xFF800000> : vector<8xf32>
    %278 = vector.multi_reduction <maximumf>, %277, %cst_127 [1] : vector<8x8xf32> to vector<8xf32>
    %279 = vector.shape_cast %278 : vector<8xf32> to vector<8x1xf32>
    %280 = vector.broadcast %279 : vector<8x1xf32> to vector<8x8xf32>
    %281 = arith.subf %277, %280 : vector<8x8xf32>
    %282 = math.exp %281 : vector<8x8xf32>
    %cst_128 = arith.constant dense<0.000000e+00> : vector<8xf32>
    %283 = vector.multi_reduction <add>, %282, %cst_128 [1] : vector<8x8xf32> to vector<8xf32>
    %284 = vector.shape_cast %283 : vector<8xf32> to vector<8x1xf32>
    %285 = tpu.reciprocal %284 {approx = true} : vector<8x1xf32> -> vector<8x1xf32>
    %286 = vector.broadcast %285 : vector<8x1xf32> to vector<8x8xf32>
    %287 = arith.mulf %282, %286 : vector<8x8xf32>
    %cst_129 = arith.constant dense<0.000000e+00> : vector<8x8xf32>
    %288 = tpu.matmul %287, %270, %cst_129 {dimension_numbers = #tpu.dot_dimension_numbers<[1], [0], [0], [1], [0, 0, 1, 1], [], []>} : vector<8x8xf32>, vector<8x8xf32>, vector<8x8xf32> -> vector<8x8xf32>
    %289 = vector.extract_strided_slice %211 {offsets = [16, 0], sizes = [8, 32], strides = [1, 1]} : vector<32x32xf32> to vector<8x32xf32>
    %cst_130 = arith.constant dense<0.000000e+00> : vector<8x32xf32>
    %290 = tpu.matmul %288, %289, %cst_130 {dimension_numbers = #tpu.dot_dimension_numbers<[1], [0], [0], [1], [0, 0, 1, 1], [], []>} : vector<8x8xf32>, vector<8x32xf32>, vector<8x32xf32> -> vector<8x32xf32>
    %291 = arith.addf %267, %290 : vector<8x32xf32>
    %292 = vector.extract_strided_slice %207 {offsets = [0, 24], sizes = [8, 8], strides = [1, 1]} : vector<8x32xf32> to vector<8x8xf32>
    %293 = vector.extract_strided_slice %208 {offsets = [0, 24], sizes = [8, 8], strides = [1, 1]} : vector<8x32xf32> to vector<8x8xf32>
    %294 = vector.extract_strided_slice %209 {offsets = [0, 24], sizes = [8, 8], strides = [1, 1]} : vector<8x32xf32> to vector<8x8xf32>
    %cst_131 = arith.constant dense<0.000000e+00> : vector<8x8xf32>
    %295 = tpu.matmul %292, %293, %cst_131 {dimension_numbers = #tpu.dot_dimension_numbers<[1], [1], [0], [0], [0, 0, 1, 0], [], []>} : vector<8x8xf32>, vector<8x8xf32>, vector<8x8xf32> -> vector<8x8xf32>
    %cst_132 = arith.constant 0.353553385 : f32
    %296 = vector.broadcast %cst_132 : f32 to vector<8x8xf32>
    %297 = arith.mulf %295, %296 : vector<8x8xf32>
    %cst_133 = arith.constant 5.000000e-01 : f32
    %298 = vector.broadcast %cst_133 : f32 to vector<8x8xf32>
    %299 = arith.cmpf ogt, %3, %298 : vector<8x8xf32>
    %cst_134 = arith.constant -1.000000e+09 : f32
    %300 = vector.broadcast %cst_134 : f32 to vector<8x8xf32>
    %301 = arith.select %299, %300, %297 : vector<8x8xi1>, vector<8x8xf32>
    %cst_135 = arith.constant dense<0xFF800000> : vector<8xf32>
    %302 = vector.multi_reduction <maximumf>, %301, %cst_135 [1] : vector<8x8xf32> to vector<8xf32>
    %303 = vector.shape_cast %302 : vector<8xf32> to vector<8x1xf32>
    %304 = vector.broadcast %303 : vector<8x1xf32> to vector<8x8xf32>
    %305 = arith.subf %301, %304 : vector<8x8xf32>
    %306 = math.exp %305 : vector<8x8xf32>
    %cst_136 = arith.constant dense<0.000000e+00> : vector<8xf32>
    %307 = vector.multi_reduction <add>, %306, %cst_136 [1] : vector<8x8xf32> to vector<8xf32>
    %308 = vector.shape_cast %307 : vector<8xf32> to vector<8x1xf32>
    %309 = tpu.reciprocal %308 {approx = true} : vector<8x1xf32> -> vector<8x1xf32>
    %310 = vector.broadcast %309 : vector<8x1xf32> to vector<8x8xf32>
    %311 = arith.mulf %306, %310 : vector<8x8xf32>
    %cst_137 = arith.constant dense<0.000000e+00> : vector<8x8xf32>
    %312 = tpu.matmul %311, %294, %cst_137 {dimension_numbers = #tpu.dot_dimension_numbers<[1], [0], [0], [1], [0, 0, 1, 1], [], []>} : vector<8x8xf32>, vector<8x8xf32>, vector<8x8xf32> -> vector<8x8xf32>
    %313 = vector.extract_strided_slice %211 {offsets = [24, 0], sizes = [8, 32], strides = [1, 1]} : vector<32x32xf32> to vector<8x32xf32>
    %cst_138 = arith.constant dense<0.000000e+00> : vector<8x32xf32>
    %314 = tpu.matmul %312, %313, %cst_138 {dimension_numbers = #tpu.dot_dimension_numbers<[1], [0], [0], [1], [0, 0, 1, 1], [], []>} : vector<8x8xf32>, vector<8x32xf32>, vector<8x32xf32> -> vector<8x32xf32>
    %315 = arith.addf %291, %314 : vector<8x32xf32>
    %cst_139 = arith.constant dense<0.000000e+00> : vector<8xf32>
    %316 = vector.multi_reduction <add>, %315, %cst_139 [1] : vector<8x32xf32> to vector<8xf32>
    %317 = vector.shape_cast %316 : vector<8xf32> to vector<8x1xf32>
    %cst_140 = arith.constant 3.200000e+01 : f32
    %318 = vector.broadcast %cst_140 : f32 to vector<8x1xf32>
    %319 = arith.divf %317, %318 : vector<8x1xf32>
    %320 = vector.broadcast %319 : vector<8x1xf32> to vector<8x32xf32>
    %321 = arith.subf %315, %320 : vector<8x32xf32>
    %322 = arith.mulf %321, %321 : vector<8x32xf32>
    %cst_141 = arith.constant dense<0.000000e+00> : vector<8xf32>
    %323 = vector.multi_reduction <add>, %322, %cst_141 [1] : vector<8x32xf32> to vector<8xf32>
    %324 = vector.shape_cast %323 : vector<8xf32> to vector<8x1xf32>
    %cst_142 = arith.constant 3.200000e+01 : f32
    %325 = vector.broadcast %cst_142 : f32 to vector<8x1xf32>
    %326 = arith.divf %324, %325 : vector<8x1xf32>
    %327 = vector.broadcast %319 : vector<8x1xf32> to vector<8x32xf32>
    %328 = arith.subf %315, %327 : vector<8x32xf32>
    %cst_143 = arith.constant 9.99999974E-6 : f32
    %329 = vector.broadcast %cst_143 : f32 to vector<8x1xf32>
    %330 = arith.addf %326, %329 : vector<8x1xf32>
    %331 = math.rsqrt %330 : vector<8x1xf32>
    %332 = vector.broadcast %331 : vector<8x1xf32> to vector<8x32xf32>
    %333 = arith.mulf %328, %332 : vector<8x32xf32>
    %334 = vector.broadcast %215 : vector<1x32xf32> to vector<8x32xf32>
    %335 = arith.mulf %333, %334 : vector<8x32xf32>
    %336 = vector.broadcast %217 : vector<1x32xf32> to vector<8x32xf32>
    %337 = arith.addf %335, %336 : vector<8x32xf32>
    %338 = tpu.concatenate %239, %263, %287, %311 in 1 : vector<8x8xf32>, vector<8x8xf32>, vector<8x8xf32>, vector<8x8xf32> -> vector<8x32xf32>
    %c1_144 = arith.constant 1 : index
    %c0_145 = arith.constant 0 : index
    %c0_146 = arith.constant 0 : index
    %339 = vector.load %arg38[%c1_144, %c0_145, %c0_146] : memref<2x8x32xf32, #tpu.memory_space<vmem>>, vector<1x8x32xf32>
    %340 = vector.shape_cast %339 : vector<1x8x32xf32> to vector<8x32xf32>
    %341 = vector.shape_cast %338 : vector<8x32xf32> to vector<1x8x32xf32>
    tpu.vector_store %arg38[%c1_144, %c0_145, %c0_146], %341 {strides = array<i32>} : memref<2x8x32xf32, #tpu.memory_space<vmem>>, vector<1x8x32xf32>,
    %c1_147 = arith.constant 1 : index
    %c0_148 = arith.constant 0 : index
    %c0_149 = arith.constant 0 : index
    %342 = vector.load %arg10[%c1_147, %c0_148, %c0_149] : memref<2x32x64xf32, #tpu.memory_space<vmem>>, vector<1x32x64xf32>
    %343 = vector.shape_cast %342 : vector<1x32x64xf32> to vector<32x64xf32>
    %c1_150 = arith.constant 1 : index
    %c0_151 = arith.constant 0 : index
    %c0_152 = arith.constant 0 : index
    %344 = vector.load %arg11[%c1_150, %c0_151, %c0_152] : memref<2x1x64xf32, #tpu.memory_space<vmem>>, vector<1x1x64xf32>
    %345 = vector.shape_cast %344 : vector<1x1x64xf32> to vector<1x64xf32>
    %c1_153 = arith.constant 1 : index
    %c0_154 = arith.constant 0 : index
    %c0_155 = arith.constant 0 : index
    %346 = vector.load %arg12[%c1_153, %c0_154, %c0_155] : memref<2x64x32xf32, #tpu.memory_space<vmem>>, vector<1x64x32xf32>
    %347 = vector.shape_cast %346 : vector<1x64x32xf32> to vector<64x32xf32>
    %c1_156 = arith.constant 1 : index
    %c0_157 = arith.constant 0 : index
    %c0_158 = arith.constant 0 : index
    %348 = vector.load %arg13[%c1_156, %c0_157, %c0_158] : memref<2x1x32xf32, #tpu.memory_space<vmem>>, vector<1x1x32xf32>
    %349 = vector.shape_cast %348 : vector<1x1x32xf32> to vector<1x32xf32>
    %c1_159 = arith.constant 1 : index
    %c0_160 = arith.constant 0 : index
    %c0_161 = arith.constant 0 : index
    %350 = vector.load %arg14[%c1_159, %c0_160, %c0_161] : memref<2x1x32xf32, #tpu.memory_space<vmem>>, vector<1x1x32xf32>
    %351 = vector.shape_cast %350 : vector<1x1x32xf32> to vector<1x32xf32>
    %c1_162 = arith.constant 1 : index
    %c0_163 = arith.constant 0 : index
    %c0_164 = arith.constant 0 : index
    %352 = vector.load %arg15[%c1_162, %c0_163, %c0_164] : memref<2x1x32xf32, #tpu.memory_space<vmem>>, vector<1x1x32xf32>
    %353 = vector.shape_cast %352 : vector<1x1x32xf32> to vector<1x32xf32>
    %cst_165 = arith.constant dense<0.000000e+00> : vector<8x64xf32>
    %354 = tpu.matmul %337, %343, %cst_165 {dimension_numbers = #tpu.dot_dimension_numbers<[1], [0], [0], [1], [0, 0, 1, 1], [], []>} : vector<8x32xf32>, vector<32x64xf32>, vector<8x64xf32> -> vector<8x64xf32>
    %355 = vector.broadcast %345 : vector<1x64xf32> to vector<8x64xf32>
    %356 = arith.addf %354, %355 : vector<8x64xf32>
    %cst_166 = arith.constant 0.000000e+00 : f32
    %357 = vector.broadcast %cst_166 : f32 to vector<8x64xf32>
    %358 = arith.maximumf %356, %357 : vector<8x64xf32>
    %cst_167 = arith.constant dense<0.000000e+00> : vector<8x32xf32>
    %359 = tpu.matmul %358, %347, %cst_167 {dimension_numbers = #tpu.dot_dimension_numbers<[1], [0], [0], [1], [0, 0, 1, 1], [], []>} : vector<8x64xf32>, vector<64x32xf32>, vector<8x32xf32> -> vector<8x32xf32>
    %360 = vector.broadcast %349 : vector<1x32xf32> to vector<8x32xf32>
    %361 = arith.addf %359, %360 : vector<8x32xf32>
    %362 = arith.addf %361, %337 : vector<8x32xf32>
    %cst_168 = arith.constant dense<0.000000e+00> : vector<8xf32>
    %363 = vector.multi_reduction <add>, %362, %cst_168 [1] : vector<8x32xf32> to vector<8xf32>
    %364 = vector.shape_cast %363 : vector<8xf32> to vector<8x1xf32>
    %cst_169 = arith.constant 3.200000e+01 : f32
    %365 = vector.broadcast %cst_169 : f32 to vector<8x1xf32>
    %366 = arith.divf %364, %365 : vector<8x1xf32>
    %367 = vector.broadcast %366 : vector<8x1xf32> to vector<8x32xf32>
    %368 = arith.subf %362, %367 : vector<8x32xf32>
    %369 = arith.mulf %368, %368 : vector<8x32xf32>
    %cst_170 = arith.constant dense<0.000000e+00> : vector<8xf32>
    %370 = vector.multi_reduction <add>, %369, %cst_170 [1] : vector<8x32xf32> to vector<8xf32>
    %371 = vector.shape_cast %370 : vector<8xf32> to vector<8x1xf32>
    %cst_171 = arith.constant 3.200000e+01 : f32
    %372 = vector.broadcast %cst_171 : f32 to vector<8x1xf32>
    %373 = arith.divf %371, %372 : vector<8x1xf32>
    %374 = vector.broadcast %366 : vector<8x1xf32> to vector<8x32xf32>
    %375 = arith.subf %362, %374 : vector<8x32xf32>
    %cst_172 = arith.constant 9.99999974E-6 : f32
    %376 = vector.broadcast %cst_172 : f32 to vector<8x1xf32>
    %377 = arith.addf %373, %376 : vector<8x1xf32>
    %378 = math.rsqrt %377 : vector<8x1xf32>
    %379 = vector.broadcast %378 : vector<8x1xf32> to vector<8x32xf32>
    %380 = arith.mulf %375, %379 : vector<8x32xf32>
    %381 = vector.broadcast %351 : vector<1x32xf32> to vector<8x32xf32>
    %382 = arith.mulf %380, %381 : vector<8x32xf32>
    %383 = vector.broadcast %353 : vector<1x32xf32> to vector<8x32xf32>
    %384 = arith.addf %382, %383 : vector<8x32xf32>
    %c0_173 = arith.constant 0 : index
    %c0_174 = arith.constant 0 : index
    %385 = vector.load %arg1[%c0_173, %c0_174] : memref<8x32xf32, #tpu.memory_space<vmem>>, vector<8x32xf32>
    %c0_175 = arith.constant 0 : index
    %c0_176 = arith.constant 0 : index
    %c0_177 = arith.constant 0 : index
    %386 = vector.load %arg16[%c0_175, %c0_176, %c0_177] : memref<2x32x96xf32, #tpu.memory_space<vmem>>, vector<1x32x96xf32>
    %387 = vector.shape_cast %386 : vector<1x32x96xf32> to vector<32x96xf32>
    %cst_178 = arith.constant dense<0.000000e+00> : vector<8x96xf32>
    %388 = tpu.matmul %385, %387, %cst_178 {dimension_numbers = #tpu.dot_dimension_numbers<[1], [0], [0], [1], [0, 0, 1, 1], [], []>} : vector<8x32xf32>, vector<32x96xf32>, vector<8x96xf32> -> vector<8x96xf32>
    %c0_179 = arith.constant 0 : index
    %c0_180 = arith.constant 0 : index
    %c0_181 = arith.constant 0 : index
    %389 = vector.load %arg17[%c0_179, %c0_180, %c0_181] : memref<2x1x96xf32, #tpu.memory_space<vmem>>, vector<1x1x96xf32>
    %390 = vector.shape_cast %389 : vector<1x1x96xf32> to vector<1x96xf32>
    %391 = vector.broadcast %390 : vector<1x96xf32> to vector<8x96xf32>
    %392 = arith.addf %388, %391 : vector<8x96xf32>
    %393 = vector.extract_strided_slice %392 {offsets = [0, 0], sizes = [8, 32], strides = [1, 1]} : vector<8x96xf32> to vector<8x32xf32>
    %394 = vector.extract_strided_slice %392 {offsets = [0, 32], sizes = [8, 32], strides = [1, 1]} : vector<8x96xf32> to vector<8x32xf32>
    %395 = vector.extract_strided_slice %392 {offsets = [0, 64], sizes = [8, 32], strides = [1, 1]} : vector<8x96xf32> to vector<8x32xf32>
    %c0_182 = arith.constant 0 : index
    %c0_183 = arith.constant 0 : index
    %c0_184 = arith.constant 0 : index
    %396 = vector.load %arg18[%c0_182, %c0_183, %c0_184] : memref<2x32x32xf32, #tpu.memory_space<vmem>>, vector<1x32x32xf32>
    %397 = vector.shape_cast %396 : vector<1x32x32xf32> to vector<32x32xf32>
    %c0_185 = arith.constant 0 : index
    %c0_186 = arith.constant 0 : index
    %c0_187 = arith.constant 0 : index
    %398 = vector.load %arg19[%c0_185, %c0_186, %c0_187] : memref<2x1x32xf32, #tpu.memory_space<vmem>>, vector<1x1x32xf32>
    %399 = vector.shape_cast %398 : vector<1x1x32xf32> to vector<1x32xf32>
    %c0_188 = arith.constant 0 : index
    %c0_189 = arith.constant 0 : index
    %c0_190 = arith.constant 0 : index
    %400 = vector.load %arg20[%c0_188, %c0_189, %c0_190] : memref<2x1x32xf32, #tpu.memory_space<vmem>>, vector<1x1x32xf32>
    %401 = vector.shape_cast %400 : vector<1x1x32xf32> to vector<1x32xf32>
    %c0_191 = arith.constant 0 : index
    %c0_192 = arith.constant 0 : index
    %c0_193 = arith.constant 0 : index
    %402 = vector.load %arg21[%c0_191, %c0_192, %c0_193] : memref<2x1x32xf32, #tpu.memory_space<vmem>>, vector<1x1x32xf32>
    %403 = vector.shape_cast %402 : vector<1x1x32xf32> to vector<1x32xf32>
    %404 = vector.broadcast %399 : vector<1x32xf32> to vector<8x32xf32>
    %405 = arith.addf %385, %404 : vector<8x32xf32>
    %406 = vector.extract_strided_slice %393 {offsets = [0, 0], sizes = [8, 8], strides = [1, 1]} : vector<8x32xf32> to vector<8x8xf32>
    %407 = vector.extract_strided_slice %394 {offsets = [0, 0], sizes = [8, 8], strides = [1, 1]} : vector<8x32xf32> to vector<8x8xf32>
    %408 = vector.extract_strided_slice %395 {offsets = [0, 0], sizes = [8, 8], strides = [1, 1]} : vector<8x32xf32> to vector<8x8xf32>
    %cst_194 = arith.constant dense<0.000000e+00> : vector<8x8xf32>
    %409 = tpu.matmul %406, %407, %cst_194 {dimension_numbers = #tpu.dot_dimension_numbers<[1], [1], [0], [0], [0, 0, 1, 0], [], []>} : vector<8x8xf32>, vector<8x8xf32>, vector<8x8xf32> -> vector<8x8xf32>
    %cst_195 = arith.constant 0.353553385 : f32
    %410 = vector.broadcast %cst_195 : f32 to vector<8x8xf32>
    %411 = arith.mulf %409, %410 : vector<8x8xf32>
    %cst_196 = arith.constant 5.000000e-01 : f32
    %412 = vector.broadcast %cst_196 : f32 to vector<8x8xf32>
    %413 = arith.cmpf ogt, %11, %412 : vector<8x8xf32>
    %cst_197 = arith.constant -1.000000e+09 : f32
    %414 = vector.broadcast %cst_197 : f32 to vector<8x8xf32>
    %415 = arith.select %413, %414, %411 : vector<8x8xi1>, vector<8x8xf32>
    %cst_198 = arith.constant dense<0xFF800000> : vector<8xf32>
    %416 = vector.multi_reduction <maximumf>, %415, %cst_198 [1] : vector<8x8xf32> to vector<8xf32>
    %417 = vector.shape_cast %416 : vector<8xf32> to vector<8x1xf32>
    %418 = vector.broadcast %417 : vector<8x1xf32> to vector<8x8xf32>
    %419 = arith.subf %415, %418 : vector<8x8xf32>
    %420 = math.exp %419 : vector<8x8xf32>
    %cst_199 = arith.constant dense<0.000000e+00> : vector<8xf32>
    %421 = vector.multi_reduction <add>, %420, %cst_199 [1] : vector<8x8xf32> to vector<8xf32>
    %422 = vector.shape_cast %421 : vector<8xf32> to vector<8x1xf32>
    %423 = tpu.reciprocal %422 {approx = true} : vector<8x1xf32> -> vector<8x1xf32>
    %424 = vector.broadcast %423 : vector<8x1xf32> to vector<8x8xf32>
    %425 = arith.mulf %420, %424 : vector<8x8xf32>
    %cst_200 = arith.constant dense<0.000000e+00> : vector<8x8xf32>
    %426 = tpu.matmul %425, %408, %cst_200 {dimension_numbers = #tpu.dot_dimension_numbers<[1], [0], [0], [1], [0, 0, 1, 1], [], []>} : vector<8x8xf32>, vector<8x8xf32>, vector<8x8xf32> -> vector<8x8xf32>
    %427 = vector.extract_strided_slice %397 {offsets = [0, 0], sizes = [8, 32], strides = [1, 1]} : vector<32x32xf32> to vector<8x32xf32>
    %cst_201 = arith.constant dense<0.000000e+00> : vector<8x32xf32>
    %428 = tpu.matmul %426, %427, %cst_201 {dimension_numbers = #tpu.dot_dimension_numbers<[1], [0], [0], [1], [0, 0, 1, 1], [], []>} : vector<8x8xf32>, vector<8x32xf32>, vector<8x32xf32> -> vector<8x32xf32>
    %429 = arith.addf %405, %428 : vector<8x32xf32>
    %430 = vector.extract_strided_slice %393 {offsets = [0, 8], sizes = [8, 8], strides = [1, 1]} : vector<8x32xf32> to vector<8x8xf32>
    %431 = vector.extract_strided_slice %394 {offsets = [0, 8], sizes = [8, 8], strides = [1, 1]} : vector<8x32xf32> to vector<8x8xf32>
    %432 = vector.extract_strided_slice %395 {offsets = [0, 8], sizes = [8, 8], strides = [1, 1]} : vector<8x32xf32> to vector<8x8xf32>
    %cst_202 = arith.constant dense<0.000000e+00> : vector<8x8xf32>
    %433 = tpu.matmul %430, %431, %cst_202 {dimension_numbers = #tpu.dot_dimension_numbers<[1], [1], [0], [0], [0, 0, 1, 0], [], []>} : vector<8x8xf32>, vector<8x8xf32>, vector<8x8xf32> -> vector<8x8xf32>
    %cst_203 = arith.constant 0.353553385 : f32
    %434 = vector.broadcast %cst_203 : f32 to vector<8x8xf32>
    %435 = arith.mulf %433, %434 : vector<8x8xf32>
    %cst_204 = arith.constant 5.000000e-01 : f32
    %436 = vector.broadcast %cst_204 : f32 to vector<8x8xf32>
    %437 = arith.cmpf ogt, %11, %436 : vector<8x8xf32>
    %cst_205 = arith.constant -1.000000e+09 : f32
    %438 = vector.broadcast %cst_205 : f32 to vector<8x8xf32>
    %439 = arith.select %437, %438, %435 : vector<8x8xi1>, vector<8x8xf32>
    %cst_206 = arith.constant dense<0xFF800000> : vector<8xf32>
    %440 = vector.multi_reduction <maximumf>, %439, %cst_206 [1] : vector<8x8xf32> to vector<8xf32>
    %441 = vector.shape_cast %440 : vector<8xf32> to vector<8x1xf32>
    %442 = vector.broadcast %441 : vector<8x1xf32> to vector<8x8xf32>
    %443 = arith.subf %439, %442 : vector<8x8xf32>
    %444 = math.exp %443 : vector<8x8xf32>
    %cst_207 = arith.constant dense<0.000000e+00> : vector<8xf32>
    %445 = vector.multi_reduction <add>, %444, %cst_207 [1] : vector<8x8xf32> to vector<8xf32>
    %446 = vector.shape_cast %445 : vector<8xf32> to vector<8x1xf32>
    %447 = tpu.reciprocal %446 {approx = true} : vector<8x1xf32> -> vector<8x1xf32>
    %448 = vector.broadcast %447 : vector<8x1xf32> to vector<8x8xf32>
    %449 = arith.mulf %444, %448 : vector<8x8xf32>
    %cst_208 = arith.constant dense<0.000000e+00> : vector<8x8xf32>
    %450 = tpu.matmul %449, %432, %cst_208 {dimension_numbers = #tpu.dot_dimension_numbers<[1], [0], [0], [1], [0, 0, 1, 1], [], []>} : vector<8x8xf32>, vector<8x8xf32>, vector<8x8xf32> -> vector<8x8xf32>
    %451 = vector.extract_strided_slice %397 {offsets = [8, 0], sizes = [8, 32], strides = [1, 1]} : vector<32x32xf32> to vector<8x32xf32>
    %cst_209 = arith.constant dense<0.000000e+00> : vector<8x32xf32>
    %452 = tpu.matmul %450, %451, %cst_209 {dimension_numbers = #tpu.dot_dimension_numbers<[1], [0], [0], [1], [0, 0, 1, 1], [], []>} : vector<8x8xf32>, vector<8x32xf32>, vector<8x32xf32> -> vector<8x32xf32>
    %453 = arith.addf %429, %452 : vector<8x32xf32>
    %454 = vector.extract_strided_slice %393 {offsets = [0, 16], sizes = [8, 8], strides = [1, 1]} : vector<8x32xf32> to vector<8x8xf32>
    %455 = vector.extract_strided_slice %394 {offsets = [0, 16], sizes = [8, 8], strides = [1, 1]} : vector<8x32xf32> to vector<8x8xf32>
    %456 = vector.extract_strided_slice %395 {offsets = [0, 16], sizes = [8, 8], strides = [1, 1]} : vector<8x32xf32> to vector<8x8xf32>
    %cst_210 = arith.constant dense<0.000000e+00> : vector<8x8xf32>
    %457 = tpu.matmul %454, %455, %cst_210 {dimension_numbers = #tpu.dot_dimension_numbers<[1], [1], [0], [0], [0, 0, 1, 0], [], []>} : vector<8x8xf32>, vector<8x8xf32>, vector<8x8xf32> -> vector<8x8xf32>
    %cst_211 = arith.constant 0.353553385 : f32
    %458 = vector.broadcast %cst_211 : f32 to vector<8x8xf32>
    %459 = arith.mulf %457, %458 : vector<8x8xf32>
    %cst_212 = arith.constant 5.000000e-01 : f32
    %460 = vector.broadcast %cst_212 : f32 to vector<8x8xf32>
    %461 = arith.cmpf ogt, %11, %460 : vector<8x8xf32>
    %cst_213 = arith.constant -1.000000e+09 : f32
    %462 = vector.broadcast %cst_213 : f32 to vector<8x8xf32>
    %463 = arith.select %461, %462, %459 : vector<8x8xi1>, vector<8x8xf32>
    %cst_214 = arith.constant dense<0xFF800000> : vector<8xf32>
    %464 = vector.multi_reduction <maximumf>, %463, %cst_214 [1] : vector<8x8xf32> to vector<8xf32>
    %465 = vector.shape_cast %464 : vector<8xf32> to vector<8x1xf32>
    %466 = vector.broadcast %465 : vector<8x1xf32> to vector<8x8xf32>
    %467 = arith.subf %463, %466 : vector<8x8xf32>
    %468 = math.exp %467 : vector<8x8xf32>
    %cst_215 = arith.constant dense<0.000000e+00> : vector<8xf32>
    %469 = vector.multi_reduction <add>, %468, %cst_215 [1] : vector<8x8xf32> to vector<8xf32>
    %470 = vector.shape_cast %469 : vector<8xf32> to vector<8x1xf32>
    %471 = tpu.reciprocal %470 {approx = true} : vector<8x1xf32> -> vector<8x1xf32>
    %472 = vector.broadcast %471 : vector<8x1xf32> to vector<8x8xf32>
    %473 = arith.mulf %468, %472 : vector<8x8xf32>
    %cst_216 = arith.constant dense<0.000000e+00> : vector<8x8xf32>
    %474 = tpu.matmul %473, %456, %cst_216 {dimension_numbers = #tpu.dot_dimension_numbers<[1], [0], [0], [1], [0, 0, 1, 1], [], []>} : vector<8x8xf32>, vector<8x8xf32>, vector<8x8xf32> -> vector<8x8xf32>
    %475 = vector.extract_strided_slice %397 {offsets = [16, 0], sizes = [8, 32], strides = [1, 1]} : vector<32x32xf32> to vector<8x32xf32>
    %cst_217 = arith.constant dense<0.000000e+00> : vector<8x32xf32>
    %476 = tpu.matmul %474, %475, %cst_217 {dimension_numbers = #tpu.dot_dimension_numbers<[1], [0], [0], [1], [0, 0, 1, 1], [], []>} : vector<8x8xf32>, vector<8x32xf32>, vector<8x32xf32> -> vector<8x32xf32>
    %477 = arith.addf %453, %476 : vector<8x32xf32>
    %478 = vector.extract_strided_slice %393 {offsets = [0, 24], sizes = [8, 8], strides = [1, 1]} : vector<8x32xf32> to vector<8x8xf32>
    %479 = vector.extract_strided_slice %394 {offsets = [0, 24], sizes = [8, 8], strides = [1, 1]} : vector<8x32xf32> to vector<8x8xf32>
    %480 = vector.extract_strided_slice %395 {offsets = [0, 24], sizes = [8, 8], strides = [1, 1]} : vector<8x32xf32> to vector<8x8xf32>
    %cst_218 = arith.constant dense<0.000000e+00> : vector<8x8xf32>
    %481 = tpu.matmul %478, %479, %cst_218 {dimension_numbers = #tpu.dot_dimension_numbers<[1], [1], [0], [0], [0, 0, 1, 0], [], []>} : vector<8x8xf32>, vector<8x8xf32>, vector<8x8xf32> -> vector<8x8xf32>
    %cst_219 = arith.constant 0.353553385 : f32
    %482 = vector.broadcast %cst_219 : f32 to vector<8x8xf32>
    %483 = arith.mulf %481, %482 : vector<8x8xf32>
    %cst_220 = arith.constant 5.000000e-01 : f32
    %484 = vector.broadcast %cst_220 : f32 to vector<8x8xf32>
    %485 = arith.cmpf ogt, %11, %484 : vector<8x8xf32>
    %cst_221 = arith.constant -1.000000e+09 : f32
    %486 = vector.broadcast %cst_221 : f32 to vector<8x8xf32>
    %487 = arith.select %485, %486, %483 : vector<8x8xi1>, vector<8x8xf32>
    %cst_222 = arith.constant dense<0xFF800000> : vector<8xf32>
    %488 = vector.multi_reduction <maximumf>, %487, %cst_222 [1] : vector<8x8xf32> to vector<8xf32>
    %489 = vector.shape_cast %488 : vector<8xf32> to vector<8x1xf32>
    %490 = vector.broadcast %489 : vector<8x1xf32> to vector<8x8xf32>
    %491 = arith.subf %487, %490 : vector<8x8xf32>
    %492 = math.exp %491 : vector<8x8xf32>
    %cst_223 = arith.constant dense<0.000000e+00> : vector<8xf32>
    %493 = vector.multi_reduction <add>, %492, %cst_223 [1] : vector<8x8xf32> to vector<8xf32>
    %494 = vector.shape_cast %493 : vector<8xf32> to vector<8x1xf32>
    %495 = tpu.reciprocal %494 {approx = true} : vector<8x1xf32> -> vector<8x1xf32>
    %496 = vector.broadcast %495 : vector<8x1xf32> to vector<8x8xf32>
    %497 = arith.mulf %492, %496 : vector<8x8xf32>
    %cst_224 = arith.constant dense<0.000000e+00> : vector<8x8xf32>
    %498 = tpu.matmul %497, %480, %cst_224 {dimension_numbers = #tpu.dot_dimension_numbers<[1], [0], [0], [1], [0, 0, 1, 1], [], []>} : vector<8x8xf32>, vector<8x8xf32>, vector<8x8xf32> -> vector<8x8xf32>
    %499 = vector.extract_strided_slice %397 {offsets = [24, 0], sizes = [8, 32], strides = [1, 1]} : vector<32x32xf32> to vector<8x32xf32>
    %cst_225 = arith.constant dense<0.000000e+00> : vector<8x32xf32>
    %500 = tpu.matmul %498, %499, %cst_225 {dimension_numbers = #tpu.dot_dimension_numbers<[1], [0], [0], [1], [0, 0, 1, 1], [], []>} : vector<8x8xf32>, vector<8x32xf32>, vector<8x32xf32> -> vector<8x32xf32>
    %501 = arith.addf %477, %500 : vector<8x32xf32>
    %cst_226 = arith.constant dense<0.000000e+00> : vector<8xf32>
    %502 = vector.multi_reduction <add>, %501, %cst_226 [1] : vector<8x32xf32> to vector<8xf32>
    %503 = vector.shape_cast %502 : vector<8xf32> to vector<8x1xf32>
    %cst_227 = arith.constant 3.200000e+01 : f32
    %504 = vector.broadcast %cst_227 : f32 to vector<8x1xf32>
    %505 = arith.divf %503, %504 : vector<8x1xf32>
    %506 = vector.broadcast %505 : vector<8x1xf32> to vector<8x32xf32>
    %507 = arith.subf %501, %506 : vector<8x32xf32>
    %508 = arith.mulf %507, %507 : vector<8x32xf32>
    %cst_228 = arith.constant dense<0.000000e+00> : vector<8xf32>
    %509 = vector.multi_reduction <add>, %508, %cst_228 [1] : vector<8x32xf32> to vector<8xf32>
    %510 = vector.shape_cast %509 : vector<8xf32> to vector<8x1xf32>
    %cst_229 = arith.constant 3.200000e+01 : f32
    %511 = vector.broadcast %cst_229 : f32 to vector<8x1xf32>
    %512 = arith.divf %510, %511 : vector<8x1xf32>
    %513 = vector.broadcast %505 : vector<8x1xf32> to vector<8x32xf32>
    %514 = arith.subf %501, %513 : vector<8x32xf32>
    %cst_230 = arith.constant 9.99999974E-6 : f32
    %515 = vector.broadcast %cst_230 : f32 to vector<8x1xf32>
    %516 = arith.addf %512, %515 : vector<8x1xf32>
    %517 = math.rsqrt %516 : vector<8x1xf32>
    %518 = vector.broadcast %517 : vector<8x1xf32> to vector<8x32xf32>
    %519 = arith.mulf %514, %518 : vector<8x32xf32>
    %520 = vector.broadcast %401 : vector<1x32xf32> to vector<8x32xf32>
    %521 = arith.mulf %519, %520 : vector<8x32xf32>
    %522 = vector.broadcast %403 : vector<1x32xf32> to vector<8x32xf32>
    %523 = arith.addf %521, %522 : vector<8x32xf32>
    %524 = tpu.concatenate %425, %449, %473, %497 in 1 : vector<8x8xf32>, vector<8x8xf32>, vector<8x8xf32>, vector<8x8xf32> -> vector<8x32xf32>
    %c0_231 = arith.constant 0 : index
    %c0_232 = arith.constant 0 : index
    %c0_233 = arith.constant 0 : index
    %525 = vector.load %arg39[%c0_231, %c0_232, %c0_233] : memref<2x8x32xf32, #tpu.memory_space<vmem>>, vector<1x8x32xf32>
    %526 = vector.shape_cast %525 : vector<1x8x32xf32> to vector<8x32xf32>
    %527 = vector.shape_cast %524 : vector<8x32xf32> to vector<1x8x32xf32>
    tpu.vector_store %arg39[%c0_231, %c0_232, %c0_233], %527 {strides = array<i32>} : memref<2x8x32xf32, #tpu.memory_space<vmem>>, vector<1x8x32xf32>,
    %c0_234 = arith.constant 0 : index
    %c0_235 = arith.constant 0 : index
    %c0_236 = arith.constant 0 : index
    %528 = vector.load %arg22[%c0_234, %c0_235, %c0_236] : memref<2x32x32xf32, #tpu.memory_space<vmem>>, vector<1x32x32xf32>
    %529 = vector.shape_cast %528 : vector<1x32x32xf32> to vector<32x32xf32>
    %cst_237 = arith.constant dense<0.000000e+00> : vector<8x32xf32>
    %530 = tpu.matmul %523, %529, %cst_237 {dimension_numbers = #tpu.dot_dimension_numbers<[1], [0], [0], [1], [0, 0, 1, 1], [], []>} : vector<8x32xf32>, vector<32x32xf32>, vector<8x32xf32> -> vector<8x32xf32>
    %c0_238 = arith.constant 0 : index
    %c0_239 = arith.constant 0 : index
    %c0_240 = arith.constant 0 : index
    %531 = vector.load %arg23[%c0_238, %c0_239, %c0_240] : memref<2x1x32xf32, #tpu.memory_space<vmem>>, vector<1x1x32xf32>
    %532 = vector.shape_cast %531 : vector<1x1x32xf32> to vector<1x32xf32>
    %533 = vector.broadcast %532 : vector<1x32xf32> to vector<8x32xf32>
    %534 = arith.addf %530, %533 : vector<8x32xf32>
    %c0_241 = arith.constant 0 : index
    %c0_242 = arith.constant 0 : index
    %c0_243 = arith.constant 0 : index
    %535 = vector.load %arg24[%c0_241, %c0_242, %c0_243] : memref<2x32x64xf32, #tpu.memory_space<vmem>>, vector<1x32x64xf32>
    %536 = vector.shape_cast %535 : vector<1x32x64xf32> to vector<32x64xf32>
    %cst_244 = arith.constant dense<0.000000e+00> : vector<8x64xf32>
    %537 = tpu.matmul %384, %536, %cst_244 {dimension_numbers = #tpu.dot_dimension_numbers<[1], [0], [0], [1], [0, 0, 1, 1], [], []>} : vector<8x32xf32>, vector<32x64xf32>, vector<8x64xf32> -> vector<8x64xf32>
    %c0_245 = arith.constant 0 : index
    %c0_246 = arith.constant 0 : index
    %c0_247 = arith.constant 0 : index
    %538 = vector.load %arg25[%c0_245, %c0_246, %c0_247] : memref<2x1x64xf32, #tpu.memory_space<vmem>>, vector<1x1x64xf32>
    %539 = vector.shape_cast %538 : vector<1x1x64xf32> to vector<1x64xf32>
    %540 = vector.broadcast %539 : vector<1x64xf32> to vector<8x64xf32>
    %541 = arith.addf %537, %540 : vector<8x64xf32>
    %542 = vector.extract_strided_slice %541 {offsets = [0, 0], sizes = [8, 32], strides = [1, 1]} : vector<8x64xf32> to vector<8x32xf32>
    %543 = vector.extract_strided_slice %541 {offsets = [0, 32], sizes = [8, 32], strides = [1, 1]} : vector<8x64xf32> to vector<8x32xf32>
    %c0_248 = arith.constant 0 : index
    %c0_249 = arith.constant 0 : index
    %c0_250 = arith.constant 0 : index
    %544 = vector.load %arg26[%c0_248, %c0_249, %c0_250] : memref<2x32x32xf32, #tpu.memory_space<vmem>>, vector<1x32x32xf32>
    %545 = vector.shape_cast %544 : vector<1x32x32xf32> to vector<32x32xf32>
    %c0_251 = arith.constant 0 : index
    %c0_252 = arith.constant 0 : index
    %c0_253 = arith.constant 0 : index
    %546 = vector.load %arg27[%c0_251, %c0_252, %c0_253] : memref<2x1x32xf32, #tpu.memory_space<vmem>>, vector<1x1x32xf32>
    %547 = vector.shape_cast %546 : vector<1x1x32xf32> to vector<1x32xf32>
    %c0_254 = arith.constant 0 : index
    %c0_255 = arith.constant 0 : index
    %c0_256 = arith.constant 0 : index
    %548 = vector.load %arg28[%c0_254, %c0_255, %c0_256] : memref<2x1x32xf32, #tpu.memory_space<vmem>>, vector<1x1x32xf32>
    %549 = vector.shape_cast %548 : vector<1x1x32xf32> to vector<1x32xf32>
    %c0_257 = arith.constant 0 : index
    %c0_258 = arith.constant 0 : index
    %c0_259 = arith.constant 0 : index
    %550 = vector.load %arg29[%c0_257, %c0_258, %c0_259] : memref<2x1x32xf32, #tpu.memory_space<vmem>>, vector<1x1x32xf32>
    %551 = vector.shape_cast %550 : vector<1x1x32xf32> to vector<1x32xf32>
    %552 = vector.broadcast %547 : vector<1x32xf32> to vector<8x32xf32>
    %553 = arith.addf %523, %552 : vector<8x32xf32>
    %554 = vector.extract_strided_slice %534 {offsets = [0, 0], sizes = [8, 8], strides = [1, 1]} : vector<8x32xf32> to vector<8x8xf32>
    %555 = vector.extract_strided_slice %542 {offsets = [0, 0], sizes = [8, 8], strides = [1, 1]} : vector<8x32xf32> to vector<8x8xf32>
    %556 = vector.extract_strided_slice %543 {offsets = [0, 0], sizes = [8, 8], strides = [1, 1]} : vector<8x32xf32> to vector<8x8xf32>
    %cst_260 = arith.constant dense<0.000000e+00> : vector<8x8xf32>
    %557 = tpu.matmul %554, %555, %cst_260 {dimension_numbers = #tpu.dot_dimension_numbers<[1], [1], [0], [0], [0, 0, 1, 0], [], []>} : vector<8x8xf32>, vector<8x8xf32>, vector<8x8xf32> -> vector<8x8xf32>
    %cst_261 = arith.constant 0.353553385 : f32
    %558 = vector.broadcast %cst_261 : f32 to vector<8x8xf32>
    %559 = arith.mulf %557, %558 : vector<8x8xf32>
    %cst_262 = arith.constant 5.000000e-01 : f32
    %560 = vector.broadcast %cst_262 : f32 to vector<8x8xf32>
    %561 = arith.cmpf ogt, %13, %560 : vector<8x8xf32>
    %cst_263 = arith.constant -1.000000e+09 : f32
    %562 = vector.broadcast %cst_263 : f32 to vector<8x8xf32>
    %563 = arith.select %561, %562, %559 : vector<8x8xi1>, vector<8x8xf32>
    %cst_264 = arith.constant dense<0xFF800000> : vector<8xf32>
    %564 = vector.multi_reduction <maximumf>, %563, %cst_264 [1] : vector<8x8xf32> to vector<8xf32>
    %565 = vector.shape_cast %564 : vector<8xf32> to vector<8x1xf32>
    %566 = vector.broadcast %565 : vector<8x1xf32> to vector<8x8xf32>
    %567 = arith.subf %563, %566 : vector<8x8xf32>
    %568 = math.exp %567 : vector<8x8xf32>
    %cst_265 = arith.constant dense<0.000000e+00> : vector<8xf32>
    %569 = vector.multi_reduction <add>, %568, %cst_265 [1] : vector<8x8xf32> to vector<8xf32>
    %570 = vector.shape_cast %569 : vector<8xf32> to vector<8x1xf32>
    %571 = tpu.reciprocal %570 {approx = true} : vector<8x1xf32> -> vector<8x1xf32>
    %572 = vector.broadcast %571 : vector<8x1xf32> to vector<8x8xf32>
    %573 = arith.mulf %568, %572 : vector<8x8xf32>
    %cst_266 = arith.constant dense<0.000000e+00> : vector<8x8xf32>
    %574 = tpu.matmul %573, %556, %cst_266 {dimension_numbers = #tpu.dot_dimension_numbers<[1], [0], [0], [1], [0, 0, 1, 1], [], []>} : vector<8x8xf32>, vector<8x8xf32>, vector<8x8xf32> -> vector<8x8xf32>
    %575 = vector.extract_strided_slice %545 {offsets = [0, 0], sizes = [8, 32], strides = [1, 1]} : vector<32x32xf32> to vector<8x32xf32>
    %cst_267 = arith.constant dense<0.000000e+00> : vector<8x32xf32>
    %576 = tpu.matmul %574, %575, %cst_267 {dimension_numbers = #tpu.dot_dimension_numbers<[1], [0], [0], [1], [0, 0, 1, 1], [], []>} : vector<8x8xf32>, vector<8x32xf32>, vector<8x32xf32> -> vector<8x32xf32>
    %577 = arith.addf %553, %576 : vector<8x32xf32>
    %578 = vector.extract_strided_slice %534 {offsets = [0, 8], sizes = [8, 8], strides = [1, 1]} : vector<8x32xf32> to vector<8x8xf32>
    %579 = vector.extract_strided_slice %542 {offsets = [0, 8], sizes = [8, 8], strides = [1, 1]} : vector<8x32xf32> to vector<8x8xf32>
    %580 = vector.extract_strided_slice %543 {offsets = [0, 8], sizes = [8, 8], strides = [1, 1]} : vector<8x32xf32> to vector<8x8xf32>
    %cst_268 = arith.constant dense<0.000000e+00> : vector<8x8xf32>
    %581 = tpu.matmul %578, %579, %cst_268 {dimension_numbers = #tpu.dot_dimension_numbers<[1], [1], [0], [0], [0, 0, 1, 0], [], []>} : vector<8x8xf32>, vector<8x8xf32>, vector<8x8xf32> -> vector<8x8xf32>
    %cst_269 = arith.constant 0.353553385 : f32
    %582 = vector.broadcast %cst_269 : f32 to vector<8x8xf32>
    %583 = arith.mulf %581, %582 : vector<8x8xf32>
    %cst_270 = arith.constant 5.000000e-01 : f32
    %584 = vector.broadcast %cst_270 : f32 to vector<8x8xf32>
    %585 = arith.cmpf ogt, %13, %584 : vector<8x8xf32>
    %cst_271 = arith.constant -1.000000e+09 : f32
    %586 = vector.broadcast %cst_271 : f32 to vector<8x8xf32>
    %587 = arith.select %585, %586, %583 : vector<8x8xi1>, vector<8x8xf32>
    %cst_272 = arith.constant dense<0xFF800000> : vector<8xf32>
    %588 = vector.multi_reduction <maximumf>, %587, %cst_272 [1] : vector<8x8xf32> to vector<8xf32>
    %589 = vector.shape_cast %588 : vector<8xf32> to vector<8x1xf32>
    %590 = vector.broadcast %589 : vector<8x1xf32> to vector<8x8xf32>
    %591 = arith.subf %587, %590 : vector<8x8xf32>
    %592 = math.exp %591 : vector<8x8xf32>
    %cst_273 = arith.constant dense<0.000000e+00> : vector<8xf32>
    %593 = vector.multi_reduction <add>, %592, %cst_273 [1] : vector<8x8xf32> to vector<8xf32>
    %594 = vector.shape_cast %593 : vector<8xf32> to vector<8x1xf32>
    %595 = tpu.reciprocal %594 {approx = true} : vector<8x1xf32> -> vector<8x1xf32>
    %596 = vector.broadcast %595 : vector<8x1xf32> to vector<8x8xf32>
    %597 = arith.mulf %592, %596 : vector<8x8xf32>
    %cst_274 = arith.constant dense<0.000000e+00> : vector<8x8xf32>
    %598 = tpu.matmul %597, %580, %cst_274 {dimension_numbers = #tpu.dot_dimension_numbers<[1], [0], [0], [1], [0, 0, 1, 1], [], []>} : vector<8x8xf32>, vector<8x8xf32>, vector<8x8xf32> -> vector<8x8xf32>
    %599 = vector.extract_strided_slice %545 {offsets = [8, 0], sizes = [8, 32], strides = [1, 1]} : vector<32x32xf32> to vector<8x32xf32>
    %cst_275 = arith.constant dense<0.000000e+00> : vector<8x32xf32>
    %600 = tpu.matmul %598, %599, %cst_275 {dimension_numbers = #tpu.dot_dimension_numbers<[1], [0], [0], [1], [0, 0, 1, 1], [], []>} : vector<8x8xf32>, vector<8x32xf32>, vector<8x32xf32> -> vector<8x32xf32>
    %601 = arith.addf %577, %600 : vector<8x32xf32>
    %602 = vector.extract_strided_slice %534 {offsets = [0, 16], sizes = [8, 8], strides = [1, 1]} : vector<8x32xf32> to vector<8x8xf32>
    %603 = vector.extract_strided_slice %542 {offsets = [0, 16], sizes = [8, 8], strides = [1, 1]} : vector<8x32xf32> to vector<8x8xf32>
    %604 = vector.extract_strided_slice %543 {offsets = [0, 16], sizes = [8, 8], strides = [1, 1]} : vector<8x32xf32> to vector<8x8xf32>
    %cst_276 = arith.constant dense<0.000000e+00> : vector<8x8xf32>
    %605 = tpu.matmul %602, %603, %cst_276 {dimension_numbers = #tpu.dot_dimension_numbers<[1], [1], [0], [0], [0, 0, 1, 0], [], []>} : vector<8x8xf32>, vector<8x8xf32>, vector<8x8xf32> -> vector<8x8xf32>
    %cst_277 = arith.constant 0.353553385 : f32
    %606 = vector.broadcast %cst_277 : f32 to vector<8x8xf32>
    %607 = arith.mulf %605, %606 : vector<8x8xf32>
    %cst_278 = arith.constant 5.000000e-01 : f32
    %608 = vector.broadcast %cst_278 : f32 to vector<8x8xf32>
    %609 = arith.cmpf ogt, %13, %608 : vector<8x8xf32>
    %cst_279 = arith.constant -1.000000e+09 : f32
    %610 = vector.broadcast %cst_279 : f32 to vector<8x8xf32>
    %611 = arith.select %609, %610, %607 : vector<8x8xi1>, vector<8x8xf32>
    %cst_280 = arith.constant dense<0xFF800000> : vector<8xf32>
    %612 = vector.multi_reduction <maximumf>, %611, %cst_280 [1] : vector<8x8xf32> to vector<8xf32>
    %613 = vector.shape_cast %612 : vector<8xf32> to vector<8x1xf32>
    %614 = vector.broadcast %613 : vector<8x1xf32> to vector<8x8xf32>
    %615 = arith.subf %611, %614 : vector<8x8xf32>
    %616 = math.exp %615 : vector<8x8xf32>
    %cst_281 = arith.constant dense<0.000000e+00> : vector<8xf32>
    %617 = vector.multi_reduction <add>, %616, %cst_281 [1] : vector<8x8xf32> to vector<8xf32>
    %618 = vector.shape_cast %617 : vector<8xf32> to vector<8x1xf32>
    %619 = tpu.reciprocal %618 {approx = true} : vector<8x1xf32> -> vector<8x1xf32>
    %620 = vector.broadcast %619 : vector<8x1xf32> to vector<8x8xf32>
    %621 = arith.mulf %616, %620 : vector<8x8xf32>
    %cst_282 = arith.constant dense<0.000000e+00> : vector<8x8xf32>
    %622 = tpu.matmul %621, %604, %cst_282 {dimension_numbers = #tpu.dot_dimension_numbers<[1], [0], [0], [1], [0, 0, 1, 1], [], []>} : vector<8x8xf32>, vector<8x8xf32>, vector<8x8xf32> -> vector<8x8xf32>
    %623 = vector.extract_strided_slice %545 {offsets = [16, 0], sizes = [8, 32], strides = [1, 1]} : vector<32x32xf32> to vector<8x32xf32>
    %cst_283 = arith.constant dense<0.000000e+00> : vector<8x32xf32>
    %624 = tpu.matmul %622, %623, %cst_283 {dimension_numbers = #tpu.dot_dimension_numbers<[1], [0], [0], [1], [0, 0, 1, 1], [], []>} : vector<8x8xf32>, vector<8x32xf32>, vector<8x32xf32> -> vector<8x32xf32>
    %625 = arith.addf %601, %624 : vector<8x32xf32>
    %626 = vector.extract_strided_slice %534 {offsets = [0, 24], sizes = [8, 8], strides = [1, 1]} : vector<8x32xf32> to vector<8x8xf32>
    %627 = vector.extract_strided_slice %542 {offsets = [0, 24], sizes = [8, 8], strides = [1, 1]} : vector<8x32xf32> to vector<8x8xf32>
    %628 = vector.extract_strided_slice %543 {offsets = [0, 24], sizes = [8, 8], strides = [1, 1]} : vector<8x32xf32> to vector<8x8xf32>
    %cst_284 = arith.constant dense<0.000000e+00> : vector<8x8xf32>
    %629 = tpu.matmul %626, %627, %cst_284 {dimension_numbers = #tpu.dot_dimension_numbers<[1], [1], [0], [0], [0, 0, 1, 0], [], []>} : vector<8x8xf32>, vector<8x8xf32>, vector<8x8xf32> -> vector<8x8xf32>
    %cst_285 = arith.constant 0.353553385 : f32
    %630 = vector.broadcast %cst_285 : f32 to vector<8x8xf32>
    %631 = arith.mulf %629, %630 : vector<8x8xf32>
    %cst_286 = arith.constant 5.000000e-01 : f32
    %632 = vector.broadcast %cst_286 : f32 to vector<8x8xf32>
    %633 = arith.cmpf ogt, %13, %632 : vector<8x8xf32>
    %cst_287 = arith.constant -1.000000e+09 : f32
    %634 = vector.broadcast %cst_287 : f32 to vector<8x8xf32>
    %635 = arith.select %633, %634, %631 : vector<8x8xi1>, vector<8x8xf32>
    %cst_288 = arith.constant dense<0xFF800000> : vector<8xf32>
    %636 = vector.multi_reduction <maximumf>, %635, %cst_288 [1] : vector<8x8xf32> to vector<8xf32>
    %637 = vector.shape_cast %636 : vector<8xf32> to vector<8x1xf32>
    %638 = vector.broadcast %637 : vector<8x1xf32> to vector<8x8xf32>
    %639 = arith.subf %635, %638 : vector<8x8xf32>
    %640 = math.exp %639 : vector<8x8xf32>
    %cst_289 = arith.constant dense<0.000000e+00> : vector<8xf32>
    %641 = vector.multi_reduction <add>, %640, %cst_289 [1] : vector<8x8xf32> to vector<8xf32>
    %642 = vector.shape_cast %641 : vector<8xf32> to vector<8x1xf32>
    %643 = tpu.reciprocal %642 {approx = true} : vector<8x1xf32> -> vector<8x1xf32>
    %644 = vector.broadcast %643 : vector<8x1xf32> to vector<8x8xf32>
    %645 = arith.mulf %640, %644 : vector<8x8xf32>
    %cst_290 = arith.constant dense<0.000000e+00> : vector<8x8xf32>
    %646 = tpu.matmul %645, %628, %cst_290 {dimension_numbers = #tpu.dot_dimension_numbers<[1], [0], [0], [1], [0, 0, 1, 1], [], []>} : vector<8x8xf32>, vector<8x8xf32>, vector<8x8xf32> -> vector<8x8xf32>
    %647 = vector.extract_strided_slice %545 {offsets = [24, 0], sizes = [8, 32], strides = [1, 1]} : vector<32x32xf32> to vector<8x32xf32>
    %cst_291 = arith.constant dense<0.000000e+00> : vector<8x32xf32>
    %648 = tpu.matmul %646, %647, %cst_291 {dimension_numbers = #tpu.dot_dimension_numbers<[1], [0], [0], [1], [0, 0, 1, 1], [], []>} : vector<8x8xf32>, vector<8x32xf32>, vector<8x32xf32> -> vector<8x32xf32>
    %649 = arith.addf %625, %648 : vector<8x32xf32>
    %cst_292 = arith.constant dense<0.000000e+00> : vector<8xf32>
    %650 = vector.multi_reduction <add>, %649, %cst_292 [1] : vector<8x32xf32> to vector<8xf32>
    %651 = vector.shape_cast %650 : vector<8xf32> to vector<8x1xf32>
    %cst_293 = arith.constant 3.200000e+01 : f32
    %652 = vector.broadcast %cst_293 : f32 to vector<8x1xf32>
    %653 = arith.divf %651, %652 : vector<8x1xf32>
    %654 = vector.broadcast %653 : vector<8x1xf32> to vector<8x32xf32>
    %655 = arith.subf %649, %654 : vector<8x32xf32>
    %656 = arith.mulf %655, %655 : vector<8x32xf32>
    %cst_294 = arith.constant dense<0.000000e+00> : vector<8xf32>
    %657 = vector.multi_reduction <add>, %656, %cst_294 [1] : vector<8x32xf32> to vector<8xf32>
    %658 = vector.shape_cast %657 : vector<8xf32> to vector<8x1xf32>
    %cst_295 = arith.constant 3.200000e+01 : f32
    %659 = vector.broadcast %cst_295 : f32 to vector<8x1xf32>
    %660 = arith.divf %658, %659 : vector<8x1xf32>
    %661 = vector.broadcast %653 : vector<8x1xf32> to vector<8x32xf32>
    %662 = arith.subf %649, %661 : vector<8x32xf32>
    %cst_296 = arith.constant 9.99999974E-6 : f32
    %663 = vector.broadcast %cst_296 : f32 to vector<8x1xf32>
    %664 = arith.addf %660, %663 : vector<8x1xf32>
    %665 = math.rsqrt %664 : vector<8x1xf32>
    %666 = vector.broadcast %665 : vector<8x1xf32> to vector<8x32xf32>
    %667 = arith.mulf %662, %666 : vector<8x32xf32>
    %668 = vector.broadcast %549 : vector<1x32xf32> to vector<8x32xf32>
    %669 = arith.mulf %667, %668 : vector<8x32xf32>
    %670 = vector.broadcast %551 : vector<1x32xf32> to vector<8x32xf32>
    %671 = arith.addf %669, %670 : vector<8x32xf32>
    %672 = tpu.concatenate %573, %597, %621, %645 in 1 : vector<8x8xf32>, vector<8x8xf32>, vector<8x8xf32>, vector<8x8xf32> -> vector<8x32xf32>
    %c0_297 = arith.constant 0 : index
    %c0_298 = arith.constant 0 : index
    %c0_299 = arith.constant 0 : index
    %673 = vector.load %arg40[%c0_297, %c0_298, %c0_299] : memref<2x8x32xf32, #tpu.memory_space<vmem>>, vector<1x8x32xf32>
    %674 = vector.shape_cast %673 : vector<1x8x32xf32> to vector<8x32xf32>
    %675 = vector.shape_cast %672 : vector<8x32xf32> to vector<1x8x32xf32>
    tpu.vector_store %arg40[%c0_297, %c0_298, %c0_299], %675 {strides = array<i32>} : memref<2x8x32xf32, #tpu.memory_space<vmem>>, vector<1x8x32xf32>,
    %c0_300 = arith.constant 0 : index
    %c0_301 = arith.constant 0 : index
    %c0_302 = arith.constant 0 : index
    %676 = vector.load %arg30[%c0_300, %c0_301, %c0_302] : memref<2x32x64xf32, #tpu.memory_space<vmem>>, vector<1x32x64xf32>
    %677 = vector.shape_cast %676 : vector<1x32x64xf32> to vector<32x64xf32>
    %c0_303 = arith.constant 0 : index
    %c0_304 = arith.constant 0 : index
    %c0_305 = arith.constant 0 : index
    %678 = vector.load %arg31[%c0_303, %c0_304, %c0_305] : memref<2x1x64xf32, #tpu.memory_space<vmem>>, vector<1x1x64xf32>
    %679 = vector.shape_cast %678 : vector<1x1x64xf32> to vector<1x64xf32>
    %c0_306 = arith.constant 0 : index
    %c0_307 = arith.constant 0 : index
    %c0_308 = arith.constant 0 : index
    %680 = vector.load %arg32[%c0_306, %c0_307, %c0_308] : memref<2x64x32xf32, #tpu.memory_space<vmem>>, vector<1x64x32xf32>
    %681 = vector.shape_cast %680 : vector<1x64x32xf32> to vector<64x32xf32>
    %c0_309 = arith.constant 0 : index
    %c0_310 = arith.constant 0 : index
    %c0_311 = arith.constant 0 : index
    %682 = vector.load %arg33[%c0_309, %c0_310, %c0_311] : memref<2x1x32xf32, #tpu.memory_space<vmem>>, vector<1x1x32xf32>
    %683 = vector.shape_cast %682 : vector<1x1x32xf32> to vector<1x32xf32>
    %c0_312 = arith.constant 0 : index
    %c0_313 = arith.constant 0 : index
    %c0_314 = arith.constant 0 : index
    %684 = vector.load %arg34[%c0_312, %c0_313, %c0_314] : memref<2x1x32xf32, #tpu.memory_space<vmem>>, vector<1x1x32xf32>
    %685 = vector.shape_cast %684 : vector<1x1x32xf32> to vector<1x32xf32>
    %c0_315 = arith.constant 0 : index
    %c0_316 = arith.constant 0 : index
    %c0_317 = arith.constant 0 : index
    %686 = vector.load %arg35[%c0_315, %c0_316, %c0_317] : memref<2x1x32xf32, #tpu.memory_space<vmem>>, vector<1x1x32xf32>
    %687 = vector.shape_cast %686 : vector<1x1x32xf32> to vector<1x32xf32>
    %cst_318 = arith.constant dense<0.000000e+00> : vector<8x64xf32>
    %688 = tpu.matmul %671, %677, %cst_318 {dimension_numbers = #tpu.dot_dimension_numbers<[1], [0], [0], [1], [0, 0, 1, 1], [], []>} : vector<8x32xf32>, vector<32x64xf32>, vector<8x64xf32> -> vector<8x64xf32>
    %689 = vector.broadcast %679 : vector<1x64xf32> to vector<8x64xf32>
    %690 = arith.addf %688, %689 : vector<8x64xf32>
    %cst_319 = arith.constant 0.000000e+00 : f32
    %691 = vector.broadcast %cst_319 : f32 to vector<8x64xf32>
    %692 = arith.maximumf %690, %691 : vector<8x64xf32>
    %cst_320 = arith.constant dense<0.000000e+00> : vector<8x32xf32>
    %693 = tpu.matmul %692, %681, %cst_320 {dimension_numbers = #tpu.dot_dimension_numbers<[1], [0], [0], [1], [0, 0, 1, 1], [], []>} : vector<8x64xf32>, vector<64x32xf32>, vector<8x32xf32> -> vector<8x32xf32>
    %694 = vector.broadcast %683 : vector<1x32xf32> to vector<8x32xf32>
    %695 = arith.addf %693, %694 : vector<8x32xf32>
    %696 = arith.addf %695, %671 : vector<8x32xf32>
    %cst_321 = arith.constant dense<0.000000e+00> : vector<8xf32>
    %697 = vector.multi_reduction <add>, %696, %cst_321 [1] : vector<8x32xf32> to vector<8xf32>
    %698 = vector.shape_cast %697 : vector<8xf32> to vector<8x1xf32>
    %cst_322 = arith.constant 3.200000e+01 : f32
    %699 = vector.broadcast %cst_322 : f32 to vector<8x1xf32>
    %700 = arith.divf %698, %699 : vector<8x1xf32>
    %701 = vector.broadcast %700 : vector<8x1xf32> to vector<8x32xf32>
    %702 = arith.subf %696, %701 : vector<8x32xf32>
    %703 = arith.mulf %702, %702 : vector<8x32xf32>
    %cst_323 = arith.constant dense<0.000000e+00> : vector<8xf32>
    %704 = vector.multi_reduction <add>, %703, %cst_323 [1] : vector<8x32xf32> to vector<8xf32>
    %705 = vector.shape_cast %704 : vector<8xf32> to vector<8x1xf32>
    %cst_324 = arith.constant 3.200000e+01 : f32
    %706 = vector.broadcast %cst_324 : f32 to vector<8x1xf32>
    %707 = arith.divf %705, %706 : vector<8x1xf32>
    %708 = vector.broadcast %700 : vector<8x1xf32> to vector<8x32xf32>
    %709 = arith.subf %696, %708 : vector<8x32xf32>
    %cst_325 = arith.constant 9.99999974E-6 : f32
    %710 = vector.broadcast %cst_325 : f32 to vector<8x1xf32>
    %711 = arith.addf %707, %710 : vector<8x1xf32>
    %712 = math.rsqrt %711 : vector<8x1xf32>
    %713 = vector.broadcast %712 : vector<8x1xf32> to vector<8x32xf32>
    %714 = arith.mulf %709, %713 : vector<8x32xf32>
    %715 = vector.broadcast %685 : vector<1x32xf32> to vector<8x32xf32>
    %716 = arith.mulf %714, %715 : vector<8x32xf32>
    %717 = vector.broadcast %687 : vector<1x32xf32> to vector<8x32xf32>
    %718 = arith.addf %716, %717 : vector<8x32xf32>
    %c1_326 = arith.constant 1 : index
    %c0_327 = arith.constant 0 : index
    %c0_328 = arith.constant 0 : index
    %719 = vector.load %arg16[%c1_326, %c0_327, %c0_328] : memref<2x32x96xf32, #tpu.memory_space<vmem>>, vector<1x32x96xf32>
    %720 = vector.shape_cast %719 : vector<1x32x96xf32> to vector<32x96xf32>
    %cst_329 = arith.constant dense<0.000000e+00> : vector<8x96xf32>
    %721 = tpu.matmul %718, %720, %cst_329 {dimension_numbers = #tpu.dot_dimension_numbers<[1], [0], [0], [1], [0, 0, 1, 1], [], []>} : vector<8x32xf32>, vector<32x96xf32>, vector<8x96xf32> -> vector<8x96xf32>
    %c1_330 = arith.constant 1 : index
    %c0_331 = arith.constant 0 : index
    %c0_332 = arith.constant 0 : index
    %722 = vector.load %arg17[%c1_330, %c0_331, %c0_332] : memref<2x1x96xf32, #tpu.memory_space<vmem>>, vector<1x1x96xf32>
    %723 = vector.shape_cast %722 : vector<1x1x96xf32> to vector<1x96xf32>
    %724 = vector.broadcast %723 : vector<1x96xf32> to vector<8x96xf32>
    %725 = arith.addf %721, %724 : vector<8x96xf32>
    %726 = vector.extract_strided_slice %725 {offsets = [0, 0], sizes = [8, 32], strides = [1, 1]} : vector<8x96xf32> to vector<8x32xf32>
    %727 = vector.extract_strided_slice %725 {offsets = [0, 32], sizes = [8, 32], strides = [1, 1]} : vector<8x96xf32> to vector<8x32xf32>
    %728 = vector.extract_strided_slice %725 {offsets = [0, 64], sizes = [8, 32], strides = [1, 1]} : vector<8x96xf32> to vector<8x32xf32>
    %c1_333 = arith.constant 1 : index
    %c0_334 = arith.constant 0 : index
    %c0_335 = arith.constant 0 : index
    %729 = vector.load %arg18[%c1_333, %c0_334, %c0_335] : memref<2x32x32xf32, #tpu.memory_space<vmem>>, vector<1x32x32xf32>
    %730 = vector.shape_cast %729 : vector<1x32x32xf32> to vector<32x32xf32>
    %c1_336 = arith.constant 1 : index
    %c0_337 = arith.constant 0 : index
    %c0_338 = arith.constant 0 : index
    %731 = vector.load %arg19[%c1_336, %c0_337, %c0_338] : memref<2x1x32xf32, #tpu.memory_space<vmem>>, vector<1x1x32xf32>
    %732 = vector.shape_cast %731 : vector<1x1x32xf32> to vector<1x32xf32>
    %c1_339 = arith.constant 1 : index
    %c0_340 = arith.constant 0 : index
    %c0_341 = arith.constant 0 : index
    %733 = vector.load %arg20[%c1_339, %c0_340, %c0_341] : memref<2x1x32xf32, #tpu.memory_space<vmem>>, vector<1x1x32xf32>
    %734 = vector.shape_cast %733 : vector<1x1x32xf32> to vector<1x32xf32>
    %c1_342 = arith.constant 1 : index
    %c0_343 = arith.constant 0 : index
    %c0_344 = arith.constant 0 : index
    %735 = vector.load %arg21[%c1_342, %c0_343, %c0_344] : memref<2x1x32xf32, #tpu.memory_space<vmem>>, vector<1x1x32xf32>
    %736 = vector.shape_cast %735 : vector<1x1x32xf32> to vector<1x32xf32>
    %737 = vector.broadcast %732 : vector<1x32xf32> to vector<8x32xf32>
    %738 = arith.addf %718, %737 : vector<8x32xf32>
    %739 = vector.extract_strided_slice %726 {offsets = [0, 0], sizes = [8, 8], strides = [1, 1]} : vector<8x32xf32> to vector<8x8xf32>
    %740 = vector.extract_strided_slice %727 {offsets = [0, 0], sizes = [8, 8], strides = [1, 1]} : vector<8x32xf32> to vector<8x8xf32>
    %741 = vector.extract_strided_slice %728 {offsets = [0, 0], sizes = [8, 8], strides = [1, 1]} : vector<8x32xf32> to vector<8x8xf32>
    %cst_345 = arith.constant dense<0.000000e+00> : vector<8x8xf32>
    %742 = tpu.matmul %739, %740, %cst_345 {dimension_numbers = #tpu.dot_dimension_numbers<[1], [1], [0], [0], [0, 0, 1, 0], [], []>} : vector<8x8xf32>, vector<8x8xf32>, vector<8x8xf32> -> vector<8x8xf32>
    %cst_346 = arith.constant 0.353553385 : f32
    %743 = vector.broadcast %cst_346 : f32 to vector<8x8xf32>
    %744 = arith.mulf %742, %743 : vector<8x8xf32>
    %cst_347 = arith.constant 5.000000e-01 : f32
    %745 = vector.broadcast %cst_347 : f32 to vector<8x8xf32>
    %746 = arith.cmpf ogt, %11, %745 : vector<8x8xf32>
    %cst_348 = arith.constant -1.000000e+09 : f32
    %747 = vector.broadcast %cst_348 : f32 to vector<8x8xf32>
    %748 = arith.select %746, %747, %744 : vector<8x8xi1>, vector<8x8xf32>
    %cst_349 = arith.constant dense<0xFF800000> : vector<8xf32>
    %749 = vector.multi_reduction <maximumf>, %748, %cst_349 [1] : vector<8x8xf32> to vector<8xf32>
    %750 = vector.shape_cast %749 : vector<8xf32> to vector<8x1xf32>
    %751 = vector.broadcast %750 : vector<8x1xf32> to vector<8x8xf32>
    %752 = arith.subf %748, %751 : vector<8x8xf32>
    %753 = math.exp %752 : vector<8x8xf32>
    %cst_350 = arith.constant dense<0.000000e+00> : vector<8xf32>
    %754 = vector.multi_reduction <add>, %753, %cst_350 [1] : vector<8x8xf32> to vector<8xf32>
    %755 = vector.shape_cast %754 : vector<8xf32> to vector<8x1xf32>
    %756 = tpu.reciprocal %755 {approx = true} : vector<8x1xf32> -> vector<8x1xf32>
    %757 = vector.broadcast %756 : vector<8x1xf32> to vector<8x8xf32>
    %758 = arith.mulf %753, %757 : vector<8x8xf32>
    %cst_351 = arith.constant dense<0.000000e+00> : vector<8x8xf32>
    %759 = tpu.matmul %758, %741, %cst_351 {dimension_numbers = #tpu.dot_dimension_numbers<[1], [0], [0], [1], [0, 0, 1, 1], [], []>} : vector<8x8xf32>, vector<8x8xf32>, vector<8x8xf32> -> vector<8x8xf32>
    %760 = vector.extract_strided_slice %730 {offsets = [0, 0], sizes = [8, 32], strides = [1, 1]} : vector<32x32xf32> to vector<8x32xf32>
    %cst_352 = arith.constant dense<0.000000e+00> : vector<8x32xf32>
    %761 = tpu.matmul %759, %760, %cst_352 {dimension_numbers = #tpu.dot_dimension_numbers<[1], [0], [0], [1], [0, 0, 1, 1], [], []>} : vector<8x8xf32>, vector<8x32xf32>, vector<8x32xf32> -> vector<8x32xf32>
    %762 = arith.addf %738, %761 : vector<8x32xf32>
    %763 = vector.extract_strided_slice %726 {offsets = [0, 8], sizes = [8, 8], strides = [1, 1]} : vector<8x32xf32> to vector<8x8xf32>
    %764 = vector.extract_strided_slice %727 {offsets = [0, 8], sizes = [8, 8], strides = [1, 1]} : vector<8x32xf32> to vector<8x8xf32>
    %765 = vector.extract_strided_slice %728 {offsets = [0, 8], sizes = [8, 8], strides = [1, 1]} : vector<8x32xf32> to vector<8x8xf32>
    %cst_353 = arith.constant dense<0.000000e+00> : vector<8x8xf32>
    %766 = tpu.matmul %763, %764, %cst_353 {dimension_numbers = #tpu.dot_dimension_numbers<[1], [1], [0], [0], [0, 0, 1, 0], [], []>} : vector<8x8xf32>, vector<8x8xf32>, vector<8x8xf32> -> vector<8x8xf32>
    %cst_354 = arith.constant 0.353553385 : f32
    %767 = vector.broadcast %cst_354 : f32 to vector<8x8xf32>
    %768 = arith.mulf %766, %767 : vector<8x8xf32>
    %cst_355 = arith.constant 5.000000e-01 : f32
    %769 = vector.broadcast %cst_355 : f32 to vector<8x8xf32>
    %770 = arith.cmpf ogt, %11, %769 : vector<8x8xf32>
    %cst_356 = arith.constant -1.000000e+09 : f32
    %771 = vector.broadcast %cst_356 : f32 to vector<8x8xf32>
    %772 = arith.select %770, %771, %768 : vector<8x8xi1>, vector<8x8xf32>
    %cst_357 = arith.constant dense<0xFF800000> : vector<8xf32>
    %773 = vector.multi_reduction <maximumf>, %772, %cst_357 [1] : vector<8x8xf32> to vector<8xf32>
    %774 = vector.shape_cast %773 : vector<8xf32> to vector<8x1xf32>
    %775 = vector.broadcast %774 : vector<8x1xf32> to vector<8x8xf32>
    %776 = arith.subf %772, %775 : vector<8x8xf32>
    %777 = math.exp %776 : vector<8x8xf32>
    %cst_358 = arith.constant dense<0.000000e+00> : vector<8xf32>
    %778 = vector.multi_reduction <add>, %777, %cst_358 [1] : vector<8x8xf32> to vector<8xf32>
    %779 = vector.shape_cast %778 : vector<8xf32> to vector<8x1xf32>
    %780 = tpu.reciprocal %779 {approx = true} : vector<8x1xf32> -> vector<8x1xf32>
    %781 = vector.broadcast %780 : vector<8x1xf32> to vector<8x8xf32>
    %782 = arith.mulf %777, %781 : vector<8x8xf32>
    %cst_359 = arith.constant dense<0.000000e+00> : vector<8x8xf32>
    %783 = tpu.matmul %782, %765, %cst_359 {dimension_numbers = #tpu.dot_dimension_numbers<[1], [0], [0], [1], [0, 0, 1, 1], [], []>} : vector<8x8xf32>, vector<8x8xf32>, vector<8x8xf32> -> vector<8x8xf32>
    %784 = vector.extract_strided_slice %730 {offsets = [8, 0], sizes = [8, 32], strides = [1, 1]} : vector<32x32xf32> to vector<8x32xf32>
    %cst_360 = arith.constant dense<0.000000e+00> : vector<8x32xf32>
    %785 = tpu.matmul %783, %784, %cst_360 {dimension_numbers = #tpu.dot_dimension_numbers<[1], [0], [0], [1], [0, 0, 1, 1], [], []>} : vector<8x8xf32>, vector<8x32xf32>, vector<8x32xf32> -> vector<8x32xf32>
    %786 = arith.addf %762, %785 : vector<8x32xf32>
    %787 = vector.extract_strided_slice %726 {offsets = [0, 16], sizes = [8, 8], strides = [1, 1]} : vector<8x32xf32> to vector<8x8xf32>
    %788 = vector.extract_strided_slice %727 {offsets = [0, 16], sizes = [8, 8], strides = [1, 1]} : vector<8x32xf32> to vector<8x8xf32>
    %789 = vector.extract_strided_slice %728 {offsets = [0, 16], sizes = [8, 8], strides = [1, 1]} : vector<8x32xf32> to vector<8x8xf32>
    %cst_361 = arith.constant dense<0.000000e+00> : vector<8x8xf32>
    %790 = tpu.matmul %787, %788, %cst_361 {dimension_numbers = #tpu.dot_dimension_numbers<[1], [1], [0], [0], [0, 0, 1, 0], [], []>} : vector<8x8xf32>, vector<8x8xf32>, vector<8x8xf32> -> vector<8x8xf32>
    %cst_362 = arith.constant 0.353553385 : f32
    %791 = vector.broadcast %cst_362 : f32 to vector<8x8xf32>
    %792 = arith.mulf %790, %791 : vector<8x8xf32>
    %cst_363 = arith.constant 5.000000e-01 : f32
    %793 = vector.broadcast %cst_363 : f32 to vector<8x8xf32>
    %794 = arith.cmpf ogt, %11, %793 : vector<8x8xf32>
    %cst_364 = arith.constant -1.000000e+09 : f32
    %795 = vector.broadcast %cst_364 : f32 to vector<8x8xf32>
    %796 = arith.select %794, %795, %792 : vector<8x8xi1>, vector<8x8xf32>
    %cst_365 = arith.constant dense<0xFF800000> : vector<8xf32>
    %797 = vector.multi_reduction <maximumf>, %796, %cst_365 [1] : vector<8x8xf32> to vector<8xf32>
    %798 = vector.shape_cast %797 : vector<8xf32> to vector<8x1xf32>
    %799 = vector.broadcast %798 : vector<8x1xf32> to vector<8x8xf32>
    %800 = arith.subf %796, %799 : vector<8x8xf32>
    %801 = math.exp %800 : vector<8x8xf32>
    %cst_366 = arith.constant dense<0.000000e+00> : vector<8xf32>
    %802 = vector.multi_reduction <add>, %801, %cst_366 [1] : vector<8x8xf32> to vector<8xf32>
    %803 = vector.shape_cast %802 : vector<8xf32> to vector<8x1xf32>
    %804 = tpu.reciprocal %803 {approx = true} : vector<8x1xf32> -> vector<8x1xf32>
    %805 = vector.broadcast %804 : vector<8x1xf32> to vector<8x8xf32>
    %806 = arith.mulf %801, %805 : vector<8x8xf32>
    %cst_367 = arith.constant dense<0.000000e+00> : vector<8x8xf32>
    %807 = tpu.matmul %806, %789, %cst_367 {dimension_numbers = #tpu.dot_dimension_numbers<[1], [0], [0], [1], [0, 0, 1, 1], [], []>} : vector<8x8xf32>, vector<8x8xf32>, vector<8x8xf32> -> vector<8x8xf32>
    %808 = vector.extract_strided_slice %730 {offsets = [16, 0], sizes = [8, 32], strides = [1, 1]} : vector<32x32xf32> to vector<8x32xf32>
    %cst_368 = arith.constant dense<0.000000e+00> : vector<8x32xf32>
    %809 = tpu.matmul %807, %808, %cst_368 {dimension_numbers = #tpu.dot_dimension_numbers<[1], [0], [0], [1], [0, 0, 1, 1], [], []>} : vector<8x8xf32>, vector<8x32xf32>, vector<8x32xf32> -> vector<8x32xf32>
    %810 = arith.addf %786, %809 : vector<8x32xf32>
    %811 = vector.extract_strided_slice %726 {offsets = [0, 24], sizes = [8, 8], strides = [1, 1]} : vector<8x32xf32> to vector<8x8xf32>
    %812 = vector.extract_strided_slice %727 {offsets = [0, 24], sizes = [8, 8], strides = [1, 1]} : vector<8x32xf32> to vector<8x8xf32>
    %813 = vector.extract_strided_slice %728 {offsets = [0, 24], sizes = [8, 8], strides = [1, 1]} : vector<8x32xf32> to vector<8x8xf32>
    %cst_369 = arith.constant dense<0.000000e+00> : vector<8x8xf32>
    %814 = tpu.matmul %811, %812, %cst_369 {dimension_numbers = #tpu.dot_dimension_numbers<[1], [1], [0], [0], [0, 0, 1, 0], [], []>} : vector<8x8xf32>, vector<8x8xf32>, vector<8x8xf32> -> vector<8x8xf32>
    %cst_370 = arith.constant 0.353553385 : f32
    %815 = vector.broadcast %cst_370 : f32 to vector<8x8xf32>
    %816 = arith.mulf %814, %815 : vector<8x8xf32>
    %cst_371 = arith.constant 5.000000e-01 : f32
    %817 = vector.broadcast %cst_371 : f32 to vector<8x8xf32>
    %818 = arith.cmpf ogt, %11, %817 : vector<8x8xf32>
    %cst_372 = arith.constant -1.000000e+09 : f32
    %819 = vector.broadcast %cst_372 : f32 to vector<8x8xf32>
    %820 = arith.select %818, %819, %816 : vector<8x8xi1>, vector<8x8xf32>
    %cst_373 = arith.constant dense<0xFF800000> : vector<8xf32>
    %821 = vector.multi_reduction <maximumf>, %820, %cst_373 [1] : vector<8x8xf32> to vector<8xf32>
    %822 = vector.shape_cast %821 : vector<8xf32> to vector<8x1xf32>
    %823 = vector.broadcast %822 : vector<8x1xf32> to vector<8x8xf32>
    %824 = arith.subf %820, %823 : vector<8x8xf32>
    %825 = math.exp %824 : vector<8x8xf32>
    %cst_374 = arith.constant dense<0.000000e+00> : vector<8xf32>
    %826 = vector.multi_reduction <add>, %825, %cst_374 [1] : vector<8x8xf32> to vector<8xf32>
    %827 = vector.shape_cast %826 : vector<8xf32> to vector<8x1xf32>
    %828 = tpu.reciprocal %827 {approx = true} : vector<8x1xf32> -> vector<8x1xf32>
    %829 = vector.broadcast %828 : vector<8x1xf32> to vector<8x8xf32>
    %830 = arith.mulf %825, %829 : vector<8x8xf32>
    %cst_375 = arith.constant dense<0.000000e+00> : vector<8x8xf32>
    %831 = tpu.matmul %830, %813, %cst_375 {dimension_numbers = #tpu.dot_dimension_numbers<[1], [0], [0], [1], [0, 0, 1, 1], [], []>} : vector<8x8xf32>, vector<8x8xf32>, vector<8x8xf32> -> vector<8x8xf32>
    %832 = vector.extract_strided_slice %730 {offsets = [24, 0], sizes = [8, 32], strides = [1, 1]} : vector<32x32xf32> to vector<8x32xf32>
    %cst_376 = arith.constant dense<0.000000e+00> : vector<8x32xf32>
    %833 = tpu.matmul %831, %832, %cst_376 {dimension_numbers = #tpu.dot_dimension_numbers<[1], [0], [0], [1], [0, 0, 1, 1], [], []>} : vector<8x8xf32>, vector<8x32xf32>, vector<8x32xf32> -> vector<8x32xf32>
    %834 = arith.addf %810, %833 : vector<8x32xf32>
    %cst_377 = arith.constant dense<0.000000e+00> : vector<8xf32>
    %835 = vector.multi_reduction <add>, %834, %cst_377 [1] : vector<8x32xf32> to vector<8xf32>
    %836 = vector.shape_cast %835 : vector<8xf32> to vector<8x1xf32>
    %cst_378 = arith.constant 3.200000e+01 : f32
    %837 = vector.broadcast %cst_378 : f32 to vector<8x1xf32>
    %838 = arith.divf %836, %837 : vector<8x1xf32>
    %839 = vector.broadcast %838 : vector<8x1xf32> to vector<8x32xf32>
    %840 = arith.subf %834, %839 : vector<8x32xf32>
    %841 = arith.mulf %840, %840 : vector<8x32xf32>
    %cst_379 = arith.constant dense<0.000000e+00> : vector<8xf32>
    %842 = vector.multi_reduction <add>, %841, %cst_379 [1] : vector<8x32xf32> to vector<8xf32>
    %843 = vector.shape_cast %842 : vector<8xf32> to vector<8x1xf32>
    %cst_380 = arith.constant 3.200000e+01 : f32
    %844 = vector.broadcast %cst_380 : f32 to vector<8x1xf32>
    %845 = arith.divf %843, %844 : vector<8x1xf32>
    %846 = vector.broadcast %838 : vector<8x1xf32> to vector<8x32xf32>
    %847 = arith.subf %834, %846 : vector<8x32xf32>
    %cst_381 = arith.constant 9.99999974E-6 : f32
    %848 = vector.broadcast %cst_381 : f32 to vector<8x1xf32>
    %849 = arith.addf %845, %848 : vector<8x1xf32>
    %850 = math.rsqrt %849 : vector<8x1xf32>
    %851 = vector.broadcast %850 : vector<8x1xf32> to vector<8x32xf32>
    %852 = arith.mulf %847, %851 : vector<8x32xf32>
    %853 = vector.broadcast %734 : vector<1x32xf32> to vector<8x32xf32>
    %854 = arith.mulf %852, %853 : vector<8x32xf32>
    %855 = vector.broadcast %736 : vector<1x32xf32> to vector<8x32xf32>
    %856 = arith.addf %854, %855 : vector<8x32xf32>
    %857 = tpu.concatenate %758, %782, %806, %830 in 1 : vector<8x8xf32>, vector<8x8xf32>, vector<8x8xf32>, vector<8x8xf32> -> vector<8x32xf32>
    %c1_382 = arith.constant 1 : index
    %c0_383 = arith.constant 0 : index
    %c0_384 = arith.constant 0 : index
    %858 = vector.load %arg39[%c1_382, %c0_383, %c0_384] : memref<2x8x32xf32, #tpu.memory_space<vmem>>, vector<1x8x32xf32>
    %859 = vector.shape_cast %858 : vector<1x8x32xf32> to vector<8x32xf32>
    %860 = vector.shape_cast %857 : vector<8x32xf32> to vector<1x8x32xf32>
    tpu.vector_store %arg39[%c1_382, %c0_383, %c0_384], %860 {strides = array<i32>} : memref<2x8x32xf32, #tpu.memory_space<vmem>>, vector<1x8x32xf32>,
    %c1_385 = arith.constant 1 : index
    %c0_386 = arith.constant 0 : index
    %c0_387 = arith.constant 0 : index
    %861 = vector.load %arg22[%c1_385, %c0_386, %c0_387] : memref<2x32x32xf32, #tpu.memory_space<vmem>>, vector<1x32x32xf32>
    %862 = vector.shape_cast %861 : vector<1x32x32xf32> to vector<32x32xf32>
    %cst_388 = arith.constant dense<0.000000e+00> : vector<8x32xf32>
    %863 = tpu.matmul %856, %862, %cst_388 {dimension_numbers = #tpu.dot_dimension_numbers<[1], [0], [0], [1], [0, 0, 1, 1], [], []>} : vector<8x32xf32>, vector<32x32xf32>, vector<8x32xf32> -> vector<8x32xf32>
    %c1_389 = arith.constant 1 : index
    %c0_390 = arith.constant 0 : index
    %c0_391 = arith.constant 0 : index
    %864 = vector.load %arg23[%c1_389, %c0_390, %c0_391] : memref<2x1x32xf32, #tpu.memory_space<vmem>>, vector<1x1x32xf32>
    %865 = vector.shape_cast %864 : vector<1x1x32xf32> to vector<1x32xf32>
    %866 = vector.broadcast %865 : vector<1x32xf32> to vector<8x32xf32>
    %867 = arith.addf %863, %866 : vector<8x32xf32>
    %c1_392 = arith.constant 1 : index
    %c0_393 = arith.constant 0 : index
    %c0_394 = arith.constant 0 : index
    %868 = vector.load %arg24[%c1_392, %c0_393, %c0_394] : memref<2x32x64xf32, #tpu.memory_space<vmem>>, vector<1x32x64xf32>
    %869 = vector.shape_cast %868 : vector<1x32x64xf32> to vector<32x64xf32>
    %cst_395 = arith.constant dense<0.000000e+00> : vector<8x64xf32>
    %870 = tpu.matmul %384, %869, %cst_395 {dimension_numbers = #tpu.dot_dimension_numbers<[1], [0], [0], [1], [0, 0, 1, 1], [], []>} : vector<8x32xf32>, vector<32x64xf32>, vector<8x64xf32> -> vector<8x64xf32>
    %c1_396 = arith.constant 1 : index
    %c0_397 = arith.constant 0 : index
    %c0_398 = arith.constant 0 : index
    %871 = vector.load %arg25[%c1_396, %c0_397, %c0_398] : memref<2x1x64xf32, #tpu.memory_space<vmem>>, vector<1x1x64xf32>
    %872 = vector.shape_cast %871 : vector<1x1x64xf32> to vector<1x64xf32>
    %873 = vector.broadcast %872 : vector<1x64xf32> to vector<8x64xf32>
    %874 = arith.addf %870, %873 : vector<8x64xf32>
    %875 = vector.extract_strided_slice %874 {offsets = [0, 0], sizes = [8, 32], strides = [1, 1]} : vector<8x64xf32> to vector<8x32xf32>
    %876 = vector.extract_strided_slice %874 {offsets = [0, 32], sizes = [8, 32], strides = [1, 1]} : vector<8x64xf32> to vector<8x32xf32>
    %c1_399 = arith.constant 1 : index
    %c0_400 = arith.constant 0 : index
    %c0_401 = arith.constant 0 : index
    %877 = vector.load %arg26[%c1_399, %c0_400, %c0_401] : memref<2x32x32xf32, #tpu.memory_space<vmem>>, vector<1x32x32xf32>
    %878 = vector.shape_cast %877 : vector<1x32x32xf32> to vector<32x32xf32>
    %c1_402 = arith.constant 1 : index
    %c0_403 = arith.constant 0 : index
    %c0_404 = arith.constant 0 : index
    %879 = vector.load %arg27[%c1_402, %c0_403, %c0_404] : memref<2x1x32xf32, #tpu.memory_space<vmem>>, vector<1x1x32xf32>
    %880 = vector.shape_cast %879 : vector<1x1x32xf32> to vector<1x32xf32>
    %c1_405 = arith.constant 1 : index
    %c0_406 = arith.constant 0 : index
    %c0_407 = arith.constant 0 : index
    %881 = vector.load %arg28[%c1_405, %c0_406, %c0_407] : memref<2x1x32xf32, #tpu.memory_space<vmem>>, vector<1x1x32xf32>
    %882 = vector.shape_cast %881 : vector<1x1x32xf32> to vector<1x32xf32>
    %c1_408 = arith.constant 1 : index
    %c0_409 = arith.constant 0 : index
    %c0_410 = arith.constant 0 : index
    %883 = vector.load %arg29[%c1_408, %c0_409, %c0_410] : memref<2x1x32xf32, #tpu.memory_space<vmem>>, vector<1x1x32xf32>
    %884 = vector.shape_cast %883 : vector<1x1x32xf32> to vector<1x32xf32>
    %885 = vector.broadcast %880 : vector<1x32xf32> to vector<8x32xf32>
    %886 = arith.addf %856, %885 : vector<8x32xf32>
    %887 = vector.extract_strided_slice %867 {offsets = [0, 0], sizes = [8, 8], strides = [1, 1]} : vector<8x32xf32> to vector<8x8xf32>
    %888 = vector.extract_strided_slice %875 {offsets = [0, 0], sizes = [8, 8], strides = [1, 1]} : vector<8x32xf32> to vector<8x8xf32>
    %889 = vector.extract_strided_slice %876 {offsets = [0, 0], sizes = [8, 8], strides = [1, 1]} : vector<8x32xf32> to vector<8x8xf32>
    %cst_411 = arith.constant dense<0.000000e+00> : vector<8x8xf32>
    %890 = tpu.matmul %887, %888, %cst_411 {dimension_numbers = #tpu.dot_dimension_numbers<[1], [1], [0], [0], [0, 0, 1, 0], [], []>} : vector<8x8xf32>, vector<8x8xf32>, vector<8x8xf32> -> vector<8x8xf32>
    %cst_412 = arith.constant 0.353553385 : f32
    %891 = vector.broadcast %cst_412 : f32 to vector<8x8xf32>
    %892 = arith.mulf %890, %891 : vector<8x8xf32>
    %cst_413 = arith.constant 5.000000e-01 : f32
    %893 = vector.broadcast %cst_413 : f32 to vector<8x8xf32>
    %894 = arith.cmpf ogt, %13, %893 : vector<8x8xf32>
    %cst_414 = arith.constant -1.000000e+09 : f32
    %895 = vector.broadcast %cst_414 : f32 to vector<8x8xf32>
    %896 = arith.select %894, %895, %892 : vector<8x8xi1>, vector<8x8xf32>
    %cst_415 = arith.constant dense<0xFF800000> : vector<8xf32>
    %897 = vector.multi_reduction <maximumf>, %896, %cst_415 [1] : vector<8x8xf32> to vector<8xf32>
    %898 = vector.shape_cast %897 : vector<8xf32> to vector<8x1xf32>
    %899 = vector.broadcast %898 : vector<8x1xf32> to vector<8x8xf32>
    %900 = arith.subf %896, %899 : vector<8x8xf32>
    %901 = math.exp %900 : vector<8x8xf32>
    %cst_416 = arith.constant dense<0.000000e+00> : vector<8xf32>
    %902 = vector.multi_reduction <add>, %901, %cst_416 [1] : vector<8x8xf32> to vector<8xf32>
    %903 = vector.shape_cast %902 : vector<8xf32> to vector<8x1xf32>
    %904 = tpu.reciprocal %903 {approx = true} : vector<8x1xf32> -> vector<8x1xf32>
    %905 = vector.broadcast %904 : vector<8x1xf32> to vector<8x8xf32>
    %906 = arith.mulf %901, %905 : vector<8x8xf32>
    %cst_417 = arith.constant dense<0.000000e+00> : vector<8x8xf32>
    %907 = tpu.matmul %906, %889, %cst_417 {dimension_numbers = #tpu.dot_dimension_numbers<[1], [0], [0], [1], [0, 0, 1, 1], [], []>} : vector<8x8xf32>, vector<8x8xf32>, vector<8x8xf32> -> vector<8x8xf32>
    %908 = vector.extract_strided_slice %878 {offsets = [0, 0], sizes = [8, 32], strides = [1, 1]} : vector<32x32xf32> to vector<8x32xf32>
    %cst_418 = arith.constant dense<0.000000e+00> : vector<8x32xf32>
    %909 = tpu.matmul %907, %908, %cst_418 {dimension_numbers = #tpu.dot_dimension_numbers<[1], [0], [0], [1], [0, 0, 1, 1], [], []>} : vector<8x8xf32>, vector<8x32xf32>, vector<8x32xf32> -> vector<8x32xf32>
    %910 = arith.addf %886, %909 : vector<8x32xf32>
    %911 = vector.extract_strided_slice %867 {offsets = [0, 8], sizes = [8, 8], strides = [1, 1]} : vector<8x32xf32> to vector<8x8xf32>
    %912 = vector.extract_strided_slice %875 {offsets = [0, 8], sizes = [8, 8], strides = [1, 1]} : vector<8x32xf32> to vector<8x8xf32>
    %913 = vector.extract_strided_slice %876 {offsets = [0, 8], sizes = [8, 8], strides = [1, 1]} : vector<8x32xf32> to vector<8x8xf32>
    %cst_419 = arith.constant dense<0.000000e+00> : vector<8x8xf32>
    %914 = tpu.matmul %911, %912, %cst_419 {dimension_numbers = #tpu.dot_dimension_numbers<[1], [1], [0], [0], [0, 0, 1, 0], [], []>} : vector<8x8xf32>, vector<8x8xf32>, vector<8x8xf32> -> vector<8x8xf32>
    %cst_420 = arith.constant 0.353553385 : f32
    %915 = vector.broadcast %cst_420 : f32 to vector<8x8xf32>
    %916 = arith.mulf %914, %915 : vector<8x8xf32>
    %cst_421 = arith.constant 5.000000e-01 : f32
    %917 = vector.broadcast %cst_421 : f32 to vector<8x8xf32>
    %918 = arith.cmpf ogt, %13, %917 : vector<8x8xf32>
    %cst_422 = arith.constant -1.000000e+09 : f32
    %919 = vector.broadcast %cst_422 : f32 to vector<8x8xf32>
    %920 = arith.select %918, %919, %916 : vector<8x8xi1>, vector<8x8xf32>
    %cst_423 = arith.constant dense<0xFF800000> : vector<8xf32>
    %921 = vector.multi_reduction <maximumf>, %920, %cst_423 [1] : vector<8x8xf32> to vector<8xf32>
    %922 = vector.shape_cast %921 : vector<8xf32> to vector<8x1xf32>
    %923 = vector.broadcast %922 : vector<8x1xf32> to vector<8x8xf32>
    %924 = arith.subf %920, %923 : vector<8x8xf32>
    %925 = math.exp %924 : vector<8x8xf32>
    %cst_424 = arith.constant dense<0.000000e+00> : vector<8xf32>
    %926 = vector.multi_reduction <add>, %925, %cst_424 [1] : vector<8x8xf32> to vector<8xf32>
    %927 = vector.shape_cast %926 : vector<8xf32> to vector<8x1xf32>
    %928 = tpu.reciprocal %927 {approx = true} : vector<8x1xf32> -> vector<8x1xf32>
    %929 = vector.broadcast %928 : vector<8x1xf32> to vector<8x8xf32>
    %930 = arith.mulf %925, %929 : vector<8x8xf32>
    %cst_425 = arith.constant dense<0.000000e+00> : vector<8x8xf32>
    %931 = tpu.matmul %930, %913, %cst_425 {dimension_numbers = #tpu.dot_dimension_numbers<[1], [0], [0], [1], [0, 0, 1, 1], [], []>} : vector<8x8xf32>, vector<8x8xf32>, vector<8x8xf32> -> vector<8x8xf32>
    %932 = vector.extract_strided_slice %878 {offsets = [8, 0], sizes = [8, 32], strides = [1, 1]} : vector<32x32xf32> to vector<8x32xf32>
    %cst_426 = arith.constant dense<0.000000e+00> : vector<8x32xf32>
    %933 = tpu.matmul %931, %932, %cst_426 {dimension_numbers = #tpu.dot_dimension_numbers<[1], [0], [0], [1], [0, 0, 1, 1], [], []>} : vector<8x8xf32>, vector<8x32xf32>, vector<8x32xf32> -> vector<8x32xf32>
    %934 = arith.addf %910, %933 : vector<8x32xf32>
    %935 = vector.extract_strided_slice %867 {offsets = [0, 16], sizes = [8, 8], strides = [1, 1]} : vector<8x32xf32> to vector<8x8xf32>
    %936 = vector.extract_strided_slice %875 {offsets = [0, 16], sizes = [8, 8], strides = [1, 1]} : vector<8x32xf32> to vector<8x8xf32>
    %937 = vector.extract_strided_slice %876 {offsets = [0, 16], sizes = [8, 8], strides = [1, 1]} : vector<8x32xf32> to vector<8x8xf32>
    %cst_427 = arith.constant dense<0.000000e+00> : vector<8x8xf32>
    %938 = tpu.matmul %935, %936, %cst_427 {dimension_numbers = #tpu.dot_dimension_numbers<[1], [1], [0], [0], [0, 0, 1, 0], [], []>} : vector<8x8xf32>, vector<8x8xf32>, vector<8x8xf32> -> vector<8x8xf32>
    %cst_428 = arith.constant 0.353553385 : f32
    %939 = vector.broadcast %cst_428 : f32 to vector<8x8xf32>
    %940 = arith.mulf %938, %939 : vector<8x8xf32>
    %cst_429 = arith.constant 5.000000e-01 : f32
    %941 = vector.broadcast %cst_429 : f32 to vector<8x8xf32>
    %942 = arith.cmpf ogt, %13, %941 : vector<8x8xf32>
    %cst_430 = arith.constant -1.000000e+09 : f32
    %943 = vector.broadcast %cst_430 : f32 to vector<8x8xf32>
    %944 = arith.select %942, %943, %940 : vector<8x8xi1>, vector<8x8xf32>
    %cst_431 = arith.constant dense<0xFF800000> : vector<8xf32>
    %945 = vector.multi_reduction <maximumf>, %944, %cst_431 [1] : vector<8x8xf32> to vector<8xf32>
    %946 = vector.shape_cast %945 : vector<8xf32> to vector<8x1xf32>
    %947 = vector.broadcast %946 : vector<8x1xf32> to vector<8x8xf32>
    %948 = arith.subf %944, %947 : vector<8x8xf32>
    %949 = math.exp %948 : vector<8x8xf32>
    %cst_432 = arith.constant dense<0.000000e+00> : vector<8xf32>
    %950 = vector.multi_reduction <add>, %949, %cst_432 [1] : vector<8x8xf32> to vector<8xf32>
    %951 = vector.shape_cast %950 : vector<8xf32> to vector<8x1xf32>
    %952 = tpu.reciprocal %951 {approx = true} : vector<8x1xf32> -> vector<8x1xf32>
    %953 = vector.broadcast %952 : vector<8x1xf32> to vector<8x8xf32>
    %954 = arith.mulf %949, %953 : vector<8x8xf32>
    %cst_433 = arith.constant dense<0.000000e+00> : vector<8x8xf32>
    %955 = tpu.matmul %954, %937, %cst_433 {dimension_numbers = #tpu.dot_dimension_numbers<[1], [0], [0], [1], [0, 0, 1, 1], [], []>} : vector<8x8xf32>, vector<8x8xf32>, vector<8x8xf32> -> vector<8x8xf32>
    %956 = vector.extract_strided_slice %878 {offsets = [16, 0], sizes = [8, 32], strides = [1, 1]} : vector<32x32xf32> to vector<8x32xf32>
    %cst_434 = arith.constant dense<0.000000e+00> : vector<8x32xf32>
    %957 = tpu.matmul %955, %956, %cst_434 {dimension_numbers = #tpu.dot_dimension_numbers<[1], [0], [0], [1], [0, 0, 1, 1], [], []>} : vector<8x8xf32>, vector<8x32xf32>, vector<8x32xf32> -> vector<8x32xf32>
    %958 = arith.addf %934, %957 : vector<8x32xf32>
    %959 = vector.extract_strided_slice %867 {offsets = [0, 24], sizes = [8, 8], strides = [1, 1]} : vector<8x32xf32> to vector<8x8xf32>
    %960 = vector.extract_strided_slice %875 {offsets = [0, 24], sizes = [8, 8], strides = [1, 1]} : vector<8x32xf32> to vector<8x8xf32>
    %961 = vector.extract_strided_slice %876 {offsets = [0, 24], sizes = [8, 8], strides = [1, 1]} : vector<8x32xf32> to vector<8x8xf32>
    %cst_435 = arith.constant dense<0.000000e+00> : vector<8x8xf32>
    %962 = tpu.matmul %959, %960, %cst_435 {dimension_numbers = #tpu.dot_dimension_numbers<[1], [1], [0], [0], [0, 0, 1, 0], [], []>} : vector<8x8xf32>, vector<8x8xf32>, vector<8x8xf32> -> vector<8x8xf32>
    %cst_436 = arith.constant 0.353553385 : f32
    %963 = vector.broadcast %cst_436 : f32 to vector<8x8xf32>
    %964 = arith.mulf %962, %963 : vector<8x8xf32>
    %cst_437 = arith.constant 5.000000e-01 : f32
    %965 = vector.broadcast %cst_437 : f32 to vector<8x8xf32>
    %966 = arith.cmpf ogt, %13, %965 : vector<8x8xf32>
    %cst_438 = arith.constant -1.000000e+09 : f32
    %967 = vector.broadcast %cst_438 : f32 to vector<8x8xf32>
    %968 = arith.select %966, %967, %964 : vector<8x8xi1>, vector<8x8xf32>
    %cst_439 = arith.constant dense<0xFF800000> : vector<8xf32>
    %969 = vector.multi_reduction <maximumf>, %968, %cst_439 [1] : vector<8x8xf32> to vector<8xf32>
    %970 = vector.shape_cast %969 : vector<8xf32> to vector<8x1xf32>
    %971 = vector.broadcast %970 : vector<8x1xf32> to vector<8x8xf32>
    %972 = arith.subf %968, %971 : vector<8x8xf32>
    %973 = math.exp %972 : vector<8x8xf32>
    %cst_440 = arith.constant dense<0.000000e+00> : vector<8xf32>
    %974 = vector.multi_reduction <add>, %973, %cst_440 [1] : vector<8x8xf32> to vector<8xf32>
    %975 = vector.shape_cast %974 : vector<8xf32> to vector<8x1xf32>
    %976 = tpu.reciprocal %975 {approx = true} : vector<8x1xf32> -> vector<8x1xf32>
    %977 = vector.broadcast %976 : vector<8x1xf32> to vector<8x8xf32>
    %978 = arith.mulf %973, %977 : vector<8x8xf32>
    %cst_441 = arith.constant dense<0.000000e+00> : vector<8x8xf32>
    %979 = tpu.matmul %978, %961, %cst_441 {dimension_numbers = #tpu.dot_dimension_numbers<[1], [0], [0], [1], [0, 0, 1, 1], [], []>} : vector<8x8xf32>, vector<8x8xf32>, vector<8x8xf32> -> vector<8x8xf32>
    %980 = vector.extract_strided_slice %878 {offsets = [24, 0], sizes = [8, 32], strides = [1, 1]} : vector<32x32xf32> to vector<8x32xf32>
    %cst_442 = arith.constant dense<0.000000e+00> : vector<8x32xf32>
    %981 = tpu.matmul %979, %980, %cst_442 {dimension_numbers = #tpu.dot_dimension_numbers<[1], [0], [0], [1], [0, 0, 1, 1], [], []>} : vector<8x8xf32>, vector<8x32xf32>, vector<8x32xf32> -> vector<8x32xf32>
    %982 = arith.addf %958, %981 : vector<8x32xf32>
    %cst_443 = arith.constant dense<0.000000e+00> : vector<8xf32>
    %983 = vector.multi_reduction <add>, %982, %cst_443 [1] : vector<8x32xf32> to vector<8xf32>
    %984 = vector.shape_cast %983 : vector<8xf32> to vector<8x1xf32>
    %cst_444 = arith.constant 3.200000e+01 : f32
    %985 = vector.broadcast %cst_444 : f32 to vector<8x1xf32>
    %986 = arith.divf %984, %985 : vector<8x1xf32>
    %987 = vector.broadcast %986 : vector<8x1xf32> to vector<8x32xf32>
    %988 = arith.subf %982, %987 : vector<8x32xf32>
    %989 = arith.mulf %988, %988 : vector<8x32xf32>
    %cst_445 = arith.constant dense<0.000000e+00> : vector<8xf32>
    %990 = vector.multi_reduction <add>, %989, %cst_445 [1] : vector<8x32xf32> to vector<8xf32>
    %991 = vector.shape_cast %990 : vector<8xf32> to vector<8x1xf32>
    %cst_446 = arith.constant 3.200000e+01 : f32
    %992 = vector.broadcast %cst_446 : f32 to vector<8x1xf32>
    %993 = arith.divf %991, %992 : vector<8x1xf32>
    %994 = vector.broadcast %986 : vector<8x1xf32> to vector<8x32xf32>
    %995 = arith.subf %982, %994 : vector<8x32xf32>
    %cst_447 = arith.constant 9.99999974E-6 : f32
    %996 = vector.broadcast %cst_447 : f32 to vector<8x1xf32>
    %997 = arith.addf %993, %996 : vector<8x1xf32>
    %998 = math.rsqrt %997 : vector<8x1xf32>
    %999 = vector.broadcast %998 : vector<8x1xf32> to vector<8x32xf32>
    %1000 = arith.mulf %995, %999 : vector<8x32xf32>
    %1001 = vector.broadcast %882 : vector<1x32xf32> to vector<8x32xf32>
    %1002 = arith.mulf %1000, %1001 : vector<8x32xf32>
    %1003 = vector.broadcast %884 : vector<1x32xf32> to vector<8x32xf32>
    %1004 = arith.addf %1002, %1003 : vector<8x32xf32>
    %1005 = tpu.concatenate %906, %930, %954, %978 in 1 : vector<8x8xf32>, vector<8x8xf32>, vector<8x8xf32>, vector<8x8xf32> -> vector<8x32xf32>
    %c1_448 = arith.constant 1 : index
    %c0_449 = arith.constant 0 : index
    %c0_450 = arith.constant 0 : index
    %1006 = vector.load %arg40[%c1_448, %c0_449, %c0_450] : memref<2x8x32xf32, #tpu.memory_space<vmem>>, vector<1x8x32xf32>
    %1007 = vector.shape_cast %1006 : vector<1x8x32xf32> to vector<8x32xf32>
    %1008 = vector.shape_cast %1005 : vector<8x32xf32> to vector<1x8x32xf32>
    tpu.vector_store %arg40[%c1_448, %c0_449, %c0_450], %1008 {strides = array<i32>} : memref<2x8x32xf32, #tpu.memory_space<vmem>>, vector<1x8x32xf32>,
    %c1_451 = arith.constant 1 : index
    %c0_452 = arith.constant 0 : index
    %c0_453 = arith.constant 0 : index
    %1009 = vector.load %arg30[%c1_451, %c0_452, %c0_453] : memref<2x32x64xf32, #tpu.memory_space<vmem>>, vector<1x32x64xf32>
    %1010 = vector.shape_cast %1009 : vector<1x32x64xf32> to vector<32x64xf32>
    %c1_454 = arith.constant 1 : index
    %c0_455 = arith.constant 0 : index
    %c0_456 = arith.constant 0 : index
    %1011 = vector.load %arg31[%c1_454, %c0_455, %c0_456] : memref<2x1x64xf32, #tpu.memory_space<vmem>>, vector<1x1x64xf32>
    %1012 = vector.shape_cast %1011 : vector<1x1x64xf32> to vector<1x64xf32>
    %c1_457 = arith.constant 1 : index
    %c0_458 = arith.constant 0 : index
    %c0_459 = arith.constant 0 : index
    %1013 = vector.load %arg32[%c1_457, %c0_458, %c0_459] : memref<2x64x32xf32, #tpu.memory_space<vmem>>, vector<1x64x32xf32>
    %1014 = vector.shape_cast %1013 : vector<1x64x32xf32> to vector<64x32xf32>
    %c1_460 = arith.constant 1 : index
    %c0_461 = arith.constant 0 : index
    %c0_462 = arith.constant 0 : index
    %1015 = vector.load %arg33[%c1_460, %c0_461, %c0_462] : memref<2x1x32xf32, #tpu.memory_space<vmem>>, vector<1x1x32xf32>
    %1016 = vector.shape_cast %1015 : vector<1x1x32xf32> to vector<1x32xf32>
    %c1_463 = arith.constant 1 : index
    %c0_464 = arith.constant 0 : index
    %c0_465 = arith.constant 0 : index
    %1017 = vector.load %arg34[%c1_463, %c0_464, %c0_465] : memref<2x1x32xf32, #tpu.memory_space<vmem>>, vector<1x1x32xf32>
    %1018 = vector.shape_cast %1017 : vector<1x1x32xf32> to vector<1x32xf32>
    %c1_466 = arith.constant 1 : index
    %c0_467 = arith.constant 0 : index
    %c0_468 = arith.constant 0 : index
    %1019 = vector.load %arg35[%c1_466, %c0_467, %c0_468] : memref<2x1x32xf32, #tpu.memory_space<vmem>>, vector<1x1x32xf32>
    %1020 = vector.shape_cast %1019 : vector<1x1x32xf32> to vector<1x32xf32>
    %cst_469 = arith.constant dense<0.000000e+00> : vector<8x64xf32>
    %1021 = tpu.matmul %1004, %1010, %cst_469 {dimension_numbers = #tpu.dot_dimension_numbers<[1], [0], [0], [1], [0, 0, 1, 1], [], []>} : vector<8x32xf32>, vector<32x64xf32>, vector<8x64xf32> -> vector<8x64xf32>
    %1022 = vector.broadcast %1012 : vector<1x64xf32> to vector<8x64xf32>
    %1023 = arith.addf %1021, %1022 : vector<8x64xf32>
    %cst_470 = arith.constant 0.000000e+00 : f32
    %1024 = vector.broadcast %cst_470 : f32 to vector<8x64xf32>
    %1025 = arith.maximumf %1023, %1024 : vector<8x64xf32>
    %cst_471 = arith.constant dense<0.000000e+00> : vector<8x32xf32>
    %1026 = tpu.matmul %1025, %1014, %cst_471 {dimension_numbers = #tpu.dot_dimension_numbers<[1], [0], [0], [1], [0, 0, 1, 1], [], []>} : vector<8x64xf32>, vector<64x32xf32>, vector<8x32xf32> -> vector<8x32xf32>
    %1027 = vector.broadcast %1016 : vector<1x32xf32> to vector<8x32xf32>
    %1028 = arith.addf %1026, %1027 : vector<8x32xf32>
    %1029 = arith.addf %1028, %1004 : vector<8x32xf32>
    %cst_472 = arith.constant dense<0.000000e+00> : vector<8xf32>
    %1030 = vector.multi_reduction <add>, %1029, %cst_472 [1] : vector<8x32xf32> to vector<8xf32>
    %1031 = vector.shape_cast %1030 : vector<8xf32> to vector<8x1xf32>
    %cst_473 = arith.constant 3.200000e+01 : f32
    %1032 = vector.broadcast %cst_473 : f32 to vector<8x1xf32>
    %1033 = arith.divf %1031, %1032 : vector<8x1xf32>
    %1034 = vector.broadcast %1033 : vector<8x1xf32> to vector<8x32xf32>
    %1035 = arith.subf %1029, %1034 : vector<8x32xf32>
    %1036 = arith.mulf %1035, %1035 : vector<8x32xf32>
    %cst_474 = arith.constant dense<0.000000e+00> : vector<8xf32>
    %1037 = vector.multi_reduction <add>, %1036, %cst_474 [1] : vector<8x32xf32> to vector<8xf32>
    %1038 = vector.shape_cast %1037 : vector<8xf32> to vector<8x1xf32>
    %cst_475 = arith.constant 3.200000e+01 : f32
    %1039 = vector.broadcast %cst_475 : f32 to vector<8x1xf32>
    %1040 = arith.divf %1038, %1039 : vector<8x1xf32>
    %1041 = vector.broadcast %1033 : vector<8x1xf32> to vector<8x32xf32>
    %1042 = arith.subf %1029, %1041 : vector<8x32xf32>
    %cst_476 = arith.constant 9.99999974E-6 : f32
    %1043 = vector.broadcast %cst_476 : f32 to vector<8x1xf32>
    %1044 = arith.addf %1040, %1043 : vector<8x1xf32>
    %1045 = math.rsqrt %1044 : vector<8x1xf32>
    %1046 = vector.broadcast %1045 : vector<8x1xf32> to vector<8x32xf32>
    %1047 = arith.mulf %1042, %1046 : vector<8x32xf32>
    %1048 = vector.broadcast %1018 : vector<1x32xf32> to vector<8x32xf32>
    %1049 = arith.mulf %1047, %1048 : vector<8x32xf32>
    %1050 = vector.broadcast %1020 : vector<1x32xf32> to vector<8x32xf32>
    %1051 = arith.addf %1049, %1050 : vector<8x32xf32>
    %c0_477 = arith.constant 0 : index
    %c0_478 = arith.constant 0 : index
    %1052 = vector.load %arg36[%c0_477, %c0_478] : memref<32x16xf32, #tpu.memory_space<vmem>>, vector<32x16xf32>
    %cst_479 = arith.constant dense<0.000000e+00> : vector<8x16xf32>
    %1053 = tpu.matmul %1051, %1052, %cst_479 {dimension_numbers = #tpu.dot_dimension_numbers<[1], [0], [0], [1], [0, 0, 1, 1], [], []>} : vector<8x32xf32>, vector<32x16xf32>, vector<8x16xf32> -> vector<8x16xf32>
    %c0_480 = arith.constant 0 : index
    %c0_481 = arith.constant 0 : index
    %1054 = vector.load %arg37[%c0_480, %c0_481] : memref<8x16xf32, #tpu.memory_space<vmem>>, vector<8x16xf32>
    tpu.vector_store %arg37[%c0_480, %c0_481], %1053 {strides = array<i32>} : memref<8x16xf32, #tpu.memory_space<vmem>>, vector<8x16xf32>,
    return
  }
}

</mosaic_0001>

<llo_original>
// kernel: transformer_forward.1
$region0: #{transformer_forward.1}
  #allocation0 [shape = 'u32[]', space=smem, size = 0x4, offset = 0x4, fixed_abs, tag = 'smem constant byte address 0x4 - core index']
  #allocation1 [shape = 'u32[72,128]{1,0:T(1,128)}', space=vmem, size = 0x9000, scoped, tag = 'internal scratch']
  %s0 = inlined_call_operand.smem [shape: u32[41], index: -1, kind: input, shape index: {}]
  %s1 = sld [smem:[%s0]]
  %s2 = scalar_lea.smem %s0, 1
  %s3 = sld [smem:[%s2]]
  %s4 = scalar_lea.smem %s0, 2
  %s5 = sld [smem:[%s4]]
  %s6 = scalar_lea.smem %s0, 3
  %s7 = sld [smem:[%s6]]
  %s8 = scalar_lea.smem %s0, 4
  %s9 = sld [smem:[%s8]]
  %s10 = scalar_lea.smem %s0, 5
  %s11 = sld [smem:[%s10]]
  %s12 = scalar_lea.smem %s0, 6
  %s13 = sld [smem:[%s12]]
  %s14 = scalar_lea.smem %s0, 7
  %s15 = sld [smem:[%s14]]
  %s16 = scalar_lea.smem %s0, 8
  %s17 = sld [smem:[%s16]]
  %s18 = scalar_lea.smem %s0, 9
  %s19 = sld [smem:[%s18]]
  %s20 = scalar_lea.smem %s0, 10
  %s21 = sld [smem:[%s20]]
  %s22 = scalar_lea.smem %s0, 11
  %s23 = sld [smem:[%s22]]
  %s24 = scalar_lea.smem %s0, 12
  %s25 = sld [smem:[%s24]]
  %s26 = scalar_lea.smem %s0, 13
  %s27 = sld [smem:[%s26]]
  %s28 = scalar_lea.smem %s0, 14
  %s29 = sld [smem:[%s28]]
  %s30 = scalar_lea.smem %s0, 15
  %s31 = sld [smem:[%s30]]
  %s32 = scalar_lea.smem %s0, 16
  %s33 = sld [smem:[%s32]]
  %s34 = scalar_lea.smem %s0, 17
  %s35 = sld [smem:[%s34]]
  %s36 = scalar_lea.smem %s0, 18
  %s37 = sld [smem:[%s36]]
  %s38 = scalar_lea.smem %s0, 19
  %s39 = sld [smem:[%s38]]
  %s40 = scalar_lea.smem %s0, 20
  %s41 = sld [smem:[%s40]]
  %s42 = scalar_lea.smem %s0, 21
  %s43 = sld [smem:[%s42]]
  %s44 = scalar_lea.smem %s0, 22
  %s45 = sld [smem:[%s44]]
  %s46 = scalar_lea.smem %s0, 23
  %s47 = sld [smem:[%s46]]
  %s48 = scalar_lea.smem %s0, 24
  %s49 = sld [smem:[%s48]]
  %s50 = scalar_lea.smem %s0, 25
  %s51 = sld [smem:[%s50]]
  %s52 = scalar_lea.smem %s0, 26
  %s53 = sld [smem:[%s52]]
  %s54 = scalar_lea.smem %s0, 27
  %s55 = sld [smem:[%s54]]
  %s56 = scalar_lea.smem %s0, 28
  %s57 = sld [smem:[%s56]]
  %s58 = scalar_lea.smem %s0, 29
  %s59 = sld [smem:[%s58]]
  %s60 = scalar_lea.smem %s0, 30
  %s61 = sld [smem:[%s60]]
  %s62 = scalar_lea.smem %s0, 31
  %s63 = sld [smem:[%s62]]
  %s64 = scalar_lea.smem %s0, 32
  %s65 = sld [smem:[%s64]]
  %s66 = scalar_lea.smem %s0, 33
  %s67 = sld [smem:[%s66]]
  %s68 = scalar_lea.smem %s0, 34
  %s69 = sld [smem:[%s68]]
  %s70 = scalar_lea.smem %s0, 35
  %s71 = sld [smem:[%s70]]
  %s72 = scalar_lea.smem %s0, 36
  %s73 = sld [smem:[%s72]]
  %s74 = scalar_lea.smem %s0, 37
  %s75 = sld [smem:[%s74]]
  %s76 = scalar_lea.smem %s0, 38
  %s77 = sld [smem:[%s76]]
  %s78 = scalar_lea.smem %s0, 39
  %s79 = sld [smem:[%s78]]
  %s80 = scalar_lea.smem %s0, 40
  %s81 = sld [smem:[%s80]]
  %82 = xla_tuple %s75, %s77, %s79, %s81
  %s83 = sld [smem:[#allocation0]]
  $region186: #{transformer_forward.1} parent=0
    _
  %s85 = ssub.s32 1, %s83
  %s86 = scalar_select 0, %s85, %s83
  $region1: #{transformer_forward.1} parent=0
    #allocation2 [shape = 'u8[32768]{0}', space=vmem, size = 0x8000, scoped, tag = 'input window, operand 30, single buffered']
    #allocation3 [shape = 's32[1]{0}', space=sflag, size = 0x4, scoped, tag = 'scoped memory for transformer_forward.1']
    #allocation4 [shape = 's32[1]{0}', space=sflag, size = 0x4, scoped, tag = 'scoped memory for transformer_forward.1']
    #allocation5 [shape = 'u8[4096]{0}', space=vmem, size = 0x1000, scoped, tag = 'output window, operand 0, single buffered']
    %87 = vsyncpa [#allocation3], 0
    %88 = vsyncpa [#allocation4], 0
    // Predicated region
    $region2: #{transformer_forward.1} parent=1 // pred_check
      _
    $region3: #{transformer_forward.1} parent=1 // pred_check_branch
      %90 = sbr.rel (0) target = $region5
    $region4: #{transformer_forward.1} parent=1 // pred_region
      _
    $region5: #{transformer_forward.1} parent=1 // pred_fallthru
      _
    // Predicated region
    $region6: #{transformer_forward.1} parent=1 // pred_check
      _
    $region7: #{transformer_forward.1} parent=1 // pred_check_branch
      %92 = sbr.rel (0) target = $region9
    $region8: #{transformer_forward.1} parent=1 // pred_region
      _
    $region9: #{transformer_forward.1} parent=1 // pred_fallthru
      _
    // Predicated region
    $region10: #{transformer_forward.1} parent=1 // pred_check
      _
    $region11: #{transformer_forward.1} parent=1 // pred_check_branch
      %94 = sbr.rel (0) target = $region13
    $region12: #{transformer_forward.1} parent=1 // pred_region
      _
    $region13: #{transformer_forward.1} parent=1 // pred_fallthru
      _
    // Predicated region
    $region14: #{transformer_forward.1} parent=1 // pred_check
      _
    $region15: #{transformer_forward.1} parent=1 // pred_check_branch
      %96 = sbr.rel (0) target = $region17
    $region16: #{transformer_forward.1} parent=1 // pred_region
      _
    $region17: #{transformer_forward.1} parent=1 // pred_fallthru
      _
    // Predicated region
    $region18: #{transformer_forward.1} parent=1 // pred_check
      _
    $region19: #{transformer_forward.1} parent=1 // pred_check_branch
      %98 = sbr.rel (0) target = $region21
    $region20: #{transformer_forward.1} parent=1 // pred_region
      _
    $region21: #{transformer_forward.1} parent=1 // pred_fallthru
      _
    // Predicated region
    $region22: #{transformer_forward.1} parent=1 // pred_check
      _
    $region23: #{transformer_forward.1} parent=1 // pred_check_branch
      %100 = sbr.rel (0) target = $region25
    $region24: #{transformer_forward.1} parent=1 // pred_region
      _
    $region25: #{transformer_forward.1} parent=1 // pred_fallthru
      _
    // Predicated region
    $region26: #{transformer_forward.1} parent=1 // pred_check
      _
    $region27: #{transformer_forward.1} parent=1 // pred_check_branch
      %102 = sbr.rel (0) target = $region29
    $region28: #{transformer_forward.1} parent=1 // pred_region
      _
    $region29: #{transformer_forward.1} parent=1 // pred_fallthru
      _
    // Predicated region
    $region30: #{transformer_forward.1} parent=1 // pred_check
      _
    $region31: #{transformer_forward.1} parent=1 // pred_check_branch
      %104 = sbr.rel (0) target = $region33
    $region32: #{transformer_forward.1} parent=1 // pred_region
      _
    $region33: #{transformer_forward.1} parent=1 // pred_fallthru
      _
    // Predicated region
    $region34: #{transformer_forward.1} parent=1 // pred_check
      _
    $region35: #{transformer_forward.1} parent=1 // pred_check_branch
      %106 = sbr.rel (0) target = $region37
    $region36: #{transformer_forward.1} parent=1 // pred_region
      _
    $region37: #{transformer_forward.1} parent=1 // pred_fallthru
      _
    // Predicated region
    $region38: #{transformer_forward.1} parent=1 // pred_check
      _
    $region39: #{transformer_forward.1} parent=1 // pred_check_branch
      %108 = sbr.rel (0) target = $region41
    $region40: #{transformer_forward.1} parent=1 // pred_region
      _
    $region41: #{transformer_forward.1} parent=1 // pred_fallthru
      _
    // Predicated region
    $region42: #{transformer_forward.1} parent=1 // pred_check
      _
    $region43: #{transformer_forward.1} parent=1 // pred_check_branch
      %110 = sbr.rel (0) target = $region45
    $region44: #{transformer_forward.1} parent=1 // pred_region
      _
    $region45: #{transformer_forward.1} parent=1 // pred_fallthru
      _
    // Predicated region
    $region46: #{transformer_forward.1} parent=1 // pred_check
      _
    $region47: #{transformer_forward.1} parent=1 // pred_check_branch
      %112 = sbr.rel (0) target = $region49
    $region48: #{transformer_forward.1} parent=1 // pred_region
      _
    $region49: #{transformer_forward.1} parent=1 // pred_fallthru
      _
    // Predicated region
    $region50: #{transformer_forward.1} parent=1 // pred_check
      _
    $region51: #{transformer_forward.1} parent=1 // pred_check_branch
      %114 = sbr.rel (0) target = $region53
    $region52: #{transformer_forward.1} parent=1 // pred_region
      _
    $region53: #{transformer_forward.1} parent=1 // pred_fallthru
      _
    // Predicated region
    $region54: #{transformer_forward.1} parent=1 // pred_check
      _
    $region55: #{transformer_forward.1} parent=1 // pred_check_branch
      %116 = sbr.rel (0) target = $region57
    $region56: #{transformer_forward.1} parent=1 // pred_region
      _
    $region57: #{transformer_forward.1} parent=1 // pred_fallthru
      _
    // Predicated region
    $region58: #{transformer_forward.1} parent=1 // pred_check
      _
    $region59: #{transformer_forward.1} parent=1 // pred_check_branch
      %118 = sbr.rel (0) target = $region61
    $region60: #{transformer_forward.1} parent=1 // pred_region
      _
    $region61: #{transformer_forward.1} parent=1 // pred_fallthru
      _
    // Predicated region
    $region62: #{transformer_forward.1} parent=1 // pred_check
      _
    $region63: #{transformer_forward.1} parent=1 // pred_check_branch
      %120 = sbr.rel (0) target = $region65
    $region64: #{transformer_forward.1} parent=1 // pred_region
      _
    $region65: #{transformer_forward.1} parent=1 // pred_fallthru
      _
    // Predicated region
    $region66: #{transformer_forward.1} parent=1 // pred_check
      _
    $region67: #{transformer_forward.1} parent=1 // pred_check_branch
      %122 = sbr.rel (0) target = $region69
    $region68: #{transformer_forward.1} parent=1 // pred_region
      _
    $region69: #{transformer_forward.1} parent=1 // pred_fallthru
      _
    // Predicated region
    $region70: #{transformer_forward.1} parent=1 // pred_check
      _
    $region71: #{transformer_forward.1} parent=1 // pred_check_branch
      %124 = sbr.rel (0) target = $region73
    $region72: #{transformer_forward.1} parent=1 // pred_region
      _
    $region73: #{transformer_forward.1} parent=1 // pred_fallthru
      _
    // Predicated region
    $region74: #{transformer_forward.1} parent=1 // pred_check
      _
    $region75: #{transformer_forward.1} parent=1 // pred_check_branch
      %126 = sbr.rel (0) target = $region77
    $region76: #{transformer_forward.1} parent=1 // pred_region
      _
    $region77: #{transformer_forward.1} parent=1 // pred_fallthru
      _
    // Predicated region
    $region78: #{transformer_forward.1} parent=1 // pred_check
      _
    $region79: #{transformer_forward.1} parent=1 // pred_check_branch
      %128 = sbr.rel (0) target = $region81
    $region80: #{transformer_forward.1} parent=1 // pred_region
      _
    $region81: #{transformer_forward.1} parent=1 // pred_fallthru
      _
    // Predicated region
    $region82: #{transformer_forward.1} parent=1 // pred_check
      _
    $region83: #{transformer_forward.1} parent=1 // pred_check_branch
      %130 = sbr.rel (0) target = $region85
    $region84: #{transformer_forward.1} parent=1 // pred_region
      _
    $region85: #{transformer_forward.1} parent=1 // pred_fallthru
      _
    // Predicated region
    $region86: #{transformer_forward.1} parent=1 // pred_check
      _
    $region87: #{transformer_forward.1} parent=1 // pred_check_branch
      %132 = sbr.rel (0) target = $region89
    $region88: #{transformer_forward.1} parent=1 // pred_region
      _
    $region89: #{transformer_forward.1} parent=1 // pred_fallthru
      _
    // Predicated region
    $region90: #{transformer_forward.1} parent=1 // pred_check
      _
    $region91: #{transformer_forward.1} parent=1 // pred_check_branch
      %134 = sbr.rel (0) target = $region93
    $region92: #{transformer_forward.1} parent=1 // pred_region
      _
    $region93: #{transformer_forward.1} parent=1 // pred_fallthru
      _
    // Predicated region
    $region94: #{transformer_forward.1} parent=1 // pred_check
      _
    $region95: #{transformer_forward.1} parent=1 // pred_check_branch
      %136 = sbr.rel (0) target = $region97
    $region96: #{transformer_forward.1} parent=1 // pred_region
      _
    $region97: #{transformer_forward.1} parent=1 // pred_fallthru
      _
    // Predicated region
    $region98: #{transformer_forward.1} parent=1 // pred_check
      _
    $region99: #{transformer_forward.1} parent=1 // pred_check_branch
      %138 = sbr.rel (0) target = $region101
    $region100: #{transformer_forward.1} parent=1 // pred_region
      _
    $region101: #{transformer_forward.1} parent=1 // pred_fallthru
      _
    // Predicated region
    $region102: #{transformer_forward.1} parent=1 // pred_check
      _
    $region103: #{transformer_forward.1} parent=1 // pred_check_branch
      %140 = sbr.rel (0) target = $region105
    $region104: #{transformer_forward.1} parent=1 // pred_region
      _
    $region105: #{transformer_forward.1} parent=1 // pred_fallthru
      _
    // Predicated region
    $region106: #{transformer_forward.1} parent=1 // pred_check
      _
    $region107: #{transformer_forward.1} parent=1 // pred_check_branch
      %142 = sbr.rel (0) target = $region109
    $region108: #{transformer_forward.1} parent=1 // pred_region
      _
    $region109: #{transformer_forward.1} parent=1 // pred_fallthru
      _
    // Predicated region
    $region110: #{transformer_forward.1} parent=1 // pred_check
      _
    $region111: #{transformer_forward.1} parent=1 // pred_check_branch
      %144 = sbr.rel (0) target = $region113
    $region112: #{transformer_forward.1} parent=1 // pred_region
      _
    $region113: #{transformer_forward.1} parent=1 // pred_fallthru
      _
    // Predicated region
    $region114: #{transformer_forward.1} parent=1 // pred_check
      _
    $region115: #{transformer_forward.1} parent=1 // pred_check_branch
      %146 = sbr.rel (0) target = $region117
    $region116: #{transformer_forward.1} parent=1 // pred_region
      _
    $region117: #{transformer_forward.1} parent=1 // pred_fallthru
      _
    // Predicated region
    $region118: #{transformer_forward.1} parent=1 // pred_check
      _
    $region119: #{transformer_forward.1} parent=1 // pred_check_branch
      %148 = sbr.rel (0) target = $region121
    $region120: #{transformer_forward.1} parent=1 // pred_region
      _
    $region121: #{transformer_forward.1} parent=1 // pred_fallthru
      _
    // Predicated region
    $region122: #{transformer_forward.1} parent=1 // pred_check
      _
    $region123: #{transformer_forward.1} parent=1 // pred_check_branch
      %150 = sbr.rel (0) target = $region125
    $region124: #{transformer_forward.1} parent=1 // pred_region
      %152 = vsyncadd [#allocation3], 0
      %s153 = sshll.u32 %s61, 4
      %s154 = int_to_ptr.hbm [resolvable:$true] %s153
      %s155 = sshll.u32 [#allocation2], 4
      %s156 = int_to_ptr.vmem [resolvable:$true] %s155
      %161 = dma.hbm_to_vmem [thread:$0]  %s154, 1024, %s156, [#allocation3], 128, 128, 8
    $region125: #{transformer_forward.1} parent=1 // pred_fallthru
      _
    // Predicated region
    $region126: #{transformer_forward.1} parent=1 // pred_check
      _
    $region127: #{transformer_forward.1} parent=1 // pred_check_branch
      %163 = sbr.rel (0) target = $region129
    $region128: #{transformer_forward.1} parent=1 // pred_region
      _
    $region129: #{transformer_forward.1} parent=1 // pred_fallthru
      _
    // Predicated region
    $region130: #{transformer_forward.1} parent=1 // pred_check
      _
    $region131: #{transformer_forward.1} parent=1 // pred_check_branch
      %165 = sbr.rel (0) target = $region133
    $region132: #{transformer_forward.1} parent=1 // pred_region
      _
    $region133: #{transformer_forward.1} parent=1 // pred_fallthru
      _
    // Predicated region
    $region134: #{transformer_forward.1} parent=1 // pred_check
      _
    $region135: #{transformer_forward.1} parent=1 // pred_check_branch
      %167 = sbr.rel (0) target = $region137
    $region136: #{transformer_forward.1} parent=1 // pred_region
      _
    $region137: #{transformer_forward.1} parent=1 // pred_fallthru
      _
    // Predicated region
    $region138: #{transformer_forward.1} parent=1 // pred_check
      _
    $region139: #{transformer_forward.1} parent=1 // pred_check_branch
      %169 = sbr.rel (0) target = $region141
    $region140: #{transformer_forward.1} parent=1 // pred_region
      _
    $region141: #{transformer_forward.1} parent=1 // pred_fallthru
      _
    // Predicated region
    $region142: #{transformer_forward.1} parent=1 // pred_check
      _
    $region143: #{transformer_forward.1} parent=1 // pred_check_branch
      %171 = sbr.rel (0) target = $region145
    $region144: #{transformer_forward.1} parent=1 // pred_region
      _
    $region145: #{transformer_forward.1} parent=1 // pred_fallthru
      _
    // Predicated region
    $region146: #{transformer_forward.1} parent=1 // pred_check
      _
    $region147: #{transformer_forward.1} parent=1 // pred_check_branch
      %173 = sbr.rel (0) target = $region149
    $region148: #{transformer_forward.1} parent=1 // pred_region
      _
    $region149: #{transformer_forward.1} parent=1 // pred_fallthru
      _
    // Predicated region
    $region150: #{transformer_forward.1} parent=1 // pred_check
      _
    $region151: #{transformer_forward.1} parent=1 // pred_check_branch
      %175 = sbr.rel (0) target = $region153
    $region152: #{transformer_forward.1} parent=1 // pred_region
      %177 = dma.done [#allocation3], 1024
    $region153: #{transformer_forward.1} parent=1 // pred_fallthru
      _
    %v178 = vld [vmem:[%s5] sm:$0x1]
    %v179 = vld [vmem:[%s7] sm:$0x1]
    %v181 = vperm.slane %v178, 0
    %v183 = vlaneseq
    %v184 = vshrl.u32 %v183, 7
    %v185 = vlaneseq
    %v186 = vand.u32 %v185, 127
    %vm187 = vcmp.gt.s32.totalorder %v186, %v184
    %v188 = vsel %vm187, 1, 0
    %v189 = vcvt.s32.f32 %v188
    %v191 = vperm.slane %v179, 0
    %v193 = vmax.f32 %v191, %v189
    %v194 = vld [vmem:[%s1] sm:$0xff]
    %v195 = vld [vmem:[%s9] sm:$0xff]
    %v196 = vld [vmem:[%s9 + $0x8] sm:$0xff]
    %v197 = vld [vmem:[%s9 + $0x10] sm:$0xff]
    %v198 = vld [vmem:[%s9 + $0x18] sm:$0xff]
    %v199 = vld [vmem:[%s11] sm:$0x1]
    %v201 = vperm.slane %v199, 0
    %vm203 = vcmask 261120
    %v205 = vsel %vm203, %v194, 0
    %207 = vmatpush.msra.mxu0 0.0
    %208 = vmatpush.msra.mxu0 0.0
    %209 = vmatpush.msra.mxu0 0.0
    %210 = vmatpush.msra.mxu0 0.0
    %211 = vmatpush.msra.mxu0 0.0
    %212 = vmatpush.msra.mxu0 0.0
    %213 = vmatpush.msra.mxu0 0.0
    %214 = vmatpush.msra.mxu0 0.0
    %215 = vmatpush.msra.mxu0 0.0
    %216 = vmatpush.msra.mxu0 0.0
    %217 = vmatpush.msra.mxu0 0.0
    %218 = vmatpush.msra.mxu0 0.0
    %219 = vmatpush.msra.mxu0 %v198
    %220 = vmatpush.msra.mxu0 %v197
    %221 = vmatpush.msra.mxu0 %v196
    %222 = vmatpush.msra.mxu0 %v195
    %223 = vmatmul.f32.gmra.mxu0 %v205
    %v224 = vpop.f32.mrf.mxu0
    %v225 = vadd.f32 %v201, %v224
    %226 = vdwg.mxu0
    %v227 = vld [vmem:[%s13] sm:$0xff]
    %v228 = vld [vmem:[%s13 + $0x8] sm:$0xff]
    %v229 = vld [vmem:[%s13 + $0x10] sm:$0xff]
    %v230 = vld [vmem:[%s13 + $0x18] sm:$0xff]
    %v231 = vld [vmem:[%s15] sm:$0x1]
    %v232 = vld [vmem:[%s17] sm:$0x1]
    %v233 = vld [vmem:[%s19] sm:$0x1]
    %v235 = vperm.slane %v231, 0
    %v237 = vadd.f32 %v194, %v235
    %239 = vrot.lane.b32.xlu0 %v225, 96
    %v240 = vpop.permute.xlu0 %239
    %vm241 = vcmask 64512
    %v242 = vsel %vm241, %v225, 0
    %v244 = vsel %vm241, %v240, 0
    %246 = vmatpush.xpose.msra.mxu0 0.0
    %247 = vmatpush.xpose.msra.mxu0 0.0
    %248 = vmatpush.xpose.msra.mxu0 0.0
    %249 = vmatpush.xpose.msra.mxu0 0.0
    %250 = vmatpush.xpose.msra.mxu0 0.0
    %251 = vmatpush.xpose.msra.mxu0 0.0
    %252 = vmatpush.xpose.msra.mxu0 0.0
    %253 = vmatpush.xpose.msra.mxu0 0.0
    %254 = vmatpush.xpose.msra.mxu0 0.0
    %255 = vmatpush.xpose.msra.mxu0 0.0
    %256 = vmatpush.xpose.msra.mxu0 0.0
    %257 = vmatpush.xpose.msra.mxu0 0.0
    %258 = vmatpush.xpose.msra.mxu0 0.0
    %259 = vmatpush.xpose.msra.mxu0 0.0
    %260 = vmatpush.xpose.msra.mxu0 0.0
    %261 = vmatpush.xpose.msra.mxu0 %v244
    %262 = vmatmul.f32.gmra.mxu0 %v242
    %v263 = vpop.f32.mrf.mxu0
    %v264 = vadd.f32 0.0, %v263
    %265 = vdwg.mxu0
    %v266 = vmul.f32 %v264, 0.35355338
    %vm267 = vcmp.gt.f32.partialorder %v181, 0.5
    %v268 = vsel %vm267, -1e+09, %v266
    %v269 = vsel %vm241, %v268, -inf
    %270 = vmax.xlane.f32.xlu0 %v269
    %v271 = vpop.xlane.xlu0 %270
    %v272 = vsub.f32 %v268, %v271
    %v273 = vmul.f32 %v272, 1.442695
    %v274 = vpow.pop %v273
    %v275 = vsel %vm241, %v274, 0.0
    %276 = vadd.xlane.f32.xlu0 %v275
    %v277 = vpop.xlane.xlu0 %276
    %v278 = vrcp.pop %v277
    %v279 = vmul.f32 %v274, %v278
    %280 = vrot.lane.b32.xlu0 %v225, 64
    %v281 = vpop.permute.xlu0 %280
    %v284 = vsel %vm241, %v279, 0
    %286 = vmatpush.msra.mxu0 0.0
    %287 = vmatpush.msra.mxu0 0.0
    %288 = vmatpush.msra.mxu0 0.0
    %289 = vmatpush.msra.mxu0 0.0
    %290 = vmatpush.msra.mxu0 0.0
    %291 = vmatpush.msra.mxu0 0.0
    %292 = vmatpush.msra.mxu0 0.0
    %293 = vmatpush.msra.mxu0 0.0
    %294 = vmatpush.msra.mxu0 0.0
    %295 = vmatpush.msra.mxu0 0.0
    %296 = vmatpush.msra.mxu0 0.0
    %297 = vmatpush.msra.mxu0 0.0
    %298 = vmatpush.msra.mxu0 0.0
    %299 = vmatpush.msra.mxu0 0.0
    %300 = vmatpush.msra.mxu0 0.0
    %301 = vmatpush.msra.mxu0 %v281
    %302 = vmatmul.f32.gmra.mxu0 %v284
    %v303 = vpop.f32.mrf.mxu0
    %v304 = vadd.f32 0.0, %v303
    %305 = vdwg.mxu0
    %v307 = vsel %vm241, %v304, 0
    %309 = vmatpush.msra.mxu0 0.0
    %310 = vmatpush.msra.mxu0 0.0
    %311 = vmatpush.msra.mxu0 0.0
    %312 = vmatpush.msra.mxu0 0.0
    %313 = vmatpush.msra.mxu0 0.0
    %314 = vmatpush.msra.mxu0 0.0
    %315 = vmatpush.msra.mxu0 0.0
    %316 = vmatpush.msra.mxu0 0.0
    %317 = vmatpush.msra.mxu0 0.0
    %318 = vmatpush.msra.mxu0 0.0
    %319 = vmatpush.msra.mxu0 0.0
    %320 = vmatpush.msra.mxu0 0.0
    %321 = vmatpush.msra.mxu0 0.0
    %322 = vmatpush.msra.mxu0 0.0
    %323 = vmatpush.msra.mxu0 0.0
    %324 = vmatpush.msra.mxu0 %v227
    %325 = vmatmul.f32.gmra.mxu0 %v307
    %v326 = vpop.f32.mrf.mxu0
    %v327 = vadd.f32 0.0, %v326
    %328 = vdwg.mxu0
    %v329 = vadd.f32 %v237, %v327
    %330 = vrot.lane.b32.xlu0 %v225, 120
    %v331 = vpop.permute.xlu0 %330
    %332 = vrot.lane.b32.xlu0 %v225, 88
    %v333 = vpop.permute.xlu0 %332
    %v334 = vsel %vm241, %v331, 0
    %v336 = vsel %vm241, %v333, 0
    %338 = vmatpush.xpose.msra.mxu0 0.0
    %339 = vmatpush.xpose.msra.mxu0 0.0
    %340 = vmatpush.xpose.msra.mxu0 0.0
    %341 = vmatpush.xpose.msra.mxu0 0.0
    %342 = vmatpush.xpose.msra.mxu0 0.0
    %343 = vmatpush.xpose.msra.mxu0 0.0
    %344 = vmatpush.xpose.msra.mxu0 0.0
    %345 = vmatpush.xpose.msra.mxu0 0.0
    %346 = vmatpush.xpose.msra.mxu0 0.0
    %347 = vmatpush.xpose.msra.mxu0 0.0
    %348 = vmatpush.xpose.msra.mxu0 0.0
    %349 = vmatpush.xpose.msra.mxu0 0.0
    %350 = vmatpush.xpose.msra.mxu0 0.0
    %351 = vmatpush.xpose.msra.mxu0 0.0
    %352 = vmatpush.xpose.msra.mxu0 0.0
    %353 = vmatpush.xpose.msra.mxu0 %v336
    %354 = vmatmul.f32.gmra.mxu0 %v334
    %v355 = vpop.f32.mrf.mxu0
    %v356 = vadd.f32 0.0, %v355
    %357 = vdwg.mxu0
    %v358 = vmul.f32 %v356, 0.35355338
    %v359 = vsel %vm267, -1e+09, %v358
    %v360 = vsel %vm241, %v359, -inf
    %361 = vmax.xlane.f32.xlu0 %v360
    %v362 = vpop.xlane.xlu0 %361
    %v363 = vsub.f32 %v359, %v362
    %v364 = vmul.f32 %v363, 1.442695
    %v365 = vpow.pop %v364
    %v366 = vsel %vm241, %v365, 0.0
    %367 = vadd.xlane.f32.xlu0 %v366
    %v368 = vpop.xlane.xlu0 %367
    %v369 = vrcp.pop %v368
    %v370 = vmul.f32 %v365, %v369
    %371 = vrot.lane.b32.xlu0 %v225, 56
    %v372 = vpop.permute.xlu0 %371
    %v375 = vsel %vm241, %v370, 0
    %377 = vmatpush.msra.mxu0 0.0
    %378 = vmatpush.msra.mxu0 0.0
    %379 = vmatpush.msra.mxu0 0.0
    %380 = vmatpush.msra.mxu0 0.0
    %381 = vmatpush.msra.mxu0 0.0
    %382 = vmatpush.msra.mxu0 0.0
    %383 = vmatpush.msra.mxu0 0.0
    %384 = vmatpush.msra.mxu0 0.0
    %385 = vmatpush.msra.mxu0 0.0
    %386 = vmatpush.msra.mxu0 0.0
    %387 = vmatpush.msra.mxu0 0.0
    %388 = vmatpush.msra.mxu0 0.0
    %389 = vmatpush.msra.mxu0 0.0
    %390 = vmatpush.msra.mxu0 0.0
    %391 = vmatpush.msra.mxu0 0.0
    %392 = vmatpush.msra.mxu0 %v372
    %393 = vmatmul.f32.gmra.mxu0 %v375
    %v394 = vpop.f32.mrf.mxu0
    %v395 = vadd.f32 0.0, %v394
    %396 = vdwg.mxu0
    %v398 = vsel %vm241, %v395, 0
    %400 = vmatpush.msra.mxu0 0.0
    %401 = vmatpush.msra.mxu0 0.0
    %402 = vmatpush.msra.mxu0 0.0
    %403 = vmatpush.msra.mxu0 0.0
    %404 = vmatpush.msra.mxu0 0.0
    %405 = vmatpush.msra.mxu0 0.0
    %406 = vmatpush.msra.mxu0 0.0
    %407 = vmatpush.msra.mxu0 0.0
    %408 = vmatpush.msra.mxu0 0.0
    %409 = vmatpush.msra.mxu0 0.0
    %410 = vmatpush.msra.mxu0 0.0
    %411 = vmatpush.msra.mxu0 0.0
    %412 = vmatpush.msra.mxu0 0.0
    %413 = vmatpush.msra.mxu0 0.0
    %414 = vmatpush.msra.mxu0 0.0
    %415 = vmatpush.msra.mxu0 %v228
    %416 = vmatmul.f32.gmra.mxu0 %v398
    %v417 = vpop.f32.mrf.mxu0
    %v418 = vadd.f32 0.0, %v417
    %419 = vdwg.mxu0
    %v420 = vadd.f32 %v329, %v418
    %421 = vrot.lane.b32.xlu0 %v225, 112
    %v422 = vpop.permute.xlu0 %421
    %423 = vrot.lane.b32.xlu0 %v225, 80
    %v424 = vpop.permute.xlu0 %423
    %v425 = vsel %vm241, %v422, 0
    %v427 = vsel %vm241, %v424, 0
    %429 = vmatpush.xpose.msra.mxu0 0.0
    %430 = vmatpush.xpose.msra.mxu0 0.0
    %431 = vmatpush.xpose.msra.mxu0 0.0
    %432 = vmatpush.xpose.msra.mxu0 0.0
    %433 = vmatpush.xpose.msra.mxu0 0.0
    %434 = vmatpush.xpose.msra.mxu0 0.0
    %435 = vmatpush.xpose.msra.mxu0 0.0
    %436 = vmatpush.xpose.msra.mxu0 0.0
    %437 = vmatpush.xpose.msra.mxu0 0.0
    %438 = vmatpush.xpose.msra.mxu0 0.0
    %439 = vmatpush.xpose.msra.mxu0 0.0
    %440 = vmatpush.xpose.msra.mxu0 0.0
    %441 = vmatpush.xpose.msra.mxu0 0.0
    %442 = vmatpush.xpose.msra.mxu0 0.0
    %443 = vmatpush.xpose.msra.mxu0 0.0
    %444 = vmatpush.xpose.msra.mxu0 %v427
    %445 = vmatmul.f32.gmra.mxu0 %v425
    %v446 = vpop.f32.mrf.mxu0
    %v447 = vadd.f32 0.0, %v446
    %448 = vdwg.mxu0
    %v449 = vmul.f32 %v447, 0.35355338
    %v450 = vsel %vm267, -1e+09, %v449
    %v451 = vsel %vm241, %v450, -inf
    %452 = vmax.xlane.f32.xlu0 %v451
    %v453 = vpop.xlane.xlu0 %452
    %v454 = vsub.f32 %v450, %v453
    %v455 = vmul.f32 %v454, 1.442695
    %v456 = vpow.pop %v455
    %v457 = vsel %vm241, %v456, 0.0
    %458 = vadd.xlane.f32.xlu0 %v457
    %v459 = vpop.xlane.xlu0 %458
    %v460 = vrcp.pop %v459
    %v461 = vmul.f32 %v456, %v460
    %462 = vrot.lane.b32.xlu0 %v225, 48
    %v463 = vpop.permute.xlu0 %462
    %v466 = vsel %vm241, %v461, 0
    %468 = vmatpush.msra.mxu0 0.0
    %469 = vmatpush.msra.mxu0 0.0
    %470 = vmatpush.msra.mxu0 0.0
    %471 = vmatpush.msra.mxu0 0.0
    %472 = vmatpush.msra.mxu0 0.0
    %473 = vmatpush.msra.mxu0 0.0
    %474 = vmatpush.msra.mxu0 0.0
    %475 = vmatpush.msra.mxu0 0.0
    %476 = vmatpush.msra.mxu0 0.0
    %477 = vmatpush.msra.mxu0 0.0
    %478 = vmatpush.msra.mxu0 0.0
    %479 = vmatpush.msra.mxu0 0.0
    %480 = vmatpush.msra.mxu0 0.0
    %481 = vmatpush.msra.mxu0 0.0
    %482 = vmatpush.msra.mxu0 0.0
    %483 = vmatpush.msra.mxu0 %v463
    %484 = vmatmul.f32.gmra.mxu0 %v466
    %v485 = vpop.f32.mrf.mxu0
    %v486 = vadd.f32 0.0, %v485
    %487 = vdwg.mxu0
    %v489 = vsel %vm241, %v486, 0
    %491 = vmatpush.msra.mxu0 0.0
    %492 = vmatpush.msra.mxu0 0.0
    %493 = vmatpush.msra.mxu0 0.0
    %494 = vmatpush.msra.mxu0 0.0
    %495 = vmatpush.msra.mxu0 0.0
    %496 = vmatpush.msra.mxu0 0.0
    %497 = vmatpush.msra.mxu0 0.0
    %498 = vmatpush.msra.mxu0 0.0
    %499 = vmatpush.msra.mxu0 0.0
    %500 = vmatpush.msra.mxu0 0.0
    %501 = vmatpush.msra.mxu0 0.0
    %502 = vmatpush.msra.mxu0 0.0
    %503 = vmatpush.msra.mxu0 0.0
    %504 = vmatpush.msra.mxu0 0.0
    %505 = vmatpush.msra.mxu0 0.0
    %506 = vmatpush.msra.mxu0 %v229
    %507 = vmatmul.f32.gmra.mxu0 %v489
    %v508 = vpop.f32.mrf.mxu0
    %v509 = vadd.f32 0.0, %v508
    %510 = vdwg.mxu0
    %v511 = vadd.f32 %v420, %v509
    %512 = vrot.lane.b32.xlu0 %v225, 104
    %v513 = vpop.permute.xlu0 %512
    %514 = vrot.lane.b32.xlu0 %v225, 72
    %v515 = vpop.permute.xlu0 %514
    %v516 = vsel %vm241, %v513, 0
    %v518 = vsel %vm241, %v515, 0
    %520 = vmatpush.xpose.msra.mxu0 0.0
    %521 = vmatpush.xpose.msra.mxu0 0.0
    %522 = vmatpush.xpose.msra.mxu0 0.0
    %523 = vmatpush.xpose.msra.mxu0 0.0
    %524 = vmatpush.xpose.msra.mxu0 0.0
    %525 = vmatpush.xpose.msra.mxu0 0.0
    %526 = vmatpush.xpose.msra.mxu0 0.0
    %527 = vmatpush.xpose.msra.mxu0 0.0
    %528 = vmatpush.xpose.msra.mxu0 0.0
    %529 = vmatpush.xpose.msra.mxu0 0.0
    %530 = vmatpush.xpose.msra.mxu0 0.0
    %531 = vmatpush.xpose.msra.mxu0 0.0
    %532 = vmatpush.xpose.msra.mxu0 0.0
    %533 = vmatpush.xpose.msra.mxu0 0.0
    %534 = vmatpush.xpose.msra.mxu0 0.0
    %535 = vmatpush.xpose.msra.mxu0 %v518
    %536 = vmatmul.f32.gmra.mxu0 %v516
    %v537 = vpop.f32.mrf.mxu0
    %v538 = vadd.f32 0.0, %v537
    %539 = vdwg.mxu0
    %v540 = vmul.f32 %v538, 0.35355338
    %v541 = vsel %vm267, -1e+09, %v540
    %v542 = vsel %vm241, %v541, -inf
    %543 = vmax.xlane.f32.xlu0 %v542
    %v544 = vpop.xlane.xlu0 %543
    %v545 = vsub.f32 %v541, %v544
    %v546 = vmul.f32 %v545, 1.442695
    %v547 = vpow.pop %v546
    %v548 = vsel %vm241, %v547, 0.0
    %549 = vadd.xlane.f32.xlu0 %v548
    %v550 = vpop.xlane.xlu0 %549
    %v551 = vrcp.pop %v550
    %v552 = vmul.f32 %v547, %v551
    %553 = vrot.lane.b32.xlu0 %v225, 40
    %v554 = vpop.permute.xlu0 %553
    %v557 = vsel %vm241, %v552, 0
    %559 = vmatpush.msra.mxu0 0.0
    %560 = vmatpush.msra.mxu0 0.0
    %561 = vmatpush.msra.mxu0 0.0
    %562 = vmatpush.msra.mxu0 0.0
    %563 = vmatpush.msra.mxu0 0.0
    %564 = vmatpush.msra.mxu0 0.0
    %565 = vmatpush.msra.mxu0 0.0
    %566 = vmatpush.msra.mxu0 0.0
    %567 = vmatpush.msra.mxu0 0.0
    %568 = vmatpush.msra.mxu0 0.0
    %569 = vmatpush.msra.mxu0 0.0
    %570 = vmatpush.msra.mxu0 0.0
    %571 = vmatpush.msra.mxu0 0.0
    %572 = vmatpush.msra.mxu0 0.0
    %573 = vmatpush.msra.mxu0 0.0
    %574 = vmatpush.msra.mxu0 %v554
    %575 = vmatmul.f32.gmra.mxu0 %v557
    %v576 = vpop.f32.mrf.mxu0
    %v577 = vadd.f32 0.0, %v576
    %578 = vdwg.mxu0
    %v580 = vsel %vm241, %v577, 0
    %582 = vmatpush.msra.mxu0 0.0
    %583 = vmatpush.msra.mxu0 0.0
    %584 = vmatpush.msra.mxu0 0.0
    %585 = vmatpush.msra.mxu0 0.0
    %586 = vmatpush.msra.mxu0 0.0
    %587 = vmatpush.msra.mxu0 0.0
    %588 = vmatpush.msra.mxu0 0.0
    %589 = vmatpush.msra.mxu0 0.0
    %590 = vmatpush.msra.mxu0 0.0
    %591 = vmatpush.msra.mxu0 0.0
    %592 = vmatpush.msra.mxu0 0.0
    %593 = vmatpush.msra.mxu0 0.0
    %594 = vmatpush.msra.mxu0 0.0
    %595 = vmatpush.msra.mxu0 0.0
    %596 = vmatpush.msra.mxu0 0.0
    %597 = vmatpush.msra.mxu0 %v230
    %598 = vmatmul.f32.gmra.mxu0 %v580
    %v599 = vpop.f32.mrf.mxu0
    %v600 = vadd.f32 0.0, %v599
    %601 = vdwg.mxu0
    %v602 = vadd.f32 %v511, %v600
    %v603 = vsel %vm203, %v602, 0.0
    %604 = vadd.xlane.f32.xlu0 %v603
    %v605 = vpop.xlane.xlu0 %604
    %v606 = vrcp.pop 32.0
    %v607 = vmul.f32 32.0, %v606
    %v608 = vsub.f32 1.0, %v607
    %v609 = vmul.f32 %v606, %v608
    %v610 = vadd.f32 %v606, %v609
    %vm611 = vweird.f32 %v606
    %v612 = vsel %vm611, %v606, %v610
    %v613 = vmul.f32 %v605, %v612
    %v614 = vsub.f32 %v602, %v613
    %v615 = vmul.f32 %v614, %v614
    %v616 = vsel %vm203, %v615, 0.0
    %617 = vadd.xlane.f32.xlu0 %v616
    %v618 = vpop.xlane.xlu0 %617
    %v619 = vmul.f32 %v618, %v612
    %v620 = vadd.f32 %v619, 1e-05
    %v621 = vrsqrt.pop %v620
    %v622 = vmul.f32 %v621, %v620
    %v623 = vmul.f32 %v622, %v621
    %v624 = vmul.f32 0.5, %v623
    %v625 = vsub.f32 1.5, %v624
    %v626 = vmul.f32 %v621, %v625
    %vm627 = vweird.f32 %v620
    %vm628 = vweird.f32 %v621
    %vm629 = vmor %vm627, %vm628
    %v630 = vsel %vm629, %v621, %v626
    %v631 = vmul.f32 %v614, %v630
    %v633 = vperm.slane %v232, 0
    %v635 = vmul.f32 %v631, %v633
    %v637 = vperm.slane %v233, 0
    %v639 = vadd.f32 %v635, %v637
    %640 = vrot.lane.b32.xlu0 %v370, 8
    %v641 = vpop.permute.xlu0 %640
    %643 = vrot.lane.b32.xlu0 %v461, 16
    %v644 = vpop.permute.xlu0 %643
    %646 = vrot.lane.b32.xlu0 %v552, 24
    %v647 = vpop.permute.xlu0 %646
    %v649 = vsel %vm241, %v279, %v641
    %vm650 = vcmask 130048
    %v651 = vsel %vm650, %v649, %v644
    %vm652 = vcmask 195584
    %v653 = vsel %vm652, %v651, %v647
    %654 = vst.msk [vmem:[%s77] sm:$0xff] %vm203, %v653
    %v655 = vld [vmem:[%s21] sm:$0xff]
    %v656 = vld [vmem:[%s21 + $0x8] sm:$0xff]
    %v657 = vld [vmem:[%s21 + $0x10] sm:$0xff]
    %v658 = vld [vmem:[%s21 + $0x18] sm:$0xff]
    %v659 = vld [vmem:[%s23] sm:$0x1]
    %v660 = vld [vmem:[%s25] sm:$0xff]
    %v661 = vld [vmem:[%s25 + $0x8] sm:$0xff]
    %v662 = vld [vmem:[%s25 + $0x10] sm:$0xff]
    %v663 = vld [vmem:[%s25 + $0x18] sm:$0xff]
    %v664 = vld [vmem:[%s25 + $0x20] sm:$0xff]
    %v665 = vld [vmem:[%s25 + $0x28] sm:$0xff]
    %v666 = vld [vmem:[%s25 + $0x30] sm:$0xff]
    %v667 = vld [vmem:[%s25 + $0x38] sm:$0xff]
    %v668 = vld [vmem:[%s27] sm:$0x1]
    %v669 = vld [vmem:[%s29] sm:$0x1]
    %v670 = vld [vmem:[%s31] sm:$0x1]
    %v672 = vperm.slane %v659, 0
    %v675 = vsel %vm203, %v639, 0
    %677 = vmatpush.msra.mxu0 0.0
    %678 = vmatpush.msra.mxu0 0.0
    %679 = vmatpush.msra.mxu0 0.0
    %680 = vmatpush.msra.mxu0 0.0
    %681 = vmatpush.msra.mxu0 0.0
    %682 = vmatpush.msra.mxu0 0.0
    %683 = vmatpush.msra.mxu0 0.0
    %684 = vmatpush.msra.mxu0 0.0
    %685 = vmatpush.msra.mxu0 0.0
    %686 = vmatpush.msra.mxu0 0.0
    %687 = vmatpush.msra.mxu0 0.0
    %688 = vmatpush.msra.mxu0 0.0
    %689 = vmatpush.msra.mxu0 %v658
    %690 = vmatpush.msra.mxu0 %v657
    %691 = vmatpush.msra.mxu0 %v656
    %692 = vmatpush.msra.mxu0 %v655
    %693 = vmatmul.f32.gmra.mxu0 %v675
    %v694 = vpop.f32.mrf.mxu0
    %v695 = vadd.f32 %v672, %v694
    %696 = vdwg.mxu0
    %v697 = vmax.f32 %v695, 0.0
    %v699 = vperm.slane %v668, 0
    %vm701 = vcmask 523264
    %v703 = vsel %vm701, %v697, 0
    %705 = vmatpush.msra.mxu0 0.0
    %706 = vmatpush.msra.mxu0 0.0
    %707 = vmatpush.msra.mxu0 0.0
    %708 = vmatpush.msra.mxu0 0.0
    %709 = vmatpush.msra.mxu0 0.0
    %710 = vmatpush.msra.mxu0 0.0
    %711 = vmatpush.msra.mxu0 0.0
    %712 = vmatpush.msra.mxu0 0.0
    %713 = vmatpush.msra.mxu0 %v667
    %714 = vmatpush.msra.mxu0 %v666
    %715 = vmatpush.msra.mxu0 %v665
    %716 = vmatpush.msra.mxu0 %v664
    %717 = vmatpush.msra.mxu0 %v663
    %718 = vmatpush.msra.mxu0 %v662
    %719 = vmatpush.msra.mxu0 %v661
    %720 = vmatpush.msra.mxu0 %v660
    %721 = vmatmul.f32.gmra.mxu0 %v703
    %v722 = vpop.f32.mrf.mxu0
    %v723 = vadd.f32 %v699, %v722
    %724 = vdwg.mxu0
    %v725 = vadd.f32 %v723, %v639
    %v726 = vsel %vm203, %v725, 0.0
    %727 = vadd.xlane.f32.xlu0 %v726
    %v728 = vpop.xlane.xlu0 %727
    %v729 = vmul.f32 %v728, %v612
    %v730 = vsub.f32 %v725, %v729
    %v731 = vmul.f32 %v730, %v730
    %v732 = vsel %vm203, %v731, 0.0
    %733 = vadd.xlane.f32.xlu0 %v732
    %v734 = vpop.xlane.xlu0 %733
    %v735 = vmul.f32 %v734, %v612
    %v736 = vadd.f32 %v735, 1e-05
    %v737 = vrsqrt.pop %v736
    %v738 = vmul.f32 %v737, %v736
    %v739 = vmul.f32 %v738, %v737
    %v740 = vmul.f32 0.5, %v739
    %v741 = vsub.f32 1.5, %v740
    %v742 = vmul.f32 %v737, %v741
    %vm743 = vweird.f32 %v736
    %vm744 = vweird.f32 %v737
    %vm745 = vmor %vm743, %vm744
    %v746 = vsel %vm745, %v737, %v742
    %v747 = vmul.f32 %v730, %v746
    %v749 = vperm.slane %v669, 0
    %v751 = vmul.f32 %v747, %v749
    %v753 = vperm.slane %v670, 0
    %v755 = vadd.f32 %v751, %v753
    %s756 = scalar_lea.vmem %s9, 32
    %v757 = vld [vmem:[%s756] sm:$0xff]
    %v758 = vld [vmem:[%s756 + $0x8] sm:$0xff]
    %v759 = vld [vmem:[%s756 + $0x10] sm:$0xff]
    %v760 = vld [vmem:[%s756 + $0x18] sm:$0xff]
    %s761 = scalar_lea.vmem %s11, 1
    %v762 = vld [vmem:[%s761] sm:$0x1]
    %v764 = vperm.slane %v762, 0
    %v767 = vsel %vm203, %v755, 0
    %769 = vmatpush.msra.mxu0 0.0
    %770 = vmatpush.msra.mxu0 0.0
    %771 = vmatpush.msra.mxu0 0.0
    %772 = vmatpush.msra.mxu0 0.0
    %773 = vmatpush.msra.mxu0 0.0
    %774 = vmatpush.msra.mxu0 0.0
    %775 = vmatpush.msra.mxu0 0.0
    %776 = vmatpush.msra.mxu0 0.0
    %777 = vmatpush.msra.mxu0 0.0
    %778 = vmatpush.msra.mxu0 0.0
    %779 = vmatpush.msra.mxu0 0.0
    %780 = vmatpush.msra.mxu0 0.0
    %781 = vmatpush.msra.mxu0 %v760
    %782 = vmatpush.msra.mxu0 %v759
    %783 = vmatpush.msra.mxu0 %v758
    %784 = vmatpush.msra.mxu0 %v757
    %785 = vmatmul.f32.gmra.mxu0 %v767
    %v786 = vpop.f32.mrf.mxu0
    %v787 = vadd.f32 %v764, %v786
    %788 = vdwg.mxu0
    %s789 = scalar_lea.vmem %s13, 32
    %v790 = vld [vmem:[%s789] sm:$0xff]
    %v791 = vld [vmem:[%s789 + $0x8] sm:$0xff]
    %v792 = vld [vmem:[%s789 + $0x10] sm:$0xff]
    %v793 = vld [vmem:[%s789 + $0x18] sm:$0xff]
    %s794 = scalar_lea.vmem %s15, 1
    %v795 = vld [vmem:[%s794] sm:$0x1]
    %s796 = scalar_lea.vmem %s17, 1
    %v797 = vld [vmem:[%s796] sm:$0x1]
    %s798 = scalar_lea.vmem %s19, 1
    %v799 = vld [vmem:[%s798] sm:$0x1]
    %v801 = vperm.slane %v795, 0
    %v803 = vadd.f32 %v755, %v801
    %805 = vrot.lane.b32.xlu0 %v787, 96
    %v806 = vpop.permute.xlu0 %805
    %v807 = vsel %vm241, %v787, 0
    %v809 = vsel %vm241, %v806, 0
    %811 = vmatpush.xpose.msra.mxu0 0.0
    %812 = vmatpush.xpose.msra.mxu0 0.0
    %813 = vmatpush.xpose.msra.mxu0 0.0
    %814 = vmatpush.xpose.msra.mxu0 0.0
    %815 = vmatpush.xpose.msra.mxu0 0.0
    %816 = vmatpush.xpose.msra.mxu0 0.0
    %817 = vmatpush.xpose.msra.mxu0 0.0
    %818 = vmatpush.xpose.msra.mxu0 0.0
    %819 = vmatpush.xpose.msra.mxu0 0.0
    %820 = vmatpush.xpose.msra.mxu0 0.0
    %821 = vmatpush.xpose.msra.mxu0 0.0
    %822 = vmatpush.xpose.msra.mxu0 0.0
    %823 = vmatpush.xpose.msra.mxu0 0.0
    %824 = vmatpush.xpose.msra.mxu0 0.0
    %825 = vmatpush.xpose.msra.mxu0 0.0
    %826 = vmatpush.xpose.msra.mxu0 %v809
    %827 = vmatmul.f32.gmra.mxu0 %v807
    %v828 = vpop.f32.mrf.mxu0
    %v829 = vadd.f32 0.0, %v828
    %830 = vdwg.mxu0
    %v831 = vmul.f32 %v829, 0.35355338
    %v832 = vsel %vm267, -1e+09, %v831
    %v833 = vsel %vm241, %v832, -inf
    %834 = vmax.xlane.f32.xlu0 %v833
    %v835 = vpop.xlane.xlu0 %834
    %v836 = vsub.f32 %v832, %v835
    %v837 = vmul.f32 %v836, 1.442695
    %v838 = vpow.pop %v837
    %v839 = vsel %vm241, %v838, 0.0
    %840 = vadd.xlane.f32.xlu0 %v839
    %v841 = vpop.xlane.xlu0 %840
    %v842 = vrcp.pop %v841
    %v843 = vmul.f32 %v838, %v842
    %844 = vrot.lane.b32.xlu0 %v787, 64
    %v845 = vpop.permute.xlu0 %844
    %v848 = vsel %vm241, %v843, 0
    %850 = vmatpush.msra.mxu0 0.0
    %851 = vmatpush.msra.mxu0 0.0
    %852 = vmatpush.msra.mxu0 0.0
    %853 = vmatpush.msra.mxu0 0.0
    %854 = vmatpush.msra.mxu0 0.0
    %855 = vmatpush.msra.mxu0 0.0
    %856 = vmatpush.msra.mxu0 0.0
    %857 = vmatpush.msra.mxu0 0.0
    %858 = vmatpush.msra.mxu0 0.0
    %859 = vmatpush.msra.mxu0 0.0
    %860 = vmatpush.msra.mxu0 0.0
    %861 = vmatpush.msra.mxu0 0.0
    %862 = vmatpush.msra.mxu0 0.0
    %863 = vmatpush.msra.mxu0 0.0
    %864 = vmatpush.msra.mxu0 0.0
    %865 = vmatpush.msra.mxu0 %v845
    %866 = vmatmul.f32.gmra.mxu0 %v848
    %v867 = vpop.f32.mrf.mxu0
    %v868 = vadd.f32 0.0, %v867
    %869 = vdwg.mxu0
    %v871 = vsel %vm241, %v868, 0
    %873 = vmatpush.msra.mxu0 0.0
    %874 = vmatpush.msra.mxu0 0.0
    %875 = vmatpush.msra.mxu0 0.0
    %876 = vmatpush.msra.mxu0 0.0
    %877 = vmatpush.msra.mxu0 0.0
    %878 = vmatpush.msra.mxu0 0.0
    %879 = vmatpush.msra.mxu0 0.0
    %880 = vmatpush.msra.mxu0 0.0
    %881 = vmatpush.msra.mxu0 0.0
    %882 = vmatpush.msra.mxu0 0.0
    %883 = vmatpush.msra.mxu0 0.0
    %884 = vmatpush.msra.mxu0 0.0
    %885 = vmatpush.msra.mxu0 0.0
    %886 = vmatpush.msra.mxu0 0.0
    %887 = vmatpush.msra.mxu0 0.0
    %888 = vmatpush.msra.mxu0 %v790
    %889 = vmatmul.f32.gmra.mxu0 %v871
    %v890 = vpop.f32.mrf.mxu0
    %v891 = vadd.f32 0.0, %v890
    %892 = vdwg.mxu0
    %v893 = vadd.f32 %v803, %v891
    %894 = vrot.lane.b32.xlu0 %v787, 120
    %v895 = vpop.permute.xlu0 %894
    %896 = vrot.lane.b32.xlu0 %v787, 88
    %v897 = vpop.permute.xlu0 %896
    %v898 = vsel %vm241, %v895, 0
    %v900 = vsel %vm241, %v897, 0
    %902 = vmatpush.xpose.msra.mxu0 0.0
    %903 = vmatpush.xpose.msra.mxu0 0.0
    %904 = vmatpush.xpose.msra.mxu0 0.0
    %905 = vmatpush.xpose.msra.mxu0 0.0
    %906 = vmatpush.xpose.msra.mxu0 0.0
    %907 = vmatpush.xpose.msra.mxu0 0.0
    %908 = vmatpush.xpose.msra.mxu0 0.0
    %909 = vmatpush.xpose.msra.mxu0 0.0
    %910 = vmatpush.xpose.msra.mxu0 0.0
    %911 = vmatpush.xpose.msra.mxu0 0.0
    %912 = vmatpush.xpose.msra.mxu0 0.0
    %913 = vmatpush.xpose.msra.mxu0 0.0
    %914 = vmatpush.xpose.msra.mxu0 0.0
    %915 = vmatpush.xpose.msra.mxu0 0.0
    %916 = vmatpush.xpose.msra.mxu0 0.0
    %917 = vmatpush.xpose.msra.mxu0 %v900
    %918 = vmatmul.f32.gmra.mxu0 %v898
    %v919 = vpop.f32.mrf.mxu0
    %v920 = vadd.f32 0.0, %v919
    %921 = vdwg.mxu0
    %v922 = vmul.f32 %v920, 0.35355338
    %v923 = vsel %vm267, -1e+09, %v922
    %v924 = vsel %vm241, %v923, -inf
    %925 = vmax.xlane.f32.xlu0 %v924
    %v926 = vpop.xlane.xlu0 %925
    %v927 = vsub.f32 %v923, %v926
    %v928 = vmul.f32 %v927, 1.442695
    %v929 = vpow.pop %v928
    %v930 = vsel %vm241, %v929, 0.0
    %931 = vadd.xlane.f32.xlu0 %v930
    %v932 = vpop.xlane.xlu0 %931
    %v933 = vrcp.pop %v932
    %v934 = vmul.f32 %v929, %v933
    %935 = vrot.lane.b32.xlu0 %v787, 56
    %v936 = vpop.permute.xlu0 %935
    %v939 = vsel %vm241, %v934, 0
    %941 = vmatpush.msra.mxu0 0.0
    %942 = vmatpush.msra.mxu0 0.0
    %943 = vmatpush.msra.mxu0 0.0
    %944 = vmatpush.msra.mxu0 0.0
    %945 = vmatpush.msra.mxu0 0.0
    %946 = vmatpush.msra.mxu0 0.0
    %947 = vmatpush.msra.mxu0 0.0
    %948 = vmatpush.msra.mxu0 0.0
    %949 = vmatpush.msra.mxu0 0.0
    %950 = vmatpush.msra.mxu0 0.0
    %951 = vmatpush.msra.mxu0 0.0
    %952 = vmatpush.msra.mxu0 0.0
    %953 = vmatpush.msra.mxu0 0.0
    %954 = vmatpush.msra.mxu0 0.0
    %955 = vmatpush.msra.mxu0 0.0
    %956 = vmatpush.msra.mxu0 %v936
    %957 = vmatmul.f32.gmra.mxu0 %v939
    %v958 = vpop.f32.mrf.mxu0
    %v959 = vadd.f32 0.0, %v958
    %960 = vdwg.mxu0
    %v962 = vsel %vm241, %v959, 0
    %964 = vmatpush.msra.mxu0 0.0
    %965 = vmatpush.msra.mxu0 0.0
    %966 = vmatpush.msra.mxu0 0.0
    %967 = vmatpush.msra.mxu0 0.0
    %968 = vmatpush.msra.mxu0 0.0
    %969 = vmatpush.msra.mxu0 0.0
    %970 = vmatpush.msra.mxu0 0.0
    %971 = vmatpush.msra.mxu0 0.0
    %972 = vmatpush.msra.mxu0 0.0
    %973 = vmatpush.msra.mxu0 0.0
    %974 = vmatpush.msra.mxu0 0.0
    %975 = vmatpush.msra.mxu0 0.0
    %976 = vmatpush.msra.mxu0 0.0
    %977 = vmatpush.msra.mxu0 0.0
    %978 = vmatpush.msra.mxu0 0.0
    %979 = vmatpush.msra.mxu0 %v791
    %980 = vmatmul.f32.gmra.mxu0 %v962
    %v981 = vpop.f32.mrf.mxu0
    %v982 = vadd.f32 0.0, %v981
    %983 = vdwg.mxu0
    %v984 = vadd.f32 %v893, %v982
    %985 = vrot.lane.b32.xlu0 %v787, 112
    %v986 = vpop.permute.xlu0 %985
    %987 = vrot.lane.b32.xlu0 %v787, 80
    %v988 = vpop.permute.xlu0 %987
    %v989 = vsel %vm241, %v986, 0
    %v991 = vsel %vm241, %v988, 0
    %993 = vmatpush.xpose.msra.mxu0 0.0
    %994 = vmatpush.xpose.msra.mxu0 0.0
    %995 = vmatpush.xpose.msra.mxu0 0.0
    %996 = vmatpush.xpose.msra.mxu0 0.0
    %997 = vmatpush.xpose.msra.mxu0 0.0
    %998 = vmatpush.xpose.msra.mxu0 0.0
    %999 = vmatpush.xpose.msra.mxu0 0.0
    %1000 = vmatpush.xpose.msra.mxu0 0.0
    %1001 = vmatpush.xpose.msra.mxu0 0.0
    %1002 = vmatpush.xpose.msra.mxu0 0.0
    %1003 = vmatpush.xpose.msra.mxu0 0.0
    %1004 = vmatpush.xpose.msra.mxu0 0.0
    %1005 = vmatpush.xpose.msra.mxu0 0.0
    %1006 = vmatpush.xpose.msra.mxu0 0.0
    %1007 = vmatpush.xpose.msra.mxu0 0.0
    %1008 = vmatpush.xpose.msra.mxu0 %v991
    %1009 = vmatmul.f32.gmra.mxu0 %v989
    %v1010 = vpop.f32.mrf.mxu0
    %v1011 = vadd.f32 0.0, %v1010
    %1012 = vdwg.mxu0
    %v1013 = vmul.f32 %v1011, 0.35355338
    %v1014 = vsel %vm267, -1e+09, %v1013
    %v1015 = vsel %vm241, %v1014, -inf
    %1016 = vmax.xlane.f32.xlu0 %v1015
    %v1017 = vpop.xlane.xlu0 %1016
    %v1018 = vsub.f32 %v1014, %v1017
    %v1019 = vmul.f32 %v1018, 1.442695
    %v1020 = vpow.pop %v1019
    %v1021 = vsel %vm241, %v1020, 0.0
    %1022 = vadd.xlane.f32.xlu0 %v1021
    %v1023 = vpop.xlane.xlu0 %1022
    %v1024 = vrcp.pop %v1023
    %v1025 = vmul.f32 %v1020, %v1024
    %1026 = vrot.lane.b32.xlu0 %v787, 48
    %v1027 = vpop.permute.xlu0 %1026
    %v1030 = vsel %vm241, %v1025, 0
    %1032 = vmatpush.msra.mxu0 0.0
    %1033 = vmatpush.msra.mxu0 0.0
    %1034 = vmatpush.msra.mxu0 0.0
    %1035 = vmatpush.msra.mxu0 0.0
    %1036 = vmatpush.msra.mxu0 0.0
    %1037 = vmatpush.msra.mxu0 0.0
    %1038 = vmatpush.msra.mxu0 0.0
    %1039 = vmatpush.msra.mxu0 0.0
    %1040 = vmatpush.msra.mxu0 0.0
    %1041 = vmatpush.msra.mxu0 0.0
    %1042 = vmatpush.msra.mxu0 0.0
    %1043 = vmatpush.msra.mxu0 0.0
    %1044 = vmatpush.msra.mxu0 0.0
    %1045 = vmatpush.msra.mxu0 0.0
    %1046 = vmatpush.msra.mxu0 0.0
    %1047 = vmatpush.msra.mxu0 %v1027
    %1048 = vmatmul.f32.gmra.mxu0 %v1030
    %v1049 = vpop.f32.mrf.mxu0
    %v1050 = vadd.f32 0.0, %v1049
    %1051 = vdwg.mxu0
    %v1053 = vsel %vm241, %v1050, 0
    %1055 = vmatpush.msra.mxu0 0.0
    %1056 = vmatpush.msra.mxu0 0.0
    %1057 = vmatpush.msra.mxu0 0.0
    %1058 = vmatpush.msra.mxu0 0.0
    %1059 = vmatpush.msra.mxu0 0.0
    %1060 = vmatpush.msra.mxu0 0.0
    %1061 = vmatpush.msra.mxu0 0.0
    %1062 = vmatpush.msra.mxu0 0.0
    %1063 = vmatpush.msra.mxu0 0.0
    %1064 = vmatpush.msra.mxu0 0.0
    %1065 = vmatpush.msra.mxu0 0.0
    %1066 = vmatpush.msra.mxu0 0.0
    %1067 = vmatpush.msra.mxu0 0.0
    %1068 = vmatpush.msra.mxu0 0.0
    %1069 = vmatpush.msra.mxu0 0.0
    %1070 = vmatpush.msra.mxu0 %v792
    %1071 = vmatmul.f32.gmra.mxu0 %v1053
    %v1072 = vpop.f32.mrf.mxu0
    %v1073 = vadd.f32 0.0, %v1072
    %1074 = vdwg.mxu0
    %v1075 = vadd.f32 %v984, %v1073
    %1076 = vrot.lane.b32.xlu0 %v787, 104
    %v1077 = vpop.permute.xlu0 %1076
    %1078 = vrot.lane.b32.xlu0 %v787, 72
    %v1079 = vpop.permute.xlu0 %1078
    %v1080 = vsel %vm241, %v1077, 0
    %v1082 = vsel %vm241, %v1079, 0
    %1084 = vmatpush.xpose.msra.mxu0 0.0
    %1085 = vmatpush.xpose.msra.mxu0 0.0
    %1086 = vmatpush.xpose.msra.mxu0 0.0
    %1087 = vmatpush.xpose.msra.mxu0 0.0
    %1088 = vmatpush.xpose.msra.mxu0 0.0
    %1089 = vmatpush.xpose.msra.mxu0 0.0
    %1090 = vmatpush.xpose.msra.mxu0 0.0
    %1091 = vmatpush.xpose.msra.mxu0 0.0
    %1092 = vmatpush.xpose.msra.mxu0 0.0
    %1093 = vmatpush.xpose.msra.mxu0 0.0
    %1094 = vmatpush.xpose.msra.mxu0 0.0
    %1095 = vmatpush.xpose.msra.mxu0 0.0
    %1096 = vmatpush.xpose.msra.mxu0 0.0
    %1097 = vmatpush.xpose.msra.mxu0 0.0
    %1098 = vmatpush.xpose.msra.mxu0 0.0
    %1099 = vmatpush.xpose.msra.mxu0 %v1082
    %1100 = vmatmul.f32.gmra.mxu0 %v1080
    %v1101 = vpop.f32.mrf.mxu0
    %v1102 = vadd.f32 0.0, %v1101
    %1103 = vdwg.mxu0
    %v1104 = vmul.f32 %v1102, 0.35355338
    %v1105 = vsel %vm267, -1e+09, %v1104
    %v1106 = vsel %vm241, %v1105, -inf
    %1107 = vmax.xlane.f32.xlu0 %v1106
    %v1108 = vpop.xlane.xlu0 %1107
    %v1109 = vsub.f32 %v1105, %v1108
    %v1110 = vmul.f32 %v1109, 1.442695
    %v1111 = vpow.pop %v1110
    %v1112 = vsel %vm241, %v1111, 0.0
    %1113 = vadd.xlane.f32.xlu0 %v1112
    %v1114 = vpop.xlane.xlu0 %1113
    %v1115 = vrcp.pop %v1114
    %v1116 = vmul.f32 %v1111, %v1115
    %1117 = vrot.lane.b32.xlu0 %v787, 40
    %v1118 = vpop.permute.xlu0 %1117
    %v1121 = vsel %vm241, %v1116, 0
    %1123 = vmatpush.msra.mxu0 0.0
    %1124 = vmatpush.msra.mxu0 0.0
    %1125 = vmatpush.msra.mxu0 0.0
    %1126 = vmatpush.msra.mxu0 0.0
    %1127 = vmatpush.msra.mxu0 0.0
    %1128 = vmatpush.msra.mxu0 0.0
    %1129 = vmatpush.msra.mxu0 0.0
    %1130 = vmatpush.msra.mxu0 0.0
    %1131 = vmatpush.msra.mxu0 0.0
    %1132 = vmatpush.msra.mxu0 0.0
    %1133 = vmatpush.msra.mxu0 0.0
    %1134 = vmatpush.msra.mxu0 0.0
    %1135 = vmatpush.msra.mxu0 0.0
    %1136 = vmatpush.msra.mxu0 0.0
    %1137 = vmatpush.msra.mxu0 0.0
    %1138 = vmatpush.msra.mxu0 %v1118
    %1139 = vmatmul.f32.gmra.mxu0 %v1121
    %v1140 = vpop.f32.mrf.mxu0
    %v1141 = vadd.f32 0.0, %v1140
    %1142 = vdwg.mxu0
    %v1144 = vsel %vm241, %v1141, 0
    %1146 = vmatpush.msra.mxu0 0.0
    %1147 = vmatpush.msra.mxu0 0.0
    %1148 = vmatpush.msra.mxu0 0.0
    %1149 = vmatpush.msra.mxu0 0.0
    %1150 = vmatpush.msra.mxu0 0.0
    %1151 = vmatpush.msra.mxu0 0.0
    %1152 = vmatpush.msra.mxu0 0.0
    %1153 = vmatpush.msra.mxu0 0.0
    %1154 = vmatpush.msra.mxu0 0.0
    %1155 = vmatpush.msra.mxu0 0.0
    %1156 = vmatpush.msra.mxu0 0.0
    %1157 = vmatpush.msra.mxu0 0.0
    %1158 = vmatpush.msra.mxu0 0.0
    %1159 = vmatpush.msra.mxu0 0.0
    %1160 = vmatpush.msra.mxu0 0.0
    %1161 = vmatpush.msra.mxu0 %v793
    %1162 = vmatmul.f32.gmra.mxu0 %v1144
    %v1163 = vpop.f32.mrf.mxu0
    %v1164 = vadd.f32 0.0, %v1163
    %1165 = vdwg.mxu0
    %v1166 = vadd.f32 %v1075, %v1164
    %v1167 = vsel %vm203, %v1166, 0.0
    %1168 = vadd.xlane.f32.xlu0 %v1167
    %v1169 = vpop.xlane.xlu0 %1168
    %v1170 = vmul.f32 %v1169, %v612
    %v1171 = vsub.f32 %v1166, %v1170
    %v1172 = vmul.f32 %v1171, %v1171
    %v1173 = vsel %vm203, %v1172, 0.0
    %1174 = vadd.xlane.f32.xlu0 %v1173
    %v1175 = vpop.xlane.xlu0 %1174
    %v1176 = vmul.f32 %v1175, %v612
    %v1177 = vadd.f32 %v1176, 1e-05
    %v1178 = vrsqrt.pop %v1177
    %v1179 = vmul.f32 %v1178, %v1177
    %v1180 = vmul.f32 %v1179, %v1178
    %v1181 = vmul.f32 0.5, %v1180
    %v1182 = vsub.f32 1.5, %v1181
    %v1183 = vmul.f32 %v1178, %v1182
    %vm1184 = vweird.f32 %v1177
    %vm1185 = vweird.f32 %v1178
    %vm1186 = vmor %vm1184, %vm1185
    %v1187 = vsel %vm1186, %v1178, %v1183
    %v1188 = vmul.f32 %v1171, %v1187
    %v1190 = vperm.slane %v797, 0
    %v1192 = vmul.f32 %v1188, %v1190
    %v1194 = vperm.slane %v799, 0
    %v1196 = vadd.f32 %v1192, %v1194
    %1197 = vrot.lane.b32.xlu0 %v934, 8
    %v1198 = vpop.permute.xlu0 %1197
    %1200 = vrot.lane.b32.xlu0 %v1025, 16
    %v1201 = vpop.permute.xlu0 %1200
    %1203 = vrot.lane.b32.xlu0 %v1116, 24
    %v1204 = vpop.permute.xlu0 %1203
    %v1206 = vsel %vm241, %v843, %v1198
    %v1207 = vsel %vm650, %v1206, %v1201
    %v1208 = vsel %vm652, %v1207, %v1204
    %s1209 = scalar_lea.vmem %s77, 8
    %1210 = vst.msk [vmem:[%s1209] sm:$0xff] %vm203, %v1208
    %s1211 = scalar_lea.vmem %s21, 32
    %v1212 = vld [vmem:[%s1211] sm:$0xff]
    %v1213 = vld [vmem:[%s1211 + $0x8] sm:$0xff]
    %v1214 = vld [vmem:[%s1211 + $0x10] sm:$0xff]
    %v1215 = vld [vmem:[%s1211 + $0x18] sm:$0xff]
    %s1216 = scalar_lea.vmem %s23, 1
    %v1217 = vld [vmem:[%s1216] sm:$0x1]
    %s1218 = scalar_lea.vmem %s25, 64
    %v1219 = vld [vmem:[%s1218] sm:$0xff]
    %v1220 = vld [vmem:[%s1218 + $0x8] sm:$0xff]
    %v1221 = vld [vmem:[%s1218 + $0x10] sm:$0xff]
    %v1222 = vld [vmem:[%s1218 + $0x18] sm:$0xff]
    %v1223 = vld [vmem:[%s1218 + $0x20] sm:$0xff]
    %v1224 = vld [vmem:[%s1218 + $0x28] sm:$0xff]
    %v1225 = vld [vmem:[%s1218 + $0x30] sm:$0xff]
    %v1226 = vld [vmem:[%s1218 + $0x38] sm:$0xff]
    %s1227 = scalar_lea.vmem %s27, 1
    %v1228 = vld [vmem:[%s1227] sm:$0x1]
    %s1229 = scalar_lea.vmem %s29, 1
    %v1230 = vld [vmem:[%s1229] sm:$0x1]
    %s1231 = scalar_lea.vmem %s31, 1
    %v1232 = vld [vmem:[%s1231] sm:$0x1]
    %v1234 = vperm.slane %v1217, 0
    %v1237 = vsel %vm203, %v1196, 0
    %1239 = vmatpush.msra.mxu0 0.0
    %1240 = vmatpush.msra.mxu0 0.0
    %1241 = vmatpush.msra.mxu0 0.0
    %1242 = vmatpush.msra.mxu0 0.0
    %1243 = vmatpush.msra.mxu0 0.0
    %1244 = vmatpush.msra.mxu0 0.0
    %1245 = vmatpush.msra.mxu0 0.0
    %1246 = vmatpush.msra.mxu0 0.0
    %1247 = vmatpush.msra.mxu0 0.0
    %1248 = vmatpush.msra.mxu0 0.0
    %1249 = vmatpush.msra.mxu0 0.0
    %1250 = vmatpush.msra.mxu0 0.0
    %1251 = vmatpush.msra.mxu0 %v1215
    %1252 = vmatpush.msra.mxu0 %v1214
    %1253 = vmatpush.msra.mxu0 %v1213
    %1254 = vmatpush.msra.mxu0 %v1212
    %1255 = vmatmul.f32.gmra.mxu0 %v1237
    %v1256 = vpop.f32.mrf.mxu0
    %v1257 = vadd.f32 %v1234, %v1256
    %1258 = vdwg.mxu0
    %v1259 = vmax.f32 %v1257, 0.0
    %v1261 = vperm.slane %v1228, 0
    %v1264 = vsel %vm701, %v1259, 0
    %1266 = vmatpush.msra.mxu0 0.0
    %1267 = vmatpush.msra.mxu0 0.0
    %1268 = vmatpush.msra.mxu0 0.0
    %1269 = vmatpush.msra.mxu0 0.0
    %1270 = vmatpush.msra.mxu0 0.0
    %1271 = vmatpush.msra.mxu0 0.0
    %1272 = vmatpush.msra.mxu0 0.0
    %1273 = vmatpush.msra.mxu0 0.0
    %1274 = vmatpush.msra.mxu0 %v1226
    %1275 = vmatpush.msra.mxu0 %v1225
    %1276 = vmatpush.msra.mxu0 %v1224
    %1277 = vmatpush.msra.mxu0 %v1223
    %1278 = vmatpush.msra.mxu0 %v1222
    %1279 = vmatpush.msra.mxu0 %v1221
    %1280 = vmatpush.msra.mxu0 %v1220
    %1281 = vmatpush.msra.mxu0 %v1219
    %1282 = vmatmul.f32.gmra.mxu0 %v1264
    %v1283 = vpop.f32.mrf.mxu0
    %v1284 = vadd.f32 %v1261, %v1283
    %1285 = vdwg.mxu0
    %v1286 = vadd.f32 %v1284, %v1196
    %v1287 = vsel %vm203, %v1286, 0.0
    %1288 = vadd.xlane.f32.xlu0 %v1287
    %v1289 = vpop.xlane.xlu0 %1288
    %v1290 = vmul.f32 %v1289, %v612
    %v1291 = vsub.f32 %v1286, %v1290
    %v1292 = vmul.f32 %v1291, %v1291
    %v1293 = vsel %vm203, %v1292, 0.0
    %1294 = vadd.xlane.f32.xlu0 %v1293
    %v1295 = vpop.xlane.xlu0 %1294
    %v1296 = vmul.f32 %v1295, %v612
    %v1297 = vadd.f32 %v1296, 1e-05
    %v1298 = vrsqrt.pop %v1297
    %v1299 = vmul.f32 %v1298, %v1297
    %v1300 = vmul.f32 %v1299, %v1298
    %v1301 = vmul.f32 0.5, %v1300
    %v1302 = vsub.f32 1.5, %v1301
    %v1303 = vmul.f32 %v1298, %v1302
    %vm1304 = vweird.f32 %v1297
    %vm1305 = vweird.f32 %v1298
    %vm1306 = vmor %vm1304, %vm1305
    %v1307 = vsel %vm1306, %v1298, %v1303
    %v1308 = vmul.f32 %v1291, %v1307
    %v1310 = vperm.slane %v1230, 0
    %v1312 = vmul.f32 %v1308, %v1310
    %v1314 = vperm.slane %v1232, 0
    %v1316 = vadd.f32 %v1312, %v1314
    %v1317 = vld [vmem:[%s3] sm:$0xff]
    %v1318 = vld [vmem:[%s33] sm:$0xff]
    %v1319 = vld [vmem:[%s33 + $0x8] sm:$0xff]
    %v1320 = vld [vmem:[%s33 + $0x10] sm:$0xff]
    %v1321 = vld [vmem:[%s33 + $0x18] sm:$0xff]
    %v1322 = vld [vmem:[%s35] sm:$0x1]
    %v1324 = vperm.slane %v1322, 0
    %v1327 = vsel %vm203, %v1317, 0
    %1329 = vmatpush.msra.mxu0 0.0
    %1330 = vmatpush.msra.mxu0 0.0
    %1331 = vmatpush.msra.mxu0 0.0
    %1332 = vmatpush.msra.mxu0 0.0
    %1333 = vmatpush.msra.mxu0 0.0
    %1334 = vmatpush.msra.mxu0 0.0
    %1335 = vmatpush.msra.mxu0 0.0
    %1336 = vmatpush.msra.mxu0 0.0
    %1337 = vmatpush.msra.mxu0 0.0
    %1338 = vmatpush.msra.mxu0 0.0
    %1339 = vmatpush.msra.mxu0 0.0
    %1340 = vmatpush.msra.mxu0 0.0
    %1341 = vmatpush.msra.mxu0 %v1321
    %1342 = vmatpush.msra.mxu0 %v1320
    %1343 = vmatpush.msra.mxu0 %v1319
    %1344 = vmatpush.msra.mxu0 %v1318
    %1345 = vmatmul.f32.gmra.mxu0 %v1327
    %v1346 = vpop.f32.mrf.mxu0
    %v1347 = vadd.f32 %v1324, %v1346
    %1348 = vdwg.mxu0
    %v1349 = vld [vmem:[%s37] sm:$0xff]
    %v1350 = vld [vmem:[%s37 + $0x8] sm:$0xff]
    %v1351 = vld [vmem:[%s37 + $0x10] sm:$0xff]
    %v1352 = vld [vmem:[%s37 + $0x18] sm:$0xff]
    %v1353 = vld [vmem:[%s39] sm:$0x1]
    %v1354 = vld [vmem:[%s41] sm:$0x1]
    %v1355 = vld [vmem:[%s43] sm:$0x1]
    %v1357 = vperm.slane %v1353, 0
    %v1359 = vadd.f32 %v1317, %v1357
    %1361 = vrot.lane.b32.xlu0 %v1347, 96
    %v1362 = vpop.permute.xlu0 %1361
    %v1363 = vsel %vm241, %v1347, 0
    %v1365 = vsel %vm241, %v1362, 0
    %1367 = vmatpush.xpose.msra.mxu0 0.0
    %1368 = vmatpush.xpose.msra.mxu0 0.0
    %1369 = vmatpush.xpose.msra.mxu0 0.0
    %1370 = vmatpush.xpose.msra.mxu0 0.0
    %1371 = vmatpush.xpose.msra.mxu0 0.0
    %1372 = vmatpush.xpose.msra.mxu0 0.0
    %1373 = vmatpush.xpose.msra.mxu0 0.0
    %1374 = vmatpush.xpose.msra.mxu0 0.0
    %1375 = vmatpush.xpose.msra.mxu0 0.0
    %1376 = vmatpush.xpose.msra.mxu0 0.0
    %1377 = vmatpush.xpose.msra.mxu0 0.0
    %1378 = vmatpush.xpose.msra.mxu0 0.0
    %1379 = vmatpush.xpose.msra.mxu0 0.0
    %1380 = vmatpush.xpose.msra.mxu0 0.0
    %1381 = vmatpush.xpose.msra.mxu0 0.0
    %1382 = vmatpush.xpose.msra.mxu0 %v1365
    %1383 = vmatmul.f32.gmra.mxu0 %v1363
    %v1384 = vpop.f32.mrf.mxu0
    %v1385 = vadd.f32 0.0, %v1384
    %1386 = vdwg.mxu0
    %v1387 = vmul.f32 %v1385, 0.35355338
    %vm1388 = vcmp.gt.f32.partialorder %v193, 0.5
    %v1389 = vsel %vm1388, -1e+09, %v1387
    %v1390 = vsel %vm241, %v1389, -inf
    %1391 = vmax.xlane.f32.xlu0 %v1390
    %v1392 = vpop.xlane.xlu0 %1391
    %v1393 = vsub.f32 %v1389, %v1392
    %v1394 = vmul.f32 %v1393, 1.442695
    %v1395 = vpow.pop %v1394
    %v1396 = vsel %vm241, %v1395, 0.0
    %1397 = vadd.xlane.f32.xlu0 %v1396
    %v1398 = vpop.xlane.xlu0 %1397
    %v1399 = vrcp.pop %v1398
    %v1400 = vmul.f32 %v1395, %v1399
    %1401 = vrot.lane.b32.xlu0 %v1347, 64
    %v1402 = vpop.permute.xlu0 %1401
    %v1405 = vsel %vm241, %v1400, 0
    %1407 = vmatpush.msra.mxu0 0.0
    %1408 = vmatpush.msra.mxu0 0.0
    %1409 = vmatpush.msra.mxu0 0.0
    %1410 = vmatpush.msra.mxu0 0.0
    %1411 = vmatpush.msra.mxu0 0.0
    %1412 = vmatpush.msra.mxu0 0.0
    %1413 = vmatpush.msra.mxu0 0.0
    %1414 = vmatpush.msra.mxu0 0.0
    %1415 = vmatpush.msra.mxu0 0.0
    %1416 = vmatpush.msra.mxu0 0.0
    %1417 = vmatpush.msra.mxu0 0.0
    %1418 = vmatpush.msra.mxu0 0.0
    %1419 = vmatpush.msra.mxu0 0.0
    %1420 = vmatpush.msra.mxu0 0.0
    %1421 = vmatpush.msra.mxu0 0.0
    %1422 = vmatpush.msra.mxu0 %v1402
    %1423 = vmatmul.f32.gmra.mxu0 %v1405
    %v1424 = vpop.f32.mrf.mxu0
    %v1425 = vadd.f32 0.0, %v1424
    %1426 = vdwg.mxu0
    %v1428 = vsel %vm241, %v1425, 0
    %1430 = vmatpush.msra.mxu0 0.0
    %1431 = vmatpush.msra.mxu0 0.0
    %1432 = vmatpush.msra.mxu0 0.0
    %1433 = vmatpush.msra.mxu0 0.0
    %1434 = vmatpush.msra.mxu0 0.0
    %1435 = vmatpush.msra.mxu0 0.0
    %1436 = vmatpush.msra.mxu0 0.0
    %1437 = vmatpush.msra.mxu0 0.0
    %1438 = vmatpush.msra.mxu0 0.0
    %1439 = vmatpush.msra.mxu0 0.0
    %1440 = vmatpush.msra.mxu0 0.0
    %1441 = vmatpush.msra.mxu0 0.0
    %1442 = vmatpush.msra.mxu0 0.0
    %1443 = vmatpush.msra.mxu0 0.0
    %1444 = vmatpush.msra.mxu0 0.0
    %1445 = vmatpush.msra.mxu0 %v1349
    %1446 = vmatmul.f32.gmra.mxu0 %v1428
    %v1447 = vpop.f32.mrf.mxu0
    %v1448 = vadd.f32 0.0, %v1447
    %1449 = vdwg.mxu0
    %v1450 = vadd.f32 %v1359, %v1448
    %1451 = vrot.lane.b32.xlu0 %v1347, 120
    %v1452 = vpop.permute.xlu0 %1451
    %1453 = vrot.lane.b32.xlu0 %v1347, 88
    %v1454 = vpop.permute.xlu0 %1453
    %v1455 = vsel %vm241, %v1452, 0
    %v1457 = vsel %vm241, %v1454, 0
    %1459 = vmatpush.xpose.msra.mxu0 0.0
    %1460 = vmatpush.xpose.msra.mxu0 0.0
    %1461 = vmatpush.xpose.msra.mxu0 0.0
    %1462 = vmatpush.xpose.msra.mxu0 0.0
    %1463 = vmatpush.xpose.msra.mxu0 0.0
    %1464 = vmatpush.xpose.msra.mxu0 0.0
    %1465 = vmatpush.xpose.msra.mxu0 0.0
    %1466 = vmatpush.xpose.msra.mxu0 0.0
    %1467 = vmatpush.xpose.msra.mxu0 0.0
    %1468 = vmatpush.xpose.msra.mxu0 0.0
    %1469 = vmatpush.xpose.msra.mxu0 0.0
    %1470 = vmatpush.xpose.msra.mxu0 0.0
    %1471 = vmatpush.xpose.msra.mxu0 0.0
    %1472 = vmatpush.xpose.msra.mxu0 0.0
    %1473 = vmatpush.xpose.msra.mxu0 0.0
    %1474 = vmatpush.xpose.msra.mxu0 %v1457
    %1475 = vmatmul.f32.gmra.mxu0 %v1455
    %v1476 = vpop.f32.mrf.mxu0
    %v1477 = vadd.f32 0.0, %v1476
    %1478 = vdwg.mxu0
    %v1479 = vmul.f32 %v1477, 0.35355338
    %v1480 = vsel %vm1388, -1e+09, %v1479
    %v1481 = vsel %vm241, %v1480, -inf
    %1482 = vmax.xlane.f32.xlu0 %v1481
    %v1483 = vpop.xlane.xlu0 %1482
    %v1484 = vsub.f32 %v1480, %v1483
    %v1485 = vmul.f32 %v1484, 1.442695
    %v1486 = vpow.pop %v1485
    %v1487 = vsel %vm241, %v1486, 0.0
    %1488 = vadd.xlane.f32.xlu0 %v1487
    %v1489 = vpop.xlane.xlu0 %1488
    %v1490 = vrcp.pop %v1489
    %v1491 = vmul.f32 %v1486, %v1490
    %1492 = vrot.lane.b32.xlu0 %v1347, 56
    %v1493 = vpop.permute.xlu0 %1492
    %v1496 = vsel %vm241, %v1491, 0
    %1498 = vmatpush.msra.mxu0 0.0
    %1499 = vmatpush.msra.mxu0 0.0
    %1500 = vmatpush.msra.mxu0 0.0
    %1501 = vmatpush.msra.mxu0 0.0
    %1502 = vmatpush.msra.mxu0 0.0
    %1503 = vmatpush.msra.mxu0 0.0
    %1504 = vmatpush.msra.mxu0 0.0
    %1505 = vmatpush.msra.mxu0 0.0
    %1506 = vmatpush.msra.mxu0 0.0
    %1507 = vmatpush.msra.mxu0 0.0
    %1508 = vmatpush.msra.mxu0 0.0
    %1509 = vmatpush.msra.mxu0 0.0
    %1510 = vmatpush.msra.mxu0 0.0
    %1511 = vmatpush.msra.mxu0 0.0
    %1512 = vmatpush.msra.mxu0 0.0
    %1513 = vmatpush.msra.mxu0 %v1493
    %1514 = vmatmul.f32.gmra.mxu0 %v1496
    %v1515 = vpop.f32.mrf.mxu0
    %v1516 = vadd.f32 0.0, %v1515
    %1517 = vdwg.mxu0
    %v1519 = vsel %vm241, %v1516, 0
    %1521 = vmatpush.msra.mxu0 0.0
    %1522 = vmatpush.msra.mxu0 0.0
    %1523 = vmatpush.msra.mxu0 0.0
    %1524 = vmatpush.msra.mxu0 0.0
    %1525 = vmatpush.msra.mxu0 0.0
    %1526 = vmatpush.msra.mxu0 0.0
    %1527 = vmatpush.msra.mxu0 0.0
    %1528 = vmatpush.msra.mxu0 0.0
    %1529 = vmatpush.msra.mxu0 0.0
    %1530 = vmatpush.msra.mxu0 0.0
    %1531 = vmatpush.msra.mxu0 0.0
    %1532 = vmatpush.msra.mxu0 0.0
    %1533 = vmatpush.msra.mxu0 0.0
    %1534 = vmatpush.msra.mxu0 0.0
    %1535 = vmatpush.msra.mxu0 0.0
    %1536 = vmatpush.msra.mxu0 %v1350
    %1537 = vmatmul.f32.gmra.mxu0 %v1519
    %v1538 = vpop.f32.mrf.mxu0
    %v1539 = vadd.f32 0.0, %v1538
    %1540 = vdwg.mxu0
    %v1541 = vadd.f32 %v1450, %v1539
    %1542 = vrot.lane.b32.xlu0 %v1347, 112
    %v1543 = vpop.permute.xlu0 %1542
    %1544 = vrot.lane.b32.xlu0 %v1347, 80
    %v1545 = vpop.permute.xlu0 %1544
    %v1546 = vsel %vm241, %v1543, 0
    %v1548 = vsel %vm241, %v1545, 0
    %1550 = vmatpush.xpose.msra.mxu0 0.0
    %1551 = vmatpush.xpose.msra.mxu0 0.0
    %1552 = vmatpush.xpose.msra.mxu0 0.0
    %1553 = vmatpush.xpose.msra.mxu0 0.0
    %1554 = vmatpush.xpose.msra.mxu0 0.0
    %1555 = vmatpush.xpose.msra.mxu0 0.0
    %1556 = vmatpush.xpose.msra.mxu0 0.0
    %1557 = vmatpush.xpose.msra.mxu0 0.0
    %1558 = vmatpush.xpose.msra.mxu0 0.0
    %1559 = vmatpush.xpose.msra.mxu0 0.0
    %1560 = vmatpush.xpose.msra.mxu0 0.0
    %1561 = vmatpush.xpose.msra.mxu0 0.0
    %1562 = vmatpush.xpose.msra.mxu0 0.0
    %1563 = vmatpush.xpose.msra.mxu0 0.0
    %1564 = vmatpush.xpose.msra.mxu0 0.0
    %1565 = vmatpush.xpose.msra.mxu0 %v1548
    %1566 = vmatmul.f32.gmra.mxu0 %v1546
    %v1567 = vpop.f32.mrf.mxu0
    %v1568 = vadd.f32 0.0, %v1567
    %1569 = vdwg.mxu0
    %v1570 = vmul.f32 %v1568, 0.35355338
    %v1571 = vsel %vm1388, -1e+09, %v1570
    %v1572 = vsel %vm241, %v1571, -inf
    %1573 = vmax.xlane.f32.xlu0 %v1572
    %v1574 = vpop.xlane.xlu0 %1573
    %v1575 = vsub.f32 %v1571, %v1574
    %v1576 = vmul.f32 %v1575, 1.442695
    %v1577 = vpow.pop %v1576
    %v1578 = vsel %vm241, %v1577, 0.0
    %1579 = vadd.xlane.f32.xlu0 %v1578
    %v1580 = vpop.xlane.xlu0 %1579
    %v1581 = vrcp.pop %v1580
    %v1582 = vmul.f32 %v1577, %v1581
    %1583 = vrot.lane.b32.xlu0 %v1347, 48
    %v1584 = vpop.permute.xlu0 %1583
    %v1587 = vsel %vm241, %v1582, 0
    %1589 = vmatpush.msra.mxu0 0.0
    %1590 = vmatpush.msra.mxu0 0.0
    %1591 = vmatpush.msra.mxu0 0.0
    %1592 = vmatpush.msra.mxu0 0.0
    %1593 = vmatpush.msra.mxu0 0.0
    %1594 = vmatpush.msra.mxu0 0.0
    %1595 = vmatpush.msra.mxu0 0.0
    %1596 = vmatpush.msra.mxu0 0.0
    %1597 = vmatpush.msra.mxu0 0.0
    %1598 = vmatpush.msra.mxu0 0.0
    %1599 = vmatpush.msra.mxu0 0.0
    %1600 = vmatpush.msra.mxu0 0.0
    %1601 = vmatpush.msra.mxu0 0.0
    %1602 = vmatpush.msra.mxu0 0.0
    %1603 = vmatpush.msra.mxu0 0.0
    %1604 = vmatpush.msra.mxu0 %v1584
    %1605 = vmatmul.f32.gmra.mxu0 %v1587
    %v1606 = vpop.f32.mrf.mxu0
    %v1607 = vadd.f32 0.0, %v1606
    %1608 = vdwg.mxu0
    %v1610 = vsel %vm241, %v1607, 0
    %1612 = vmatpush.msra.mxu0 0.0
    %1613 = vmatpush.msra.mxu0 0.0
    %1614 = vmatpush.msra.mxu0 0.0
    %1615 = vmatpush.msra.mxu0 0.0
    %1616 = vmatpush.msra.mxu0 0.0
    %1617 = vmatpush.msra.mxu0 0.0
    %1618 = vmatpush.msra.mxu0 0.0
    %1619 = vmatpush.msra.mxu0 0.0
    %1620 = vmatpush.msra.mxu0 0.0
    %1621 = vmatpush.msra.mxu0 0.0
    %1622 = vmatpush.msra.mxu0 0.0
    %1623 = vmatpush.msra.mxu0 0.0
    %1624 = vmatpush.msra.mxu0 0.0
    %1625 = vmatpush.msra.mxu0 0.0
    %1626 = vmatpush.msra.mxu0 0.0
    %1627 = vmatpush.msra.mxu0 %v1351
    %1628 = vmatmul.f32.gmra.mxu0 %v1610
    %v1629 = vpop.f32.mrf.mxu0
    %v1630 = vadd.f32 0.0, %v1629
    %1631 = vdwg.mxu0
    %v1632 = vadd.f32 %v1541, %v1630
    %1633 = vrot.lane.b32.xlu0 %v1347, 104
    %v1634 = vpop.permute.xlu0 %1633
    %1635 = vrot.lane.b32.xlu0 %v1347, 72
    %v1636 = vpop.permute.xlu0 %1635
    %v1637 = vsel %vm241, %v1634, 0
    %v1639 = vsel %vm241, %v1636, 0
    %1641 = vmatpush.xpose.msra.mxu0 0.0
    %1642 = vmatpush.xpose.msra.mxu0 0.0
    %1643 = vmatpush.xpose.msra.mxu0 0.0
    %1644 = vmatpush.xpose.msra.mxu0 0.0
    %1645 = vmatpush.xpose.msra.mxu0 0.0
    %1646 = vmatpush.xpose.msra.mxu0 0.0
    %1647 = vmatpush.xpose.msra.mxu0 0.0
    %1648 = vmatpush.xpose.msra.mxu0 0.0
    %1649 = vmatpush.xpose.msra.mxu0 0.0
    %1650 = vmatpush.xpose.msra.mxu0 0.0
    %1651 = vmatpush.xpose.msra.mxu0 0.0
    %1652 = vmatpush.xpose.msra.mxu0 0.0
    %1653 = vmatpush.xpose.msra.mxu0 0.0
    %1654 = vmatpush.xpose.msra.mxu0 0.0
    %1655 = vmatpush.xpose.msra.mxu0 0.0
    %1656 = vmatpush.xpose.msra.mxu0 %v1639
    %1657 = vmatmul.f32.gmra.mxu0 %v1637
    %v1658 = vpop.f32.mrf.mxu0
    %v1659 = vadd.f32 0.0, %v1658
    %1660 = vdwg.mxu0
    %v1661 = vmul.f32 %v1659, 0.35355338
    %v1662 = vsel %vm1388, -1e+09, %v1661
    %v1663 = vsel %vm241, %v1662, -inf
    %1664 = vmax.xlane.f32.xlu0 %v1663
    %v1665 = vpop.xlane.xlu0 %1664
    %v1666 = vsub.f32 %v1662, %v1665
    %v1667 = vmul.f32 %v1666, 1.442695
    %v1668 = vpow.pop %v1667
    %v1669 = vsel %vm241, %v1668, 0.0
    %1670 = vadd.xlane.f32.xlu0 %v1669
    %v1671 = vpop.xlane.xlu0 %1670
    %v1672 = vrcp.pop %v1671
    %v1673 = vmul.f32 %v1668, %v1672
    %1674 = vrot.lane.b32.xlu0 %v1347, 40
    %v1675 = vpop.permute.xlu0 %1674
    %v1678 = vsel %vm241, %v1673, 0
    %1680 = vmatpush.msra.mxu0 0.0
    %1681 = vmatpush.msra.mxu0 0.0
    %1682 = vmatpush.msra.mxu0 0.0
    %1683 = vmatpush.msra.mxu0 0.0
    %1684 = vmatpush.msra.mxu0 0.0
    %1685 = vmatpush.msra.mxu0 0.0
    %1686 = vmatpush.msra.mxu0 0.0
    %1687 = vmatpush.msra.mxu0 0.0
    %1688 = vmatpush.msra.mxu0 0.0
    %1689 = vmatpush.msra.mxu0 0.0
    %1690 = vmatpush.msra.mxu0 0.0
    %1691 = vmatpush.msra.mxu0 0.0
    %1692 = vmatpush.msra.mxu0 0.0
    %1693 = vmatpush.msra.mxu0 0.0
    %1694 = vmatpush.msra.mxu0 0.0
    %1695 = vmatpush.msra.mxu0 %v1675
    %1696 = vmatmul.f32.gmra.mxu0 %v1678
    %v1697 = vpop.f32.mrf.mxu0
    %v1698 = vadd.f32 0.0, %v1697
    %1699 = vdwg.mxu0
    %v1701 = vsel %vm241, %v1698, 0
    %1703 = vmatpush.msra.mxu0 0.0
    %1704 = vmatpush.msra.mxu0 0.0
    %1705 = vmatpush.msra.mxu0 0.0
    %1706 = vmatpush.msra.mxu0 0.0
    %1707 = vmatpush.msra.mxu0 0.0
    %1708 = vmatpush.msra.mxu0 0.0
    %1709 = vmatpush.msra.mxu0 0.0
    %1710 = vmatpush.msra.mxu0 0.0
    %1711 = vmatpush.msra.mxu0 0.0
    %1712 = vmatpush.msra.mxu0 0.0
    %1713 = vmatpush.msra.mxu0 0.0
    %1714 = vmatpush.msra.mxu0 0.0
    %1715 = vmatpush.msra.mxu0 0.0
    %1716 = vmatpush.msra.mxu0 0.0
    %1717 = vmatpush.msra.mxu0 0.0
    %1718 = vmatpush.msra.mxu0 %v1352
    %1719 = vmatmul.f32.gmra.mxu0 %v1701
    %v1720 = vpop.f32.mrf.mxu0
    %v1721 = vadd.f32 0.0, %v1720
    %1722 = vdwg.mxu0
    %v1723 = vadd.f32 %v1632, %v1721
    %v1724 = vsel %vm203, %v1723, 0.0
    %1725 = vadd.xlane.f32.xlu0 %v1724
    %v1726 = vpop.xlane.xlu0 %1725
    %v1727 = vmul.f32 %v1726, %v612
    %v1728 = vsub.f32 %v1723, %v1727
    %v1729 = vmul.f32 %v1728, %v1728
    %v1730 = vsel %vm203, %v1729, 0.0
    %1731 = vadd.xlane.f32.xlu0 %v1730
    %v1732 = vpop.xlane.xlu0 %1731
    %v1733 = vmul.f32 %v1732, %v612
    %v1734 = vadd.f32 %v1733, 1e-05
    %v1735 = vrsqrt.pop %v1734
    %v1736 = vmul.f32 %v1735, %v1734
    %v1737 = vmul.f32 %v1736, %v1735
    %v1738 = vmul.f32 0.5, %v1737
    %v1739 = vsub.f32 1.5, %v1738
    %v1740 = vmul.f32 %v1735, %v1739
    %vm1741 = vweird.f32 %v1734
    %vm1742 = vweird.f32 %v1735
    %vm1743 = vmor %vm1741, %vm1742
    %v1744 = vsel %vm1743, %v1735, %v1740
    %v1745 = vmul.f32 %v1728, %v1744
    %v1747 = vperm.slane %v1354, 0
    %v1749 = vmul.f32 %v1745, %v1747
    %v1751 = vperm.slane %v1355, 0
    %v1753 = vadd.f32 %v1749, %v1751
    %1754 = vrot.lane.b32.xlu0 %v1491, 8
    %v1755 = vpop.permute.xlu0 %1754
    %1757 = vrot.lane.b32.xlu0 %v1582, 16
    %v1758 = vpop.permute.xlu0 %1757
    %1760 = vrot.lane.b32.xlu0 %v1673, 24
    %v1761 = vpop.permute.xlu0 %1760
    %v1763 = vsel %vm241, %v1400, %v1755
    %v1764 = vsel %vm650, %v1763, %v1758
    %v1765 = vsel %vm652, %v1764, %v1761
    %1766 = vst.msk [vmem:[%s79] sm:$0xff] %vm203, %v1765
    %v1767 = vld [vmem:[%s45] sm:$0xff]
    %v1768 = vld [vmem:[%s45 + $0x8] sm:$0xff]
    %v1769 = vld [vmem:[%s45 + $0x10] sm:$0xff]
    %v1770 = vld [vmem:[%s45 + $0x18] sm:$0xff]
    %v1771 = vld [vmem:[%s47] sm:$0x1]
    %v1773 = vperm.slane %v1771, 0
    %v1776 = vsel %vm203, %v1753, 0
    %1778 = vmatpush.msra.mxu0 0.0
    %1779 = vmatpush.msra.mxu0 0.0
    %1780 = vmatpush.msra.mxu0 0.0
    %1781 = vmatpush.msra.mxu0 0.0
    %1782 = vmatpush.msra.mxu0 0.0
    %1783 = vmatpush.msra.mxu0 0.0
    %1784 = vmatpush.msra.mxu0 0.0
    %1785 = vmatpush.msra.mxu0 0.0
    %1786 = vmatpush.msra.mxu0 0.0
    %1787 = vmatpush.msra.mxu0 0.0
    %1788 = vmatpush.msra.mxu0 0.0
    %1789 = vmatpush.msra.mxu0 0.0
    %1790 = vmatpush.msra.mxu0 %v1770
    %1791 = vmatpush.msra.mxu0 %v1769
    %1792 = vmatpush.msra.mxu0 %v1768
    %1793 = vmatpush.msra.mxu0 %v1767
    %1794 = vmatmul.f32.gmra.mxu0 %v1776
    %v1795 = vpop.f32.mrf.mxu0
    %v1796 = vadd.f32 %v1773, %v1795
    %1797 = vdwg.mxu0
    %v1798 = vld [vmem:[%s49] sm:$0xff]
    %v1799 = vld [vmem:[%s49 + $0x8] sm:$0xff]
    %v1800 = vld [vmem:[%s49 + $0x10] sm:$0xff]
    %v1801 = vld [vmem:[%s49 + $0x18] sm:$0xff]
    %v1802 = vld [vmem:[%s51] sm:$0x1]
    %v1804 = vperm.slane %v1802, 0
    %v1807 = vsel %vm203, %v1316, 0
    %1809 = vmatpush.msra.mxu0 0.0
    %1810 = vmatpush.msra.mxu0 0.0
    %1811 = vmatpush.msra.mxu0 0.0
    %1812 = vmatpush.msra.mxu0 0.0
    %1813 = vmatpush.msra.mxu0 0.0
    %1814 = vmatpush.msra.mxu0 0.0
    %1815 = vmatpush.msra.mxu0 0.0
    %1816 = vmatpush.msra.mxu0 0.0
    %1817 = vmatpush.msra.mxu0 0.0
    %1818 = vmatpush.msra.mxu0 0.0
    %1819 = vmatpush.msra.mxu0 0.0
    %1820 = vmatpush.msra.mxu0 0.0
    %1821 = vmatpush.msra.mxu0 %v1801
    %1822 = vmatpush.msra.mxu0 %v1800
    %1823 = vmatpush.msra.mxu0 %v1799
    %1824 = vmatpush.msra.mxu0 %v1798
    %1825 = vmatmul.f32.gmra.mxu0 %v1807
    %v1826 = vpop.f32.mrf.mxu0
    %v1827 = vadd.f32 %v1804, %v1826
    %1828 = vdwg.mxu0
    %v1829 = vld [vmem:[%s53] sm:$0xff]
    %v1830 = vld [vmem:[%s53 + $0x8] sm:$0xff]
    %v1831 = vld [vmem:[%s53 + $0x10] sm:$0xff]
    %v1832 = vld [vmem:[%s53 + $0x18] sm:$0xff]
    %v1833 = vld [vmem:[%s55] sm:$0x1]
    %v1834 = vld [vmem:[%s57] sm:$0x1]
    %v1835 = vld [vmem:[%s59] sm:$0x1]
    %v1837 = vperm.slane %v1833, 0
    %v1839 = vadd.f32 %v1753, %v1837
    %v1841 = vsel %vm241, %v1796, 0
    %v1844 = vsel %vm241, %v1827, 0
    %1846 = vmatpush.xpose.msra.mxu0 0.0
    %1847 = vmatpush.xpose.msra.mxu0 0.0
    %1848 = vmatpush.xpose.msra.mxu0 0.0
    %1849 = vmatpush.xpose.msra.mxu0 0.0
    %1850 = vmatpush.xpose.msra.mxu0 0.0
    %1851 = vmatpush.xpose.msra.mxu0 0.0
    %1852 = vmatpush.xpose.msra.mxu0 0.0
    %1853 = vmatpush.xpose.msra.mxu0 0.0
    %1854 = vmatpush.xpose.msra.mxu0 0.0
    %1855 = vmatpush.xpose.msra.mxu0 0.0
    %1856 = vmatpush.xpose.msra.mxu0 0.0
    %1857 = vmatpush.xpose.msra.mxu0 0.0
    %1858 = vmatpush.xpose.msra.mxu0 0.0
    %1859 = vmatpush.xpose.msra.mxu0 0.0
    %1860 = vmatpush.xpose.msra.mxu0 0.0
    %1861 = vmatpush.xpose.msra.mxu0 %v1844
    %1862 = vmatmul.f32.gmra.mxu0 %v1841
    %v1863 = vpop.f32.mrf.mxu0
    %v1864 = vadd.f32 0.0, %v1863
    %1865 = vdwg.mxu0
    %v1866 = vmul.f32 %v1864, 0.35355338
    %v1867 = vsel %vm267, -1e+09, %v1866
    %v1868 = vsel %vm241, %v1867, -inf
    %1869 = vmax.xlane.f32.xlu0 %v1868
    %v1870 = vpop.xlane.xlu0 %1869
    %v1871 = vsub.f32 %v1867, %v1870
    %v1872 = vmul.f32 %v1871, 1.442695
    %v1873 = vpow.pop %v1872
    %v1874 = vsel %vm241, %v1873, 0.0
    %1875 = vadd.xlane.f32.xlu0 %v1874
    %v1876 = vpop.xlane.xlu0 %1875
    %v1877 = vrcp.pop %v1876
    %v1878 = vmul.f32 %v1873, %v1877
    %1879 = vrot.lane.b32.xlu0 %v1827, 96
    %v1880 = vpop.permute.xlu0 %1879
    %v1883 = vsel %vm241, %v1878, 0
    %1885 = vmatpush.msra.mxu0 0.0
    %1886 = vmatpush.msra.mxu0 0.0
    %1887 = vmatpush.msra.mxu0 0.0
    %1888 = vmatpush.msra.mxu0 0.0
    %1889 = vmatpush.msra.mxu0 0.0
    %1890 = vmatpush.msra.mxu0 0.0
    %1891 = vmatpush.msra.mxu0 0.0
    %1892 = vmatpush.msra.mxu0 0.0
    %1893 = vmatpush.msra.mxu0 0.0
    %1894 = vmatpush.msra.mxu0 0.0
    %1895 = vmatpush.msra.mxu0 0.0
    %1896 = vmatpush.msra.mxu0 0.0
    %1897 = vmatpush.msra.mxu0 0.0
    %1898 = vmatpush.msra.mxu0 0.0
    %1899 = vmatpush.msra.mxu0 0.0
    %1900 = vmatpush.msra.mxu0 %v1880
    %1901 = vmatmul.f32.gmra.mxu0 %v1883
    %v1902 = vpop.f32.mrf.mxu0
    %v1903 = vadd.f32 0.0, %v1902
    %1904 = vdwg.mxu0
    %v1906 = vsel %vm241, %v1903, 0
    %1908 = vmatpush.msra.mxu0 0.0
    %1909 = vmatpush.msra.mxu0 0.0
    %1910 = vmatpush.msra.mxu0 0.0
    %1911 = vmatpush.msra.mxu0 0.0
    %1912 = vmatpush.msra.mxu0 0.0
    %1913 = vmatpush.msra.mxu0 0.0
    %1914 = vmatpush.msra.mxu0 0.0
    %1915 = vmatpush.msra.mxu0 0.0
    %1916 = vmatpush.msra.mxu0 0.0
    %1917 = vmatpush.msra.mxu0 0.0
    %1918 = vmatpush.msra.mxu0 0.0
    %1919 = vmatpush.msra.mxu0 0.0
    %1920 = vmatpush.msra.mxu0 0.0
    %1921 = vmatpush.msra.mxu0 0.0
    %1922 = vmatpush.msra.mxu0 0.0
    %1923 = vmatpush.msra.mxu0 %v1829
    %1924 = vmatmul.f32.gmra.mxu0 %v1906
    %v1925 = vpop.f32.mrf.mxu0
    %v1926 = vadd.f32 0.0, %v1925
    %1927 = vdwg.mxu0
    %v1928 = vadd.f32 %v1839, %v1926
    %1929 = vrot.lane.b32.xlu0 %v1796, 120
    %v1930 = vpop.permute.xlu0 %1929
    %1931 = vrot.lane.b32.xlu0 %v1827, 120
    %v1932 = vpop.permute.xlu0 %1931
    %v1933 = vsel %vm241, %v1930, 0
    %v1935 = vsel %vm241, %v1932, 0
    %1937 = vmatpush.xpose.msra.mxu0 0.0
    %1938 = vmatpush.xpose.msra.mxu0 0.0
    %1939 = vmatpush.xpose.msra.mxu0 0.0
    %1940 = vmatpush.xpose.msra.mxu0 0.0
    %1941 = vmatpush.xpose.msra.mxu0 0.0
    %1942 = vmatpush.xpose.msra.mxu0 0.0
    %1943 = vmatpush.xpose.msra.mxu0 0.0
    %1944 = vmatpush.xpose.msra.mxu0 0.0
    %1945 = vmatpush.xpose.msra.mxu0 0.0
    %1946 = vmatpush.xpose.msra.mxu0 0.0
    %1947 = vmatpush.xpose.msra.mxu0 0.0
    %1948 = vmatpush.xpose.msra.mxu0 0.0
    %1949 = vmatpush.xpose.msra.mxu0 0.0
    %1950 = vmatpush.xpose.msra.mxu0 0.0
    %1951 = vmatpush.xpose.msra.mxu0 0.0
    %1952 = vmatpush.xpose.msra.mxu0 %v1935
    %1953 = vmatmul.f32.gmra.mxu0 %v1933
    %v1954 = vpop.f32.mrf.mxu0
    %v1955 = vadd.f32 0.0, %v1954
    %1956 = vdwg.mxu0
    %v1957 = vmul.f32 %v1955, 0.35355338
    %v1958 = vsel %vm267, -1e+09, %v1957
    %v1959 = vsel %vm241, %v1958, -inf
    %1960 = vmax.xlane.f32.xlu0 %v1959
    %v1961 = vpop.xlane.xlu0 %1960
    %v1962 = vsub.f32 %v1958, %v1961
    %v1963 = vmul.f32 %v1962, 1.442695
    %v1964 = vpow.pop %v1963
    %v1965 = vsel %vm241, %v1964, 0.0
    %1966 = vadd.xlane.f32.xlu0 %v1965
    %v1967 = vpop.xlane.xlu0 %1966
    %v1968 = vrcp.pop %v1967
    %v1969 = vmul.f32 %v1964, %v1968
    %1970 = vrot.lane.b32.xlu0 %v1827, 88
    %v1971 = vpop.permute.xlu0 %1970
    %v1974 = vsel %vm241, %v1969, 0
    %1976 = vmatpush.msra.mxu0 0.0
    %1977 = vmatpush.msra.mxu0 0.0
    %1978 = vmatpush.msra.mxu0 0.0
    %1979 = vmatpush.msra.mxu0 0.0
    %1980 = vmatpush.msra.mxu0 0.0
    %1981 = vmatpush.msra.mxu0 0.0
    %1982 = vmatpush.msra.mxu0 0.0
    %1983 = vmatpush.msra.mxu0 0.0
    %1984 = vmatpush.msra.mxu0 0.0
    %1985 = vmatpush.msra.mxu0 0.0
    %1986 = vmatpush.msra.mxu0 0.0
    %1987 = vmatpush.msra.mxu0 0.0
    %1988 = vmatpush.msra.mxu0 0.0
    %1989 = vmatpush.msra.mxu0 0.0
    %1990 = vmatpush.msra.mxu0 0.0
    %1991 = vmatpush.msra.mxu0 %v1971
    %1992 = vmatmul.f32.gmra.mxu0 %v1974
    %v1993 = vpop.f32.mrf.mxu0
    %v1994 = vadd.f32 0.0, %v1993
    %1995 = vdwg.mxu0
    %v1997 = vsel %vm241, %v1994, 0
    %1999 = vmatpush.msra.mxu0 0.0
    %2000 = vmatpush.msra.mxu0 0.0
    %2001 = vmatpush.msra.mxu0 0.0
    %2002 = vmatpush.msra.mxu0 0.0
    %2003 = vmatpush.msra.mxu0 0.0
    %2004 = vmatpush.msra.mxu0 0.0
    %2005 = vmatpush.msra.mxu0 0.0
    %2006 = vmatpush.msra.mxu0 0.0
    %2007 = vmatpush.msra.mxu0 0.0
    %2008 = vmatpush.msra.mxu0 0.0
    %2009 = vmatpush.msra.mxu0 0.0
    %2010 = vmatpush.msra.mxu0 0.0
    %2011 = vmatpush.msra.mxu0 0.0
    %2012 = vmatpush.msra.mxu0 0.0
    %2013 = vmatpush.msra.mxu0 0.0
    %2014 = vmatpush.msra.mxu0 %v1830
    %2015 = vmatmul.f32.gmra.mxu0 %v1997
    %v2016 = vpop.f32.mrf.mxu0
    %v2017 = vadd.f32 0.0, %v2016
    %2018 = vdwg.mxu0
    %v2019 = vadd.f32 %v1928, %v2017
    %2020 = vrot.lane.b32.xlu0 %v1796, 112
    %v2021 = vpop.permute.xlu0 %2020
    %2022 = vrot.lane.b32.xlu0 %v1827, 112
    %v2023 = vpop.permute.xlu0 %2022
    %v2024 = vsel %vm241, %v2021, 0
    %v2026 = vsel %vm241, %v2023, 0
    %2028 = vmatpush.xpose.msra.mxu0 0.0
    %2029 = vmatpush.xpose.msra.mxu0 0.0
    %2030 = vmatpush.xpose.msra.mxu0 0.0
    %2031 = vmatpush.xpose.msra.mxu0 0.0
    %2032 = vmatpush.xpose.msra.mxu0 0.0
    %2033 = vmatpush.xpose.msra.mxu0 0.0
    %2034 = vmatpush.xpose.msra.mxu0 0.0
    %2035 = vmatpush.xpose.msra.mxu0 0.0
    %2036 = vmatpush.xpose.msra.mxu0 0.0
    %2037 = vmatpush.xpose.msra.mxu0 0.0
    %2038 = vmatpush.xpose.msra.mxu0 0.0
    %2039 = vmatpush.xpose.msra.mxu0 0.0
    %2040 = vmatpush.xpose.msra.mxu0 0.0
    %2041 = vmatpush.xpose.msra.mxu0 0.0
    %2042 = vmatpush.xpose.msra.mxu0 0.0
    %2043 = vmatpush.xpose.msra.mxu0 %v2026
    %2044 = vmatmul.f32.gmra.mxu0 %v2024
    %v2045 = vpop.f32.mrf.mxu0
    %v2046 = vadd.f32 0.0, %v2045
    %2047 = vdwg.mxu0
    %v2048 = vmul.f32 %v2046, 0.35355338
    %v2049 = vsel %vm267, -1e+09, %v2048
    %v2050 = vsel %vm241, %v2049, -inf
    %2051 = vmax.xlane.f32.xlu0 %v2050
    %v2052 = vpop.xlane.xlu0 %2051
    %v2053 = vsub.f32 %v2049, %v2052
    %v2054 = vmul.f32 %v2053, 1.442695
    %v2055 = vpow.pop %v2054
    %v2056 = vsel %vm241, %v2055, 0.0
    %2057 = vadd.xlane.f32.xlu0 %v2056
    %v2058 = vpop.xlane.xlu0 %2057
    %v2059 = vrcp.pop %v2058
    %v2060 = vmul.f32 %v2055, %v2059
    %2061 = vrot.lane.b32.xlu0 %v1827, 80
    %v2062 = vpop.permute.xlu0 %2061
    %v2065 = vsel %vm241, %v2060, 0
    %2067 = vmatpush.msra.mxu0 0.0
    %2068 = vmatpush.msra.mxu0 0.0
    %2069 = vmatpush.msra.mxu0 0.0
    %2070 = vmatpush.msra.mxu0 0.0
    %2071 = vmatpush.msra.mxu0 0.0
    %2072 = vmatpush.msra.mxu0 0.0
    %2073 = vmatpush.msra.mxu0 0.0
    %2074 = vmatpush.msra.mxu0 0.0
    %2075 = vmatpush.msra.mxu0 0.0
    %2076 = vmatpush.msra.mxu0 0.0
    %2077 = vmatpush.msra.mxu0 0.0
    %2078 = vmatpush.msra.mxu0 0.0
    %2079 = vmatpush.msra.mxu0 0.0
    %2080 = vmatpush.msra.mxu0 0.0
    %2081 = vmatpush.msra.mxu0 0.0
    %2082 = vmatpush.msra.mxu0 %v2062
    %2083 = vmatmul.f32.gmra.mxu0 %v2065
    %v2084 = vpop.f32.mrf.mxu0
    %v2085 = vadd.f32 0.0, %v2084
    %2086 = vdwg.mxu0
    %v2088 = vsel %vm241, %v2085, 0
    %2090 = vmatpush.msra.mxu0 0.0
    %2091 = vmatpush.msra.mxu0 0.0
    %2092 = vmatpush.msra.mxu0 0.0
    %2093 = vmatpush.msra.mxu0 0.0
    %2094 = vmatpush.msra.mxu0 0.0
    %2095 = vmatpush.msra.mxu0 0.0
    %2096 = vmatpush.msra.mxu0 0.0
    %2097 = vmatpush.msra.mxu0 0.0
    %2098 = vmatpush.msra.mxu0 0.0
    %2099 = vmatpush.msra.mxu0 0.0
    %2100 = vmatpush.msra.mxu0 0.0
    %2101 = vmatpush.msra.mxu0 0.0
    %2102 = vmatpush.msra.mxu0 0.0
    %2103 = vmatpush.msra.mxu0 0.0
    %2104 = vmatpush.msra.mxu0 0.0
    %2105 = vmatpush.msra.mxu0 %v1831
    %2106 = vmatmul.f32.gmra.mxu0 %v2088
    %v2107 = vpop.f32.mrf.mxu0
    %v2108 = vadd.f32 0.0, %v2107
    %2109 = vdwg.mxu0
    %v2110 = vadd.f32 %v2019, %v2108
    %2111 = vrot.lane.b32.xlu0 %v1796, 104
    %v2112 = vpop.permute.xlu0 %2111
    %2113 = vrot.lane.b32.xlu0 %v1827, 104
    %v2114 = vpop.permute.xlu0 %2113
    %v2115 = vsel %vm241, %v2112, 0
    %v2117 = vsel %vm241, %v2114, 0
    %2119 = vmatpush.xpose.msra.mxu0 0.0
    %2120 = vmatpush.xpose.msra.mxu0 0.0
    %2121 = vmatpush.xpose.msra.mxu0 0.0
    %2122 = vmatpush.xpose.msra.mxu0 0.0
    %2123 = vmatpush.xpose.msra.mxu0 0.0
    %2124 = vmatpush.xpose.msra.mxu0 0.0
    %2125 = vmatpush.xpose.msra.mxu0 0.0
    %2126 = vmatpush.xpose.msra.mxu0 0.0
    %2127 = vmatpush.xpose.msra.mxu0 0.0
    %2128 = vmatpush.xpose.msra.mxu0 0.0
    %2129 = vmatpush.xpose.msra.mxu0 0.0
    %2130 = vmatpush.xpose.msra.mxu0 0.0
    %2131 = vmatpush.xpose.msra.mxu0 0.0
    %2132 = vmatpush.xpose.msra.mxu0 0.0
    %2133 = vmatpush.xpose.msra.mxu0 0.0
    %2134 = vmatpush.xpose.msra.mxu0 %v2117
    %2135 = vmatmul.f32.gmra.mxu0 %v2115
    %v2136 = vpop.f32.mrf.mxu0
    %v2137 = vadd.f32 0.0, %v2136
    %2138 = vdwg.mxu0
    %v2139 = vmul.f32 %v2137, 0.35355338
    %v2140 = vsel %vm267, -1e+09, %v2139
    %v2141 = vsel %vm241, %v2140, -inf
    %2142 = vmax.xlane.f32.xlu0 %v2141
    %v2143 = vpop.xlane.xlu0 %2142
    %v2144 = vsub.f32 %v2140, %v2143
    %v2145 = vmul.f32 %v2144, 1.442695
    %v2146 = vpow.pop %v2145
    %v2147 = vsel %vm241, %v2146, 0.0
    %2148 = vadd.xlane.f32.xlu0 %v2147
    %v2149 = vpop.xlane.xlu0 %2148
    %v2150 = vrcp.pop %v2149
    %v2151 = vmul.f32 %v2146, %v2150
    %2152 = vrot.lane.b32.xlu0 %v1827, 72
    %v2153 = vpop.permute.xlu0 %2152
    %v2156 = vsel %vm241, %v2151, 0
    %2158 = vmatpush.msra.mxu0 0.0
    %2159 = vmatpush.msra.mxu0 0.0
    %2160 = vmatpush.msra.mxu0 0.0
    %2161 = vmatpush.msra.mxu0 0.0
    %2162 = vmatpush.msra.mxu0 0.0
    %2163 = vmatpush.msra.mxu0 0.0
    %2164 = vmatpush.msra.mxu0 0.0
    %2165 = vmatpush.msra.mxu0 0.0
    %2166 = vmatpush.msra.mxu0 0.0
    %2167 = vmatpush.msra.mxu0 0.0
    %2168 = vmatpush.msra.mxu0 0.0
    %2169 = vmatpush.msra.mxu0 0.0
    %2170 = vmatpush.msra.mxu0 0.0
    %2171 = vmatpush.msra.mxu0 0.0
    %2172 = vmatpush.msra.mxu0 0.0
    %2173 = vmatpush.msra.mxu0 %v2153
    %2174 = vmatmul.f32.gmra.mxu0 %v2156
    %v2175 = vpop.f32.mrf.mxu0
    %v2176 = vadd.f32 0.0, %v2175
    %2177 = vdwg.mxu0
    %v2179 = vsel %vm241, %v2176, 0
    %2181 = vmatpush.msra.mxu0 0.0
    %2182 = vmatpush.msra.mxu0 0.0
    %2183 = vmatpush.msra.mxu0 0.0
    %2184 = vmatpush.msra.mxu0 0.0
    %2185 = vmatpush.msra.mxu0 0.0
    %2186 = vmatpush.msra.mxu0 0.0
    %2187 = vmatpush.msra.mxu0 0.0
    %2188 = vmatpush.msra.mxu0 0.0
    %2189 = vmatpush.msra.mxu0 0.0
    %2190 = vmatpush.msra.mxu0 0.0
    %2191 = vmatpush.msra.mxu0 0.0
    %2192 = vmatpush.msra.mxu0 0.0
    %2193 = vmatpush.msra.mxu0 0.0
    %2194 = vmatpush.msra.mxu0 0.0
    %2195 = vmatpush.msra.mxu0 0.0
    %2196 = vmatpush.msra.mxu0 %v1832
    %2197 = vmatmul.f32.gmra.mxu0 %v2179
    %v2198 = vpop.f32.mrf.mxu0
    %v2199 = vadd.f32 0.0, %v2198
    %2200 = vdwg.mxu0
    %v2201 = vadd.f32 %v2110, %v2199
    %v2202 = vsel %vm203, %v2201, 0.0
    %2203 = vadd.xlane.f32.xlu0 %v2202
    %v2204 = vpop.xlane.xlu0 %2203
    %v2205 = vmul.f32 %v2204, %v612
    %v2206 = vsub.f32 %v2201, %v2205
    %v2207 = vmul.f32 %v2206, %v2206
    %v2208 = vsel %vm203, %v2207, 0.0
    %2209 = vadd.xlane.f32.xlu0 %v2208
    %v2210 = vpop.xlane.xlu0 %2209
    %v2211 = vmul.f32 %v2210, %v612
    %v2212 = vadd.f32 %v2211, 1e-05
    %v2213 = vrsqrt.pop %v2212
    %v2214 = vmul.f32 %v2213, %v2212
    %v2215 = vmul.f32 %v2214, %v2213
    %v2216 = vmul.f32 0.5, %v2215
    %v2217 = vsub.f32 1.5, %v2216
    %v2218 = vmul.f32 %v2213, %v2217
    %vm2219 = vweird.f32 %v2212
    %vm2220 = vweird.f32 %v2213
    %vm2221 = vmor %vm2219, %vm2220
    %v2222 = vsel %vm2221, %v2213, %v2218
    %v2223 = vmul.f32 %v2206, %v2222
    %v2225 = vperm.slane %v1834, 0
    %v2227 = vmul.f32 %v2223, %v2225
    %v2229 = vperm.slane %v1835, 0
    %v2231 = vadd.f32 %v2227, %v2229
    %2232 = vrot.lane.b32.xlu0 %v1969, 8
    %v2233 = vpop.permute.xlu0 %2232
    %2235 = vrot.lane.b32.xlu0 %v2060, 16
    %v2236 = vpop.permute.xlu0 %2235
    %2238 = vrot.lane.b32.xlu0 %v2151, 24
    %v2239 = vpop.permute.xlu0 %2238
    %v2241 = vsel %vm241, %v1878, %v2233
    %v2242 = vsel %vm650, %v2241, %v2236
    %v2243 = vsel %vm652, %v2242, %v2239
    %2244 = vst.msk [vmem:[%s81] sm:$0xff] %vm203, %v2243
    %v2245 = vld [vmem:[#allocation2] sm:$0xff]
    %v2246 = vld [vmem:[#allocation2 + $0x8] sm:$0xff]
    %v2247 = vld [vmem:[#allocation2 + $0x10] sm:$0xff]
    %v2248 = vld [vmem:[#allocation2 + $0x18] sm:$0xff]
    %v2249 = vld [vmem:[%s63] sm:$0x1]
    %v2250 = vld [vmem:[%s65] sm:$0xff]
    %v2251 = vld [vmem:[%s65 + $0x8] sm:$0xff]
    %v2252 = vld [vmem:[%s65 + $0x10] sm:$0xff]
    %v2253 = vld [vmem:[%s65 + $0x18] sm:$0xff]
    %v2254 = vld [vmem:[%s65 + $0x20] sm:$0xff]
    %v2255 = vld [vmem:[%s65 + $0x28] sm:$0xff]
    %v2256 = vld [vmem:[%s65 + $0x30] sm:$0xff]
    %v2257 = vld [vmem:[%s65 + $0x38] sm:$0xff]
    %v2258 = vld [vmem:[%s67] sm:$0x1]
    %v2259 = vld [vmem:[%s69] sm:$0x1]
    %v2260 = vld [vmem:[%s71] sm:$0x1]
    %v2262 = vperm.slane %v2249, 0
    %v2265 = vsel %vm203, %v2231, 0
    %2267 = vmatpush.msra.mxu0 0.0
    %2268 = vmatpush.msra.mxu0 0.0
    %2269 = vmatpush.msra.mxu0 0.0
    %2270 = vmatpush.msra.mxu0 0.0
    %2271 = vmatpush.msra.mxu0 0.0
    %2272 = vmatpush.msra.mxu0 0.0
    %2273 = vmatpush.msra.mxu0 0.0
    %2274 = vmatpush.msra.mxu0 0.0
    %2275 = vmatpush.msra.mxu0 0.0
    %2276 = vmatpush.msra.mxu0 0.0
    %2277 = vmatpush.msra.mxu0 0.0
    %2278 = vmatpush.msra.mxu0 0.0
    %2279 = vmatpush.msra.mxu0 %v2248
    %2280 = vmatpush.msra.mxu0 %v2247
    %2281 = vmatpush.msra.mxu0 %v2246
    %2282 = vmatpush.msra.mxu0 %v2245
    %2283 = vmatmul.f32.gmra.mxu0 %v2265
    %v2284 = vpop.f32.mrf.mxu0
    %v2285 = vadd.f32 %v2262, %v2284
    %2286 = vdwg.mxu0
    %v2287 = vmax.f32 %v2285, 0.0
    %v2289 = vperm.slane %v2258, 0
    %v2292 = vsel %vm701, %v2287, 0
    %2294 = vmatpush.msra.mxu0 0.0
    %2295 = vmatpush.msra.mxu0 0.0
    %2296 = vmatpush.msra.mxu0 0.0
    %2297 = vmatpush.msra.mxu0 0.0
    %2298 = vmatpush.msra.mxu0 0.0
    %2299 = vmatpush.msra.mxu0 0.0
    %2300 = vmatpush.msra.mxu0 0.0
    %2301 = vmatpush.msra.mxu0 0.0
    %2302 = vmatpush.msra.mxu0 %v2257
    %2303 = vmatpush.msra.mxu0 %v2256
    %2304 = vmatpush.msra.mxu0 %v2255
    %2305 = vmatpush.msra.mxu0 %v2254
    %2306 = vmatpush.msra.mxu0 %v2253
    %2307 = vmatpush.msra.mxu0 %v2252
    %2308 = vmatpush.msra.mxu0 %v2251
    %2309 = vmatpush.msra.mxu0 %v2250
    %2310 = vmatmul.f32.gmra.mxu0 %v2292
    %v2311 = vpop.f32.mrf.mxu0
    %v2312 = vadd.f32 %v2289, %v2311
    %2313 = vdwg.mxu0
    %v2314 = vadd.f32 %v2312, %v2231
    %v2315 = vsel %vm203, %v2314, 0.0
    %2316 = vadd.xlane.f32.xlu0 %v2315
    %v2317 = vpop.xlane.xlu0 %2316
    %v2318 = vmul.f32 %v2317, %v612
    %v2319 = vsub.f32 %v2314, %v2318
    %v2320 = vmul.f32 %v2319, %v2319
    %v2321 = vsel %vm203, %v2320, 0.0
    %2322 = vadd.xlane.f32.xlu0 %v2321
    %v2323 = vpop.xlane.xlu0 %2322
    %v2324 = vmul.f32 %v2323, %v612
    %v2325 = vadd.f32 %v2324, 1e-05
    %v2326 = vrsqrt.pop %v2325
    %v2327 = vmul.f32 %v2326, %v2325
    %v2328 = vmul.f32 %v2327, %v2326
    %v2329 = vmul.f32 0.5, %v2328
    %v2330 = vsub.f32 1.5, %v2329
    %v2331 = vmul.f32 %v2326, %v2330
    %vm2332 = vweird.f32 %v2325
    %vm2333 = vweird.f32 %v2326
    %vm2334 = vmor %vm2332, %vm2333
    %v2335 = vsel %vm2334, %v2326, %v2331
    %v2336 = vmul.f32 %v2319, %v2335
    %v2338 = vperm.slane %v2259, 0
    %v2340 = vmul.f32 %v2336, %v2338
    %v2342 = vperm.slane %v2260, 0
    %v2344 = vadd.f32 %v2340, %v2342
    %s2345 = scalar_lea.vmem %s33, 32
    %v2346 = vld [vmem:[%s2345] sm:$0xff]
    %v2347 = vld [vmem:[%s2345 + $0x8] sm:$0xff]
    %v2348 = vld [vmem:[%s2345 + $0x10] sm:$0xff]
    %v2349 = vld [vmem:[%s2345 + $0x18] sm:$0xff]
    %s2350 = scalar_lea.vmem %s35, 1
    %v2351 = vld [vmem:[%s2350] sm:$0x1]
    %v2353 = vperm.slane %v2351, 0
    %v2356 = vsel %vm203, %v2344, 0
    %2358 = vmatpush.msra.mxu0 0.0
    %2359 = vmatpush.msra.mxu0 0.0
    %2360 = vmatpush.msra.mxu0 0.0
    %2361 = vmatpush.msra.mxu0 0.0
    %2362 = vmatpush.msra.mxu0 0.0
    %2363 = vmatpush.msra.mxu0 0.0
    %2364 = vmatpush.msra.mxu0 0.0
    %2365 = vmatpush.msra.mxu0 0.0
    %2366 = vmatpush.msra.mxu0 0.0
    %2367 = vmatpush.msra.mxu0 0.0
    %2368 = vmatpush.msra.mxu0 0.0
    %2369 = vmatpush.msra.mxu0 0.0
    %2370 = vmatpush.msra.mxu0 %v2349
    %2371 = vmatpush.msra.mxu0 %v2348
    %2372 = vmatpush.msra.mxu0 %v2347
    %2373 = vmatpush.msra.mxu0 %v2346
    %2374 = vmatmul.f32.gmra.mxu0 %v2356
    %v2375 = vpop.f32.mrf.mxu0
    %v2376 = vadd.f32 %v2353, %v2375
    %2377 = vdwg.mxu0
    %s2378 = scalar_lea.vmem %s37, 32
    %v2379 = vld [vmem:[%s2378] sm:$0xff]
    %v2380 = vld [vmem:[%s2378 + $0x8] sm:$0xff]
    %v2381 = vld [vmem:[%s2378 + $0x10] sm:$0xff]
    %v2382 = vld [vmem:[%s2378 + $0x18] sm:$0xff]
    %s2383 = scalar_lea.vmem %s39, 1
    %v2384 = vld [vmem:[%s2383] sm:$0x1]
    %s2385 = scalar_lea.vmem %s41, 1
    %v2386 = vld [vmem:[%s2385] sm:$0x1]
    %s2387 = scalar_lea.vmem %s43, 1
    %v2388 = vld [vmem:[%s2387] sm:$0x1]
    %v2390 = vperm.slane %v2384, 0
    %v2392 = vadd.f32 %v2344, %v2390
    %2394 = vrot.lane.b32.xlu0 %v2376, 96
    %v2395 = vpop.permute.xlu0 %2394
    %v2396 = vsel %vm241, %v2376, 0
    %v2398 = vsel %vm241, %v2395, 0
    %2400 = vmatpush.xpose.msra.mxu0 0.0
    %2401 = vmatpush.xpose.msra.mxu0 0.0
    %2402 = vmatpush.xpose.msra.mxu0 0.0
    %2403 = vmatpush.xpose.msra.mxu0 0.0
    %2404 = vmatpush.xpose.msra.mxu0 0.0
    %2405 = vmatpush.xpose.msra.mxu0 0.0
    %2406 = vmatpush.xpose.msra.mxu0 0.0
    %2407 = vmatpush.xpose.msra.mxu0 0.0
    %2408 = vmatpush.xpose.msra.mxu0 0.0
    %2409 = vmatpush.xpose.msra.mxu0 0.0
    %2410 = vmatpush.xpose.msra.mxu0 0.0
    %2411 = vmatpush.xpose.msra.mxu0 0.0
    %2412 = vmatpush.xpose.msra.mxu0 0.0
    %2413 = vmatpush.xpose.msra.mxu0 0.0
    %2414 = vmatpush.xpose.msra.mxu0 0.0
    %2415 = vmatpush.xpose.msra.mxu0 %v2398
    %2416 = vmatmul.f32.gmra.mxu0 %v2396
    %v2417 = vpop.f32.mrf.mxu0
    %v2418 = vadd.f32 0.0, %v2417
    %2419 = vdwg.mxu0
    %v2420 = vmul.f32 %v2418, 0.35355338
    %v2421 = vsel %vm1388, -1e+09, %v2420
    %v2422 = vsel %vm241, %v2421, -inf
    %2423 = vmax.xlane.f32.xlu0 %v2422
    %v2424 = vpop.xlane.xlu0 %2423
    %v2425 = vsub.f32 %v2421, %v2424
    %v2426 = vmul.f32 %v2425, 1.442695
    %v2427 = vpow.pop %v2426
    %v2428 = vsel %vm241, %v2427, 0.0
    %2429 = vadd.xlane.f32.xlu0 %v2428
    %v2430 = vpop.xlane.xlu0 %2429
    %v2431 = vrcp.pop %v2430
    %v2432 = vmul.f32 %v2427, %v2431
    %2433 = vrot.lane.b32.xlu0 %v2376, 64
    %v2434 = vpop.permute.xlu0 %2433
    %v2437 = vsel %vm241, %v2432, 0
    %2439 = vmatpush.msra.mxu0 0.0
    %2440 = vmatpush.msra.mxu0 0.0
    %2441 = vmatpush.msra.mxu0 0.0
    %2442 = vmatpush.msra.mxu0 0.0
    %2443 = vmatpush.msra.mxu0 0.0
    %2444 = vmatpush.msra.mxu0 0.0
    %2445 = vmatpush.msra.mxu0 0.0
    %2446 = vmatpush.msra.mxu0 0.0
    %2447 = vmatpush.msra.mxu0 0.0
    %2448 = vmatpush.msra.mxu0 0.0
    %2449 = vmatpush.msra.mxu0 0.0
    %2450 = vmatpush.msra.mxu0 0.0
    %2451 = vmatpush.msra.mxu0 0.0
    %2452 = vmatpush.msra.mxu0 0.0
    %2453 = vmatpush.msra.mxu0 0.0
    %2454 = vmatpush.msra.mxu0 %v2434
    %2455 = vmatmul.f32.gmra.mxu0 %v2437
    %v2456 = vpop.f32.mrf.mxu0
    %v2457 = vadd.f32 0.0, %v2456
    %2458 = vdwg.mxu0
    %v2460 = vsel %vm241, %v2457, 0
    %2462 = vmatpush.msra.mxu0 0.0
    %2463 = vmatpush.msra.mxu0 0.0
    %2464 = vmatpush.msra.mxu0 0.0
    %2465 = vmatpush.msra.mxu0 0.0
    %2466 = vmatpush.msra.mxu0 0.0
    %2467 = vmatpush.msra.mxu0 0.0
    %2468 = vmatpush.msra.mxu0 0.0
    %2469 = vmatpush.msra.mxu0 0.0
    %2470 = vmatpush.msra.mxu0 0.0
    %2471 = vmatpush.msra.mxu0 0.0
    %2472 = vmatpush.msra.mxu0 0.0
    %2473 = vmatpush.msra.mxu0 0.0
    %2474 = vmatpush.msra.mxu0 0.0
    %2475 = vmatpush.msra.mxu0 0.0
    %2476 = vmatpush.msra.mxu0 0.0
    %2477 = vmatpush.msra.mxu0 %v2379
    %2478 = vmatmul.f32.gmra.mxu0 %v2460
    %v2479 = vpop.f32.mrf.mxu0
    %v2480 = vadd.f32 0.0, %v2479
    %2481 = vdwg.mxu0
    %v2482 = vadd.f32 %v2392, %v2480
    %2483 = vrot.lane.b32.xlu0 %v2376, 120
    %v2484 = vpop.permute.xlu0 %2483
    %2485 = vrot.lane.b32.xlu0 %v2376, 88
    %v2486 = vpop.permute.xlu0 %2485
    %v2487 = vsel %vm241, %v2484, 0
    %v2489 = vsel %vm241, %v2486, 0
    %2491 = vmatpush.xpose.msra.mxu0 0.0
    %2492 = vmatpush.xpose.msra.mxu0 0.0
    %2493 = vmatpush.xpose.msra.mxu0 0.0
    %2494 = vmatpush.xpose.msra.mxu0 0.0
    %2495 = vmatpush.xpose.msra.mxu0 0.0
    %2496 = vmatpush.xpose.msra.mxu0 0.0
    %2497 = vmatpush.xpose.msra.mxu0 0.0
    %2498 = vmatpush.xpose.msra.mxu0 0.0
    %2499 = vmatpush.xpose.msra.mxu0 0.0
    %2500 = vmatpush.xpose.msra.mxu0 0.0
    %2501 = vmatpush.xpose.msra.mxu0 0.0
    %2502 = vmatpush.xpose.msra.mxu0 0.0
    %2503 = vmatpush.xpose.msra.mxu0 0.0
    %2504 = vmatpush.xpose.msra.mxu0 0.0
    %2505 = vmatpush.xpose.msra.mxu0 0.0
    %2506 = vmatpush.xpose.msra.mxu0 %v2489
    %2507 = vmatmul.f32.gmra.mxu0 %v2487
    %v2508 = vpop.f32.mrf.mxu0
    %v2509 = vadd.f32 0.0, %v2508
    %2510 = vdwg.mxu0
    %v2511 = vmul.f32 %v2509, 0.35355338
    %v2512 = vsel %vm1388, -1e+09, %v2511
    %v2513 = vsel %vm241, %v2512, -inf
    %2514 = vmax.xlane.f32.xlu0 %v2513
    %v2515 = vpop.xlane.xlu0 %2514
    %v2516 = vsub.f32 %v2512, %v2515
    %v2517 = vmul.f32 %v2516, 1.442695
    %v2518 = vpow.pop %v2517
    %v2519 = vsel %vm241, %v2518, 0.0
    %2520 = vadd.xlane.f32.xlu0 %v2519
    %v2521 = vpop.xlane.xlu0 %2520
    %v2522 = vrcp.pop %v2521
    %v2523 = vmul.f32 %v2518, %v2522
    %2524 = vrot.lane.b32.xlu0 %v2376, 56
    %v2525 = vpop.permute.xlu0 %2524
    %v2528 = vsel %vm241, %v2523, 0
    %2530 = vmatpush.msra.mxu0 0.0
    %2531 = vmatpush.msra.mxu0 0.0
    %2532 = vmatpush.msra.mxu0 0.0
    %2533 = vmatpush.msra.mxu0 0.0
    %2534 = vmatpush.msra.mxu0 0.0
    %2535 = vmatpush.msra.mxu0 0.0
    %2536 = vmatpush.msra.mxu0 0.0
    %2537 = vmatpush.msra.mxu0 0.0
    %2538 = vmatpush.msra.mxu0 0.0
    %2539 = vmatpush.msra.mxu0 0.0
    %2540 = vmatpush.msra.mxu0 0.0
    %2541 = vmatpush.msra.mxu0 0.0
    %2542 = vmatpush.msra.mxu0 0.0
    %2543 = vmatpush.msra.mxu0 0.0
    %2544 = vmatpush.msra.mxu0 0.0
    %2545 = vmatpush.msra.mxu0 %v2525
    %2546 = vmatmul.f32.gmra.mxu0 %v2528
    %v2547 = vpop.f32.mrf.mxu0
    %v2548 = vadd.f32 0.0, %v2547
    %2549 = vdwg.mxu0
    %v2551 = vsel %vm241, %v2548, 0
    %2553 = vmatpush.msra.mxu0 0.0
    %2554 = vmatpush.msra.mxu0 0.0
    %2555 = vmatpush.msra.mxu0 0.0
    %2556 = vmatpush.msra.mxu0 0.0
    %2557 = vmatpush.msra.mxu0 0.0
    %2558 = vmatpush.msra.mxu0 0.0
    %2559 = vmatpush.msra.mxu0 0.0
    %2560 = vmatpush.msra.mxu0 0.0
    %2561 = vmatpush.msra.mxu0 0.0
    %2562 = vmatpush.msra.mxu0 0.0
    %2563 = vmatpush.msra.mxu0 0.0
    %2564 = vmatpush.msra.mxu0 0.0
    %2565 = vmatpush.msra.mxu0 0.0
    %2566 = vmatpush.msra.mxu0 0.0
    %2567 = vmatpush.msra.mxu0 0.0
    %2568 = vmatpush.msra.mxu0 %v2380
    %2569 = vmatmul.f32.gmra.mxu0 %v2551
    %v2570 = vpop.f32.mrf.mxu0
    %v2571 = vadd.f32 0.0, %v2570
    %2572 = vdwg.mxu0
    %v2573 = vadd.f32 %v2482, %v2571
    %2574 = vrot.lane.b32.xlu0 %v2376, 112
    %v2575 = vpop.permute.xlu0 %2574
    %2576 = vrot.lane.b32.xlu0 %v2376, 80
    %v2577 = vpop.permute.xlu0 %2576
    %v2578 = vsel %vm241, %v2575, 0
    %v2580 = vsel %vm241, %v2577, 0
    %2582 = vmatpush.xpose.msra.mxu0 0.0
    %2583 = vmatpush.xpose.msra.mxu0 0.0
    %2584 = vmatpush.xpose.msra.mxu0 0.0
    %2585 = vmatpush.xpose.msra.mxu0 0.0
    %2586 = vmatpush.xpose.msra.mxu0 0.0
    %2587 = vmatpush.xpose.msra.mxu0 0.0
    %2588 = vmatpush.xpose.msra.mxu0 0.0
    %2589 = vmatpush.xpose.msra.mxu0 0.0
    %2590 = vmatpush.xpose.msra.mxu0 0.0
    %2591 = vmatpush.xpose.msra.mxu0 0.0
    %2592 = vmatpush.xpose.msra.mxu0 0.0
    %2593 = vmatpush.xpose.msra.mxu0 0.0
    %2594 = vmatpush.xpose.msra.mxu0 0.0
    %2595 = vmatpush.xpose.msra.mxu0 0.0
    %2596 = vmatpush.xpose.msra.mxu0 0.0
    %2597 = vmatpush.xpose.msra.mxu0 %v2580
    %2598 = vmatmul.f32.gmra.mxu0 %v2578
    %v2599 = vpop.f32.mrf.mxu0
    %v2600 = vadd.f32 0.0, %v2599
    %2601 = vdwg.mxu0
    %v2602 = vmul.f32 %v2600, 0.35355338
    %v2603 = vsel %vm1388, -1e+09, %v2602
    %v2604 = vsel %vm241, %v2603, -inf
    %2605 = vmax.xlane.f32.xlu0 %v2604
    %v2606 = vpop.xlane.xlu0 %2605
    %v2607 = vsub.f32 %v2603, %v2606
    %v2608 = vmul.f32 %v2607, 1.442695
    %v2609 = vpow.pop %v2608
    %v2610 = vsel %vm241, %v2609, 0.0
    %2611 = vadd.xlane.f32.xlu0 %v2610
    %v2612 = vpop.xlane.xlu0 %2611
    %v2613 = vrcp.pop %v2612
    %v2614 = vmul.f32 %v2609, %v2613
    %2615 = vrot.lane.b32.xlu0 %v2376, 48
    %v2616 = vpop.permute.xlu0 %2615
    %v2619 = vsel %vm241, %v2614, 0
    %2621 = vmatpush.msra.mxu0 0.0
    %2622 = vmatpush.msra.mxu0 0.0
    %2623 = vmatpush.msra.mxu0 0.0
    %2624 = vmatpush.msra.mxu0 0.0
    %2625 = vmatpush.msra.mxu0 0.0
    %2626 = vmatpush.msra.mxu0 0.0
    %2627 = vmatpush.msra.mxu0 0.0
    %2628 = vmatpush.msra.mxu0 0.0
    %2629 = vmatpush.msra.mxu0 0.0
    %2630 = vmatpush.msra.mxu0 0.0
    %2631 = vmatpush.msra.mxu0 0.0
    %2632 = vmatpush.msra.mxu0 0.0
    %2633 = vmatpush.msra.mxu0 0.0
    %2634 = vmatpush.msra.mxu0 0.0
    %2635 = vmatpush.msra.mxu0 0.0
    %2636 = vmatpush.msra.mxu0 %v2616
    %2637 = vmatmul.f32.gmra.mxu0 %v2619
    %v2638 = vpop.f32.mrf.mxu0
    %v2639 = vadd.f32 0.0, %v2638
    %2640 = vdwg.mxu0
    %v2642 = vsel %vm241, %v2639, 0
    %2644 = vmatpush.msra.mxu0 0.0
    %2645 = vmatpush.msra.mxu0 0.0
    %2646 = vmatpush.msra.mxu0 0.0
    %2647 = vmatpush.msra.mxu0 0.0
    %2648 = vmatpush.msra.mxu0 0.0
    %2649 = vmatpush.msra.mxu0 0.0
    %2650 = vmatpush.msra.mxu0 0.0
    %2651 = vmatpush.msra.mxu0 0.0
    %2652 = vmatpush.msra.mxu0 0.0
    %2653 = vmatpush.msra.mxu0 0.0
    %2654 = vmatpush.msra.mxu0 0.0
    %2655 = vmatpush.msra.mxu0 0.0
    %2656 = vmatpush.msra.mxu0 0.0
    %2657 = vmatpush.msra.mxu0 0.0
    %2658 = vmatpush.msra.mxu0 0.0
    %2659 = vmatpush.msra.mxu0 %v2381
    %2660 = vmatmul.f32.gmra.mxu0 %v2642
    %v2661 = vpop.f32.mrf.mxu0
    %v2662 = vadd.f32 0.0, %v2661
    %2663 = vdwg.mxu0
    %v2664 = vadd.f32 %v2573, %v2662
    %2665 = vrot.lane.b32.xlu0 %v2376, 104
    %v2666 = vpop.permute.xlu0 %2665
    %2667 = vrot.lane.b32.xlu0 %v2376, 72
    %v2668 = vpop.permute.xlu0 %2667
    %v2669 = vsel %vm241, %v2666, 0
    %v2671 = vsel %vm241, %v2668, 0
    %2673 = vmatpush.xpose.msra.mxu0 0.0
    %2674 = vmatpush.xpose.msra.mxu0 0.0
    %2675 = vmatpush.xpose.msra.mxu0 0.0
    %2676 = vmatpush.xpose.msra.mxu0 0.0
    %2677 = vmatpush.xpose.msra.mxu0 0.0
    %2678 = vmatpush.xpose.msra.mxu0 0.0
    %2679 = vmatpush.xpose.msra.mxu0 0.0
    %2680 = vmatpush.xpose.msra.mxu0 0.0
    %2681 = vmatpush.xpose.msra.mxu0 0.0
    %2682 = vmatpush.xpose.msra.mxu0 0.0
    %2683 = vmatpush.xpose.msra.mxu0 0.0
    %2684 = vmatpush.xpose.msra.mxu0 0.0
    %2685 = vmatpush.xpose.msra.mxu0 0.0
    %2686 = vmatpush.xpose.msra.mxu0 0.0
    %2687 = vmatpush.xpose.msra.mxu0 0.0
    %2688 = vmatpush.xpose.msra.mxu0 %v2671
    %2689 = vmatmul.f32.gmra.mxu0 %v2669
    %v2690 = vpop.f32.mrf.mxu0
    %v2691 = vadd.f32 0.0, %v2690
    %2692 = vdwg.mxu0
    %v2693 = vmul.f32 %v2691, 0.35355338
    %v2694 = vsel %vm1388, -1e+09, %v2693
    %v2695 = vsel %vm241, %v2694, -inf
    %2696 = vmax.xlane.f32.xlu0 %v2695
    %v2697 = vpop.xlane.xlu0 %2696
    %v2698 = vsub.f32 %v2694, %v2697
    %v2699 = vmul.f32 %v2698, 1.442695
    %v2700 = vpow.pop %v2699
    %v2701 = vsel %vm241, %v2700, 0.0
    %2702 = vadd.xlane.f32.xlu0 %v2701
    %v2703 = vpop.xlane.xlu0 %2702
    %v2704 = vrcp.pop %v2703
    %v2705 = vmul.f32 %v2700, %v2704
    %2706 = vrot.lane.b32.xlu0 %v2376, 40
    %v2707 = vpop.permute.xlu0 %2706
    %v2710 = vsel %vm241, %v2705, 0
    %2712 = vmatpush.msra.mxu0 0.0
    %2713 = vmatpush.msra.mxu0 0.0
    %2714 = vmatpush.msra.mxu0 0.0
    %2715 = vmatpush.msra.mxu0 0.0
    %2716 = vmatpush.msra.mxu0 0.0
    %2717 = vmatpush.msra.mxu0 0.0
    %2718 = vmatpush.msra.mxu0 0.0
    %2719 = vmatpush.msra.mxu0 0.0
    %2720 = vmatpush.msra.mxu0 0.0
    %2721 = vmatpush.msra.mxu0 0.0
    %2722 = vmatpush.msra.mxu0 0.0
    %2723 = vmatpush.msra.mxu0 0.0
    %2724 = vmatpush.msra.mxu0 0.0
    %2725 = vmatpush.msra.mxu0 0.0
    %2726 = vmatpush.msra.mxu0 0.0
    %2727 = vmatpush.msra.mxu0 %v2707
    %2728 = vmatmul.f32.gmra.mxu0 %v2710
    %v2729 = vpop.f32.mrf.mxu0
    %v2730 = vadd.f32 0.0, %v2729
    %2731 = vdwg.mxu0
    %v2733 = vsel %vm241, %v2730, 0
    %2735 = vmatpush.msra.mxu0 0.0
    %2736 = vmatpush.msra.mxu0 0.0
    %2737 = vmatpush.msra.mxu0 0.0
    %2738 = vmatpush.msra.mxu0 0.0
    %2739 = vmatpush.msra.mxu0 0.0
    %2740 = vmatpush.msra.mxu0 0.0
    %2741 = vmatpush.msra.mxu0 0.0
    %2742 = vmatpush.msra.mxu0 0.0
    %2743 = vmatpush.msra.mxu0 0.0
    %2744 = vmatpush.msra.mxu0 0.0
    %2745 = vmatpush.msra.mxu0 0.0
    %2746 = vmatpush.msra.mxu0 0.0
    %2747 = vmatpush.msra.mxu0 0.0
    %2748 = vmatpush.msra.mxu0 0.0
    %2749 = vmatpush.msra.mxu0 0.0
    %2750 = vmatpush.msra.mxu0 %v2382
    %2751 = vmatmul.f32.gmra.mxu0 %v2733
    %v2752 = vpop.f32.mrf.mxu0
    %v2753 = vadd.f32 0.0, %v2752
    %2754 = vdwg.mxu0
    %v2755 = vadd.f32 %v2664, %v2753
    %v2756 = vsel %vm203, %v2755, 0.0
    %2757 = vadd.xlane.f32.xlu0 %v2756
    %v2758 = vpop.xlane.xlu0 %2757
    %v2759 = vmul.f32 %v2758, %v612
    %v2760 = vsub.f32 %v2755, %v2759
    %v2761 = vmul.f32 %v2760, %v2760
    %v2762 = vsel %vm203, %v2761, 0.0
    %2763 = vadd.xlane.f32.xlu0 %v2762
    %v2764 = vpop.xlane.xlu0 %2763
    %v2765 = vmul.f32 %v2764, %v612
    %v2766 = vadd.f32 %v2765, 1e-05
    %v2767 = vrsqrt.pop %v2766
    %v2768 = vmul.f32 %v2767, %v2766
    %v2769 = vmul.f32 %v2768, %v2767
    %v2770 = vmul.f32 0.5, %v2769
    %v2771 = vsub.f32 1.5, %v2770
    %v2772 = vmul.f32 %v2767, %v2771
    %vm2773 = vweird.f32 %v2766
    %vm2774 = vweird.f32 %v2767
    %vm2775 = vmor %vm2773, %vm2774
    %v2776 = vsel %vm2775, %v2767, %v2772
    %v2777 = vmul.f32 %v2760, %v2776
    %v2779 = vperm.slane %v2386, 0
    %v2781 = vmul.f32 %v2777, %v2779
    %v2783 = vperm.slane %v2388, 0
    %v2785 = vadd.f32 %v2781, %v2783
    %2786 = vrot.lane.b32.xlu0 %v2523, 8
    %v2787 = vpop.permute.xlu0 %2786
    %2789 = vrot.lane.b32.xlu0 %v2614, 16
    %v2790 = vpop.permute.xlu0 %2789
    %2792 = vrot.lane.b32.xlu0 %v2705, 24
    %v2793 = vpop.permute.xlu0 %2792
    %v2795 = vsel %vm241, %v2432, %v2787
    %v2796 = vsel %vm650, %v2795, %v2790
    %v2797 = vsel %vm652, %v2796, %v2793
    %s2798 = scalar_lea.vmem %s79, 8
    %2799 = vst.msk [vmem:[%s2798] sm:$0xff] %vm203, %v2797
    %s2800 = scalar_lea.vmem %s45, 32
    %v2801 = vld [vmem:[%s2800] sm:$0xff]
    %v2802 = vld [vmem:[%s2800 + $0x8] sm:$0xff]
    %v2803 = vld [vmem:[%s2800 + $0x10] sm:$0xff]
    %v2804 = vld [vmem:[%s2800 + $0x18] sm:$0xff]
    %s2805 = scalar_lea.vmem %s47, 1
    %v2806 = vld [vmem:[%s2805] sm:$0x1]
    %v2808 = vperm.slane %v2806, 0
    %v2811 = vsel %vm203, %v2785, 0
    %2813 = vmatpush.msra.mxu0 0.0
    %2814 = vmatpush.msra.mxu0 0.0
    %2815 = vmatpush.msra.mxu0 0.0
    %2816 = vmatpush.msra.mxu0 0.0
    %2817 = vmatpush.msra.mxu0 0.0
    %2818 = vmatpush.msra.mxu0 0.0
    %2819 = vmatpush.msra.mxu0 0.0
    %2820 = vmatpush.msra.mxu0 0.0
    %2821 = vmatpush.msra.mxu0 0.0
    %2822 = vmatpush.msra.mxu0 0.0
    %2823 = vmatpush.msra.mxu0 0.0
    %2824 = vmatpush.msra.mxu0 0.0
    %2825 = vmatpush.msra.mxu0 %v2804
    %2826 = vmatpush.msra.mxu0 %v2803
    %2827 = vmatpush.msra.mxu0 %v2802
    %2828 = vmatpush.msra.mxu0 %v2801
    %2829 = vmatmul.f32.gmra.mxu0 %v2811
    %v2830 = vpop.f32.mrf.mxu0
    %v2831 = vadd.f32 %v2808, %v2830
    %2832 = vdwg.mxu0
    %s2833 = scalar_lea.vmem %s49, 32
    %v2834 = vld [vmem:[%s2833] sm:$0xff]
    %v2835 = vld [vmem:[%s2833 + $0x8] sm:$0xff]
    %v2836 = vld [vmem:[%s2833 + $0x10] sm:$0xff]
    %v2837 = vld [vmem:[%s2833 + $0x18] sm:$0xff]
    %s2838 = scalar_lea.vmem %s51, 1
    %v2839 = vld [vmem:[%s2838] sm:$0x1]
    %v2841 = vperm.slane %v2839, 0
    %2843 = vmatpush.msra.mxu0 0.0
    %2844 = vmatpush.msra.mxu0 0.0
    %2845 = vmatpush.msra.mxu0 0.0
    %2846 = vmatpush.msra.mxu0 0.0
    %2847 = vmatpush.msra.mxu0 0.0
    %2848 = vmatpush.msra.mxu0 0.0
    %2849 = vmatpush.msra.mxu0 0.0
    %2850 = vmatpush.msra.mxu0 0.0
    %2851 = vmatpush.msra.mxu0 0.0
    %2852 = vmatpush.msra.mxu0 0.0
    %2853 = vmatpush.msra.mxu0 0.0
    %2854 = vmatpush.msra.mxu0 0.0
    %2855 = vmatpush.msra.mxu0 %v2837
    %2856 = vmatpush.msra.mxu0 %v2836
    %2857 = vmatpush.msra.mxu0 %v2835
    %2858 = vmatpush.msra.mxu0 %v2834
    %2859 = vmatmul.f32.gmra.mxu0 %v1807
    %v2860 = vpop.f32.mrf.mxu0
    %v2861 = vadd.f32 %v2841, %v2860
    %2862 = vdwg.mxu0
    %s2863 = scalar_lea.vmem %s53, 32
    %v2864 = vld [vmem:[%s2863] sm:$0xff]
    %v2865 = vld [vmem:[%s2863 + $0x8] sm:$0xff]
    %v2866 = vld [vmem:[%s2863 + $0x10] sm:$0xff]
    %v2867 = vld [vmem:[%s2863 + $0x18] sm:$0xff]
    %s2868 = scalar_lea.vmem %s55, 1
    %v2869 = vld [vmem:[%s2868] sm:$0x1]
    %s2870 = scalar_lea.vmem %s57, 1
    %v2871 = vld [vmem:[%s2870] sm:$0x1]
    %s2872 = scalar_lea.vmem %s59, 1
    %v2873 = vld [vmem:[%s2872] sm:$0x1]
    %v2875 = vperm.slane %v2869, 0
    %v2877 = vadd.f32 %v2785, %v2875
    %v2879 = vsel %vm241, %v2831, 0
    %v2882 = vsel %vm241, %v2861, 0
    %2884 = vmatpush.xpose.msra.mxu0 0.0
    %2885 = vmatpush.xpose.msra.mxu0 0.0
    %2886 = vmatpush.xpose.msra.mxu0 0.0
    %2887 = vmatpush.xpose.msra.mxu0 0.0
    %2888 = vmatpush.xpose.msra.mxu0 0.0
    %2889 = vmatpush.xpose.msra.mxu0 0.0
    %2890 = vmatpush.xpose.msra.mxu0 0.0
    %2891 = vmatpush.xpose.msra.mxu0 0.0
    %2892 = vmatpush.xpose.msra.mxu0 0.0
    %2893 = vmatpush.xpose.msra.mxu0 0.0
    %2894 = vmatpush.xpose.msra.mxu0 0.0
    %2895 = vmatpush.xpose.msra.mxu0 0.0
    %2896 = vmatpush.xpose.msra.mxu0 0.0
    %2897 = vmatpush.xpose.msra.mxu0 0.0
    %2898 = vmatpush.xpose.msra.mxu0 0.0
    %2899 = vmatpush.xpose.msra.mxu0 %v2882
    %2900 = vmatmul.f32.gmra.mxu0 %v2879
    %v2901 = vpop.f32.mrf.mxu0
    %v2902 = vadd.f32 0.0, %v2901
    %2903 = vdwg.mxu0
    %v2904 = vmul.f32 %v2902, 0.35355338
    %v2905 = vsel %vm267, -1e+09, %v2904
    %v2906 = vsel %vm241, %v2905, -inf
    %2907 = vmax.xlane.f32.xlu0 %v2906
    %v2908 = vpop.xlane.xlu0 %2907
    %v2909 = vsub.f32 %v2905, %v2908
    %v2910 = vmul.f32 %v2909, 1.442695
    %v2911 = vpow.pop %v2910
    %v2912 = vsel %vm241, %v2911, 0.0
    %2913 = vadd.xlane.f32.xlu0 %v2912
    %v2914 = vpop.xlane.xlu0 %2913
    %v2915 = vrcp.pop %v2914
    %v2916 = vmul.f32 %v2911, %v2915
    %2917 = vrot.lane.b32.xlu0 %v2861, 96
    %v2918 = vpop.permute.xlu0 %2917
    %v2921 = vsel %vm241, %v2916, 0
    %2923 = vmatpush.msra.mxu0 0.0
    %2924 = vmatpush.msra.mxu0 0.0
    %2925 = vmatpush.msra.mxu0 0.0
    %2926 = vmatpush.msra.mxu0 0.0
    %2927 = vmatpush.msra.mxu0 0.0
    %2928 = vmatpush.msra.mxu0 0.0
    %2929 = vmatpush.msra.mxu0 0.0
    %2930 = vmatpush.msra.mxu0 0.0
    %2931 = vmatpush.msra.mxu0 0.0
    %2932 = vmatpush.msra.mxu0 0.0
    %2933 = vmatpush.msra.mxu0 0.0
    %2934 = vmatpush.msra.mxu0 0.0
    %2935 = vmatpush.msra.mxu0 0.0
    %2936 = vmatpush.msra.mxu0 0.0
    %2937 = vmatpush.msra.mxu0 0.0
    %2938 = vmatpush.msra.mxu0 %v2918
    %2939 = vmatmul.f32.gmra.mxu0 %v2921
    %v2940 = vpop.f32.mrf.mxu0
    %v2941 = vadd.f32 0.0, %v2940
    %2942 = vdwg.mxu0
    %v2944 = vsel %vm241, %v2941, 0
    %2946 = vmatpush.msra.mxu0 0.0
    %2947 = vmatpush.msra.mxu0 0.0
    %2948 = vmatpush.msra.mxu0 0.0
    %2949 = vmatpush.msra.mxu0 0.0
    %2950 = vmatpush.msra.mxu0 0.0
    %2951 = vmatpush.msra.mxu0 0.0
    %2952 = vmatpush.msra.mxu0 0.0
    %2953 = vmatpush.msra.mxu0 0.0
    %2954 = vmatpush.msra.mxu0 0.0
    %2955 = vmatpush.msra.mxu0 0.0
    %2956 = vmatpush.msra.mxu0 0.0
    %2957 = vmatpush.msra.mxu0 0.0
    %2958 = vmatpush.msra.mxu0 0.0
    %2959 = vmatpush.msra.mxu0 0.0
    %2960 = vmatpush.msra.mxu0 0.0
    %2961 = vmatpush.msra.mxu0 %v2864
    %2962 = vmatmul.f32.gmra.mxu0 %v2944
    %v2963 = vpop.f32.mrf.mxu0
    %v2964 = vadd.f32 0.0, %v2963
    %2965 = vdwg.mxu0
    %v2966 = vadd.f32 %v2877, %v2964
    %2967 = vrot.lane.b32.xlu0 %v2831, 120
    %v2968 = vpop.permute.xlu0 %2967
    %2969 = vrot.lane.b32.xlu0 %v2861, 120
    %v2970 = vpop.permute.xlu0 %2969
    %v2971 = vsel %vm241, %v2968, 0
    %v2973 = vsel %vm241, %v2970, 0
    %2975 = vmatpush.xpose.msra.mxu0 0.0
    %2976 = vmatpush.xpose.msra.mxu0 0.0
    %2977 = vmatpush.xpose.msra.mxu0 0.0
    %2978 = vmatpush.xpose.msra.mxu0 0.0
    %2979 = vmatpush.xpose.msra.mxu0 0.0
    %2980 = vmatpush.xpose.msra.mxu0 0.0
    %2981 = vmatpush.xpose.msra.mxu0 0.0
    %2982 = vmatpush.xpose.msra.mxu0 0.0
    %2983 = vmatpush.xpose.msra.mxu0 0.0
    %2984 = vmatpush.xpose.msra.mxu0 0.0
    %2985 = vmatpush.xpose.msra.mxu0 0.0
    %2986 = vmatpush.xpose.msra.mxu0 0.0
    %2987 = vmatpush.xpose.msra.mxu0 0.0
    %2988 = vmatpush.xpose.msra.mxu0 0.0
    %2989 = vmatpush.xpose.msra.mxu0 0.0
    %2990 = vmatpush.xpose.msra.mxu0 %v2973
    %2991 = vmatmul.f32.gmra.mxu0 %v2971
    %v2992 = vpop.f32.mrf.mxu0
    %v2993 = vadd.f32 0.0, %v2992
    %2994 = vdwg.mxu0
    %v2995 = vmul.f32 %v2993, 0.35355338
    %v2996 = vsel %vm267, -1e+09, %v2995
    %v2997 = vsel %vm241, %v2996, -inf
    %2998 = vmax.xlane.f32.xlu0 %v2997
    %v2999 = vpop.xlane.xlu0 %2998
    %v3000 = vsub.f32 %v2996, %v2999
    %v3001 = vmul.f32 %v3000, 1.442695
    %v3002 = vpow.pop %v3001
    %v3003 = vsel %vm241, %v3002, 0.0
    %3004 = vadd.xlane.f32.xlu0 %v3003
    %v3005 = vpop.xlane.xlu0 %3004
    %v3006 = vrcp.pop %v3005
    %v3007 = vmul.f32 %v3002, %v3006
    %3008 = vrot.lane.b32.xlu0 %v2861, 88
    %v3009 = vpop.permute.xlu0 %3008
    %v3012 = vsel %vm241, %v3007, 0
    %3014 = vmatpush.msra.mxu0 0.0
    %3015 = vmatpush.msra.mxu0 0.0
    %3016 = vmatpush.msra.mxu0 0.0
    %3017 = vmatpush.msra.mxu0 0.0
    %3018 = vmatpush.msra.mxu0 0.0
    %3019 = vmatpush.msra.mxu0 0.0
    %3020 = vmatpush.msra.mxu0 0.0
    %3021 = vmatpush.msra.mxu0 0.0
    %3022 = vmatpush.msra.mxu0 0.0
    %3023 = vmatpush.msra.mxu0 0.0
    %3024 = vmatpush.msra.mxu0 0.0
    %3025 = vmatpush.msra.mxu0 0.0
    %3026 = vmatpush.msra.mxu0 0.0
    %3027 = vmatpush.msra.mxu0 0.0
    %3028 = vmatpush.msra.mxu0 0.0
    %3029 = vmatpush.msra.mxu0 %v3009
    %3030 = vmatmul.f32.gmra.mxu0 %v3012
    %v3031 = vpop.f32.mrf.mxu0
    %v3032 = vadd.f32 0.0, %v3031
    %3033 = vdwg.mxu0
    %v3035 = vsel %vm241, %v3032, 0
    %3037 = vmatpush.msra.mxu0 0.0
    %3038 = vmatpush.msra.mxu0 0.0
    %3039 = vmatpush.msra.mxu0 0.0
    %3040 = vmatpush.msra.mxu0 0.0
    %3041 = vmatpush.msra.mxu0 0.0
    %3042 = vmatpush.msra.mxu0 0.0
    %3043 = vmatpush.msra.mxu0 0.0
    %3044 = vmatpush.msra.mxu0 0.0
    %3045 = vmatpush.msra.mxu0 0.0
    %3046 = vmatpush.msra.mxu0 0.0
    %3047 = vmatpush.msra.mxu0 0.0
    %3048 = vmatpush.msra.mxu0 0.0
    %3049 = vmatpush.msra.mxu0 0.0
    %3050 = vmatpush.msra.mxu0 0.0
    %3051 = vmatpush.msra.mxu0 0.0
    %3052 = vmatpush.msra.mxu0 %v2865
    %3053 = vmatmul.f32.gmra.mxu0 %v3035
    %v3054 = vpop.f32.mrf.mxu0
    %v3055 = vadd.f32 0.0, %v3054
    %3056 = vdwg.mxu0
    %v3057 = vadd.f32 %v2966, %v3055
    %3058 = vrot.lane.b32.xlu0 %v2831, 112
    %v3059 = vpop.permute.xlu0 %3058
    %3060 = vrot.lane.b32.xlu0 %v2861, 112
    %v3061 = vpop.permute.xlu0 %3060
    %v3062 = vsel %vm241, %v3059, 0
    %v3064 = vsel %vm241, %v3061, 0
    %3066 = vmatpush.xpose.msra.mxu0 0.0
    %3067 = vmatpush.xpose.msra.mxu0 0.0
    %3068 = vmatpush.xpose.msra.mxu0 0.0
    %3069 = vmatpush.xpose.msra.mxu0 0.0
    %3070 = vmatpush.xpose.msra.mxu0 0.0
    %3071 = vmatpush.xpose.msra.mxu0 0.0
    %3072 = vmatpush.xpose.msra.mxu0 0.0
    %3073 = vmatpush.xpose.msra.mxu0 0.0
    %3074 = vmatpush.xpose.msra.mxu0 0.0
    %3075 = vmatpush.xpose.msra.mxu0 0.0
    %3076 = vmatpush.xpose.msra.mxu0 0.0
    %3077 = vmatpush.xpose.msra.mxu0 0.0
    %3078 = vmatpush.xpose.msra.mxu0 0.0
    %3079 = vmatpush.xpose.msra.mxu0 0.0
    %3080 = vmatpush.xpose.msra.mxu0 0.0
    %3081 = vmatpush.xpose.msra.mxu0 %v3064
    %3082 = vmatmul.f32.gmra.mxu0 %v3062
    %v3083 = vpop.f32.mrf.mxu0
    %v3084 = vadd.f32 0.0, %v3083
    %3085 = vdwg.mxu0
    %v3086 = vmul.f32 %v3084, 0.35355338
    %v3087 = vsel %vm267, -1e+09, %v3086
    %v3088 = vsel %vm241, %v3087, -inf
    %3089 = vmax.xlane.f32.xlu0 %v3088
    %v3090 = vpop.xlane.xlu0 %3089
    %v3091 = vsub.f32 %v3087, %v3090
    %v3092 = vmul.f32 %v3091, 1.442695
    %v3093 = vpow.pop %v3092
    %v3094 = vsel %vm241, %v3093, 0.0
    %3095 = vadd.xlane.f32.xlu0 %v3094
    %v3096 = vpop.xlane.xlu0 %3095
    %v3097 = vrcp.pop %v3096
    %v3098 = vmul.f32 %v3093, %v3097
    %3099 = vrot.lane.b32.xlu0 %v2861, 80
    %v3100 = vpop.permute.xlu0 %3099
    %v3103 = vsel %vm241, %v3098, 0
    %3105 = vmatpush.msra.mxu0 0.0
    %3106 = vmatpush.msra.mxu0 0.0
    %3107 = vmatpush.msra.mxu0 0.0
    %3108 = vmatpush.msra.mxu0 0.0
    %3109 = vmatpush.msra.mxu0 0.0
    %3110 = vmatpush.msra.mxu0 0.0
    %3111 = vmatpush.msra.mxu0 0.0
    %3112 = vmatpush.msra.mxu0 0.0
    %3113 = vmatpush.msra.mxu0 0.0
    %3114 = vmatpush.msra.mxu0 0.0
    %3115 = vmatpush.msra.mxu0 0.0
    %3116 = vmatpush.msra.mxu0 0.0
    %3117 = vmatpush.msra.mxu0 0.0
    %3118 = vmatpush.msra.mxu0 0.0
    %3119 = vmatpush.msra.mxu0 0.0
    %3120 = vmatpush.msra.mxu0 %v3100
    %3121 = vmatmul.f32.gmra.mxu0 %v3103
    %v3122 = vpop.f32.mrf.mxu0
    %v3123 = vadd.f32 0.0, %v3122
    %3124 = vdwg.mxu0
    %v3126 = vsel %vm241, %v3123, 0
    %3128 = vmatpush.msra.mxu0 0.0
    %3129 = vmatpush.msra.mxu0 0.0
    %3130 = vmatpush.msra.mxu0 0.0
    %3131 = vmatpush.msra.mxu0 0.0
    %3132 = vmatpush.msra.mxu0 0.0
    %3133 = vmatpush.msra.mxu0 0.0
    %3134 = vmatpush.msra.mxu0 0.0
    %3135 = vmatpush.msra.mxu0 0.0
    %3136 = vmatpush.msra.mxu0 0.0
    %3137 = vmatpush.msra.mxu0 0.0
    %3138 = vmatpush.msra.mxu0 0.0
    %3139 = vmatpush.msra.mxu0 0.0
    %3140 = vmatpush.msra.mxu0 0.0
    %3141 = vmatpush.msra.mxu0 0.0
    %3142 = vmatpush.msra.mxu0 0.0
    %3143 = vmatpush.msra.mxu0 %v2866
    %3144 = vmatmul.f32.gmra.mxu0 %v3126
    %v3145 = vpop.f32.mrf.mxu0
    %v3146 = vadd.f32 0.0, %v3145
    %3147 = vdwg.mxu0
    %v3148 = vadd.f32 %v3057, %v3146
    %3149 = vrot.lane.b32.xlu0 %v2831, 104
    %v3150 = vpop.permute.xlu0 %3149
    %3151 = vrot.lane.b32.xlu0 %v2861, 104
    %v3152 = vpop.permute.xlu0 %3151
    %v3153 = vsel %vm241, %v3150, 0
    %v3155 = vsel %vm241, %v3152, 0
    %3157 = vmatpush.xpose.msra.mxu0 0.0
    %3158 = vmatpush.xpose.msra.mxu0 0.0
    %3159 = vmatpush.xpose.msra.mxu0 0.0
    %3160 = vmatpush.xpose.msra.mxu0 0.0
    %3161 = vmatpush.xpose.msra.mxu0 0.0
    %3162 = vmatpush.xpose.msra.mxu0 0.0
    %3163 = vmatpush.xpose.msra.mxu0 0.0
    %3164 = vmatpush.xpose.msra.mxu0 0.0
    %3165 = vmatpush.xpose.msra.mxu0 0.0
    %3166 = vmatpush.xpose.msra.mxu0 0.0
    %3167 = vmatpush.xpose.msra.mxu0 0.0
    %3168 = vmatpush.xpose.msra.mxu0 0.0
    %3169 = vmatpush.xpose.msra.mxu0 0.0
    %3170 = vmatpush.xpose.msra.mxu0 0.0
    %3171 = vmatpush.xpose.msra.mxu0 0.0
    %3172 = vmatpush.xpose.msra.mxu0 %v3155
    %3173 = vmatmul.f32.gmra.mxu0 %v3153
    %v3174 = vpop.f32.mrf.mxu0
    %v3175 = vadd.f32 0.0, %v3174
    %3176 = vdwg.mxu0
    %v3177 = vmul.f32 %v3175, 0.35355338
    %v3178 = vsel %vm267, -1e+09, %v3177
    %v3179 = vsel %vm241, %v3178, -inf
    %3180 = vmax.xlane.f32.xlu0 %v3179
    %v3181 = vpop.xlane.xlu0 %3180
    %v3182 = vsub.f32 %v3178, %v3181
    %v3183 = vmul.f32 %v3182, 1.442695
    %v3184 = vpow.pop %v3183
    %v3185 = vsel %vm241, %v3184, 0.0
    %3186 = vadd.xlane.f32.xlu0 %v3185
    %v3187 = vpop.xlane.xlu0 %3186
    %v3188 = vrcp.pop %v3187
    %v3189 = vmul.f32 %v3184, %v3188
    %3190 = vrot.lane.b32.xlu0 %v2861, 72
    %v3191 = vpop.permute.xlu0 %3190
    %v3194 = vsel %vm241, %v3189, 0
    %3196 = vmatpush.msra.mxu0 0.0
    %3197 = vmatpush.msra.mxu0 0.0
    %3198 = vmatpush.msra.mxu0 0.0
    %3199 = vmatpush.msra.mxu0 0.0
    %3200 = vmatpush.msra.mxu0 0.0
    %3201 = vmatpush.msra.mxu0 0.0
    %3202 = vmatpush.msra.mxu0 0.0
    %3203 = vmatpush.msra.mxu0 0.0
    %3204 = vmatpush.msra.mxu0 0.0
    %3205 = vmatpush.msra.mxu0 0.0
    %3206 = vmatpush.msra.mxu0 0.0
    %3207 = vmatpush.msra.mxu0 0.0
    %3208 = vmatpush.msra.mxu0 0.0
    %3209 = vmatpush.msra.mxu0 0.0
    %3210 = vmatpush.msra.mxu0 0.0
    %3211 = vmatpush.msra.mxu0 %v3191
    %3212 = vmatmul.f32.gmra.mxu0 %v3194
    %v3213 = vpop.f32.mrf.mxu0
    %v3214 = vadd.f32 0.0, %v3213
    %3215 = vdwg.mxu0
    %v3217 = vsel %vm241, %v3214, 0
    %3219 = vmatpush.msra.mxu0 0.0
    %3220 = vmatpush.msra.mxu0 0.0
    %3221 = vmatpush.msra.mxu0 0.0
    %3222 = vmatpush.msra.mxu0 0.0
    %3223 = vmatpush.msra.mxu0 0.0
    %3224 = vmatpush.msra.mxu0 0.0
    %3225 = vmatpush.msra.mxu0 0.0
    %3226 = vmatpush.msra.mxu0 0.0
    %3227 = vmatpush.msra.mxu0 0.0
    %3228 = vmatpush.msra.mxu0 0.0
    %3229 = vmatpush.msra.mxu0 0.0
    %3230 = vmatpush.msra.mxu0 0.0
    %3231 = vmatpush.msra.mxu0 0.0
    %3232 = vmatpush.msra.mxu0 0.0
    %3233 = vmatpush.msra.mxu0 0.0
    %3234 = vmatpush.msra.mxu0 %v2867
    %3235 = vmatmul.f32.gmra.mxu0 %v3217
    %v3236 = vpop.f32.mrf.mxu0
    %v3237 = vadd.f32 0.0, %v3236
    %3238 = vdwg.mxu0
    %v3239 = vadd.f32 %v3148, %v3237
    %v3240 = vsel %vm203, %v3239, 0.0
    %3241 = vadd.xlane.f32.xlu0 %v3240
    %v3242 = vpop.xlane.xlu0 %3241
    %v3243 = vmul.f32 %v3242, %v612
    %v3244 = vsub.f32 %v3239, %v3243
    %v3245 = vmul.f32 %v3244, %v3244
    %v3246 = vsel %vm203, %v3245, 0.0
    %3247 = vadd.xlane.f32.xlu0 %v3246
    %v3248 = vpop.xlane.xlu0 %3247
    %v3249 = vmul.f32 %v3248, %v612
    %v3250 = vadd.f32 %v3249, 1e-05
    %v3251 = vrsqrt.pop %v3250
    %v3252 = vmul.f32 %v3251, %v3250
    %v3253 = vmul.f32 %v3252, %v3251
    %v3254 = vmul.f32 0.5, %v3253
    %v3255 = vsub.f32 1.5, %v3254
    %v3256 = vmul.f32 %v3251, %v3255
    %vm3257 = vweird.f32 %v3250
    %vm3258 = vweird.f32 %v3251
    %vm3259 = vmor %vm3257, %vm3258
    %v3260 = vsel %vm3259, %v3251, %v3256
    %v3261 = vmul.f32 %v3244, %v3260
    %v3263 = vperm.slane %v2871, 0
    %v3265 = vmul.f32 %v3261, %v3263
    %v3267 = vperm.slane %v2873, 0
    %v3269 = vadd.f32 %v3265, %v3267
    %3270 = vrot.lane.b32.xlu0 %v3007, 8
    %v3271 = vpop.permute.xlu0 %3270
    %3273 = vrot.lane.b32.xlu0 %v3098, 16
    %v3274 = vpop.permute.xlu0 %3273
    %3276 = vrot.lane.b32.xlu0 %v3189, 24
    %v3277 = vpop.permute.xlu0 %3276
    %v3279 = vsel %vm241, %v2916, %v3271
    %v3280 = vsel %vm650, %v3279, %v3274
    %v3281 = vsel %vm652, %v3280, %v3277
    %s3282 = scalar_lea.vmem %s81, 8
    %3283 = vst.msk [vmem:[%s3282] sm:$0xff] %vm203, %v3281
    %s3284 = scalar_lea.vmem [#allocation2], 32
    %v3285 = vld [vmem:[%s3284] sm:$0xff]
    %v3286 = vld [vmem:[%s3284 + $0x8] sm:$0xff]
    %v3287 = vld [vmem:[%s3284 + $0x10] sm:$0xff]
    %v3288 = vld [vmem:[%s3284 + $0x18] sm:$0xff]
    %s3289 = scalar_lea.vmem %s63, 1
    %v3290 = vld [vmem:[%s3289] sm:$0x1]
    %s3291 = scalar_lea.vmem %s65, 64
    %v3292 = vld [vmem:[%s3291] sm:$0xff]
    %v3293 = vld [vmem:[%s3291 + $0x8] sm:$0xff]
    %v3294 = vld [vmem:[%s3291 + $0x10] sm:$0xff]
    %v3295 = vld [vmem:[%s3291 + $0x18] sm:$0xff]
    %v3296 = vld [vmem:[%s3291 + $0x20] sm:$0xff]
    %v3297 = vld [vmem:[%s3291 + $0x28] sm:$0xff]
    %v3298 = vld [vmem:[%s3291 + $0x30] sm:$0xff]
    %v3299 = vld [vmem:[%s3291 + $0x38] sm:$0xff]
    %s3300 = scalar_lea.vmem %s67, 1
    %v3301 = vld [vmem:[%s3300] sm:$0x1]
    %s3302 = scalar_lea.vmem %s69, 1
    %v3303 = vld [vmem:[%s3302] sm:$0x1]
    %s3304 = scalar_lea.vmem %s71, 1
    %v3305 = vld [vmem:[%s3304] sm:$0x1]
    %v3307 = vperm.slane %v3290, 0
    %v3310 = vsel %vm203, %v3269, 0
    %3312 = vmatpush.msra.mxu0 0.0
    %3313 = vmatpush.msra.mxu0 0.0
    %3314 = vmatpush.msra.mxu0 0.0
    %3315 = vmatpush.msra.mxu0 0.0
    %3316 = vmatpush.msra.mxu0 0.0
    %3317 = vmatpush.msra.mxu0 0.0
    %3318 = vmatpush.msra.mxu0 0.0
    %3319 = vmatpush.msra.mxu0 0.0
    %3320 = vmatpush.msra.mxu0 0.0
    %3321 = vmatpush.msra.mxu0 0.0
    %3322 = vmatpush.msra.mxu0 0.0
    %3323 = vmatpush.msra.mxu0 0.0
    %3324 = vmatpush.msra.mxu0 %v3288
    %3325 = vmatpush.msra.mxu0 %v3287
    %3326 = vmatpush.msra.mxu0 %v3286
    %3327 = vmatpush.msra.mxu0 %v3285
    %3328 = vmatmul.f32.gmra.mxu0 %v3310
    %v3329 = vpop.f32.mrf.mxu0
    %v3330 = vadd.f32 %v3307, %v3329
    %3331 = vdwg.mxu0
    %v3332 = vmax.f32 %v3330, 0.0
    %v3334 = vperm.slane %v3301, 0
    %v3337 = vsel %vm701, %v3332, 0
    %3339 = vmatpush.msra.mxu0 0.0
    %3340 = vmatpush.msra.mxu0 0.0
    %3341 = vmatpush.msra.mxu0 0.0
    %3342 = vmatpush.msra.mxu0 0.0
    %3343 = vmatpush.msra.mxu0 0.0
    %3344 = vmatpush.msra.mxu0 0.0
    %3345 = vmatpush.msra.mxu0 0.0
    %3346 = vmatpush.msra.mxu0 0.0
    %3347 = vmatpush.msra.mxu0 %v3299
    %3348 = vmatpush.msra.mxu0 %v3298
    %3349 = vmatpush.msra.mxu0 %v3297
    %3350 = vmatpush.msra.mxu0 %v3296
    %3351 = vmatpush.msra.mxu0 %v3295
    %3352 = vmatpush.msra.mxu0 %v3294
    %3353 = vmatpush.msra.mxu0 %v3293
    %3354 = vmatpush.msra.mxu0 %v3292
    %3355 = vmatmul.f32.gmra.mxu0 %v3337
    %v3356 = vpop.f32.mrf.mxu0
    %v3357 = vadd.f32 %v3334, %v3356
    %3358 = vdwg.mxu0
    %v3359 = vadd.f32 %v3357, %v3269
    %v3360 = vsel %vm203, %v3359, 0.0
    %3361 = vadd.xlane.f32.xlu0 %v3360
    %v3362 = vpop.xlane.xlu0 %3361
    %v3363 = vmul.f32 %v3362, %v612
    %v3364 = vsub.f32 %v3359, %v3363
    %v3365 = vmul.f32 %v3364, %v3364
    %v3366 = vsel %vm203, %v3365, 0.0
    %3367 = vadd.xlane.f32.xlu0 %v3366
    %v3368 = vpop.xlane.xlu0 %3367
    %v3369 = vmul.f32 %v3368, %v612
    %v3370 = vadd.f32 %v3369, 1e-05
    %v3371 = vrsqrt.pop %v3370
    %v3372 = vmul.f32 %v3371, %v3370
    %v3373 = vmul.f32 %v3372, %v3371
    %v3374 = vmul.f32 0.5, %v3373
    %v3375 = vsub.f32 1.5, %v3374
    %v3376 = vmul.f32 %v3371, %v3375
    %vm3377 = vweird.f32 %v3370
    %vm3378 = vweird.f32 %v3371
    %vm3379 = vmor %vm3377, %vm3378
    %v3380 = vsel %vm3379, %v3371, %v3376
    %v3381 = vmul.f32 %v3364, %v3380
    %v3383 = vperm.slane %v3303, 0
    %v3385 = vmul.f32 %v3381, %v3383
    %v3387 = vperm.slane %v3305, 0
    %v3389 = vadd.f32 %v3385, %v3387
    %v3390 = vld [vmem:[%s73] sm:$0xff]
    %v3391 = vld [vmem:[%s73 + $0x8] sm:$0xff]
    %v3392 = vld [vmem:[%s73 + $0x10] sm:$0xff]
    %v3393 = vld [vmem:[%s73 + $0x18] sm:$0xff]
    %v3395 = vsel %vm203, %v3389, 0
    %3397 = vmatpush.msra.mxu0 0.0
    %3398 = vmatpush.msra.mxu0 0.0
    %3399 = vmatpush.msra.mxu0 0.0
    %3400 = vmatpush.msra.mxu0 0.0
    %3401 = vmatpush.msra.mxu0 0.0
    %3402 = vmatpush.msra.mxu0 0.0
    %3403 = vmatpush.msra.mxu0 0.0
    %3404 = vmatpush.msra.mxu0 0.0
    %3405 = vmatpush.msra.mxu0 0.0
    %3406 = vmatpush.msra.mxu0 0.0
    %3407 = vmatpush.msra.mxu0 0.0
    %3408 = vmatpush.msra.mxu0 0.0
    %3409 = vmatpush.msra.mxu0 %v3393
    %3410 = vmatpush.msra.mxu0 %v3392
    %3411 = vmatpush.msra.mxu0 %v3391
    %3412 = vmatpush.msra.mxu0 %v3390
    %3413 = vmatmul.f32.gmra.mxu0 %v3395
    %v3414 = vpop.f32.mrf.mxu0
    %v3415 = vadd.f32 0.0, %v3414
    %3416 = vdwg.mxu0
    %3417 = vst.msk [vmem:[#allocation5] sm:$0xff] %vm650, %v3415
    // Predicated region
    $region154: #{transformer_forward.1} parent=1 // pred_check
      _
    $region155: #{transformer_forward.1} parent=1 // pred_check_branch
      %3419 = sbr.rel (0) target = $region157
    $region156: #{transformer_forward.1} parent=1 // pred_region
      %3421 = vsyncadd [#allocation4], 0
      %s3423 = sshll.u32 [#allocation5], 4
      %s3424 = int_to_ptr.vmem [resolvable:$true] %s3423
      %s3425 = sshll.u32 %s75, 4
      %s3426 = int_to_ptr.hbm [resolvable:$true] %s3425
      %3428 = dma.vmem_to_hbm [thread:$0]  %s3424, 128, %s3426, [#allocation4]
    $region157: #{transformer_forward.1} parent=1 // pred_fallthru
      _
    // Predicated region
    $region158: #{transformer_forward.1} parent=1 // pred_check
      _
    $region159: #{transformer_forward.1} parent=1 // pred_check_branch
      %3430 = sbr.rel (0) target = $region161
    $region160: #{transformer_forward.1} parent=1 // pred_region
      _
    $region161: #{transformer_forward.1} parent=1 // pred_fallthru
      _
    // Predicated region
    $region162: #{transformer_forward.1} parent=1 // pred_check
      _
    $region163: #{transformer_forward.1} parent=1 // pred_check_branch
      %3432 = sbr.rel (0) target = $region165
    $region164: #{transformer_forward.1} parent=1 // pred_region
      _
    $region165: #{transformer_forward.1} parent=1 // pred_fallthru
      _
    // Predicated region
    $region166: #{transformer_forward.1} parent=1 // pred_check
      _
    $region167: #{transformer_forward.1} parent=1 // pred_check_branch
      %3434 = sbr.rel (0) target = $region169
    $region168: #{transformer_forward.1} parent=1 // pred_region
      _
    $region169: #{transformer_forward.1} parent=1 // pred_fallthru
      _
    // Predicated region
    $region170: #{transformer_forward.1} parent=1 // pred_check
      _
    $region171: #{transformer_forward.1} parent=1 // pred_check_branch
      %3436 = sbr.rel (0) target = $region173
    $region172: #{transformer_forward.1} parent=1 // pred_region
      %3438 = dma.done [#allocation4], 128
    $region173: #{transformer_forward.1} parent=1 // pred_fallthru
      _
    // Predicated region
    $region174: #{transformer_forward.1} parent=1 // pred_check
      _
    $region175: #{transformer_forward.1} parent=1 // pred_check_branch
      %3440 = sbr.rel (0) target = $region177
    $region176: #{transformer_forward.1} parent=1 // pred_region
      _
    $region177: #{transformer_forward.1} parent=1 // pred_fallthru
      _
    // Predicated region
    $region178: #{transformer_forward.1} parent=1 // pred_check
      _
    $region179: #{transformer_forward.1} parent=1 // pred_check_branch
      %3442 = sbr.rel (0) target = $region181
    $region180: #{transformer_forward.1} parent=1 // pred_region
      _
    $region181: #{transformer_forward.1} parent=1 // pred_fallthru
      _
    // Predicated region
    $region182: #{transformer_forward.1} parent=1 // pred_check
      _
    $region183: #{transformer_forward.1} parent=1 // pred_check_branch
      %3444 = sbr.rel (0) target = $region185
    $region184: #{transformer_forward.1} parent=1 // pred_region
      _
    $region185: #{transformer_forward.1} parent=1 // pred_fallthru
      _
    %3445 = vsyncpa [#allocation3], 1
    %3446 = vsyncpa [#allocation4], 1

</llo_original>
